<compile_context>
chip_gen: v7x
topology: tpu7x:2x2x1
jax: 0.10.0
libtpu: 0.0.40
codegen_flags: <defaults>
</compile_context>

<pallas_src>
import functools

import jax
import jax.numpy as jnp
from jax.experimental import pallas as pl
from jax.experimental.pallas import tpu as pltpu

_LANE = 128
_SUBLANE = 8


# ----------------------------------------------------------------------------
# Pallas kernel: one output row-band of the encode block for one batch element
# ----------------------------------------------------------------------------
def _encode_block_kernel(x_ref, w1_ref, s1_ref, t1_ref, w2_ref, s2_ref, t2_ref,
                         o_ref, *, maxpool, tile_h2):
    # x_ref : (1, Hin, Win, Cin)   NHWC input, VMEM-resident for the whole image
    # w1_ref: (9*Cin,  Cmid)       conv1 weights (bf16), (kh, kw, cin) flat -> K
    # s1/t1 : (1, Cmid) f32        folded conv1-bias + BN1 scale / shift
    # w2_ref: (9*Cmid, Cpad)       conv2 weights (bf16), N lane-padded
    # s2/t2 : (1, Cpad) f32        folded conv2-bias + BN2 scale / shift
    # o_ref : (1, tile_h2*W2, Cpad) flat, lane-dense output band (matmul layout)
    cin = x_ref.shape[-1]
    cmid = w1_ref.shape[1]

    b = pl.program_id(1)
    row_stride = (2 * tile_h2) if maxpool else tile_h2
    tile_in = (2 * tile_h2 + 8) if maxpool else (tile_h2 + 4)
    r0 = pl.multiple_of(b * row_stride, row_stride)

    # Band of input rows (+ halo for the two VALID 3x3 convs) sliced out of the
    # resident image; kept in the input dtype (no unconditional f32 upcast).
    xb = x_ref[0, pl.ds(r0, tile_in), :, :]

    if maxpool:
        # MaxPool2d(2, 2, ceil_mode=True): elementwise max of the four 2x2 phase
        # views (pure VPU); ceil_mode handled by the -inf edge pad in the wrapper.
        hh, wh = tile_in // 2, xb.shape[1] // 2
        q = xb.reshape(hh, 2, wh, 2, cin)
        xb = jnp.maximum(jnp.maximum(q[:, 0, :, 0, :], q[:, 0, :, 1, :]),
                         jnp.maximum(q[:, 1, :, 0, :], q[:, 1, :, 1, :]))

    def conv3x3_bn_relu(inp, w_ref, s_ref, t_ref):
        h, w, c = inp.shape
        ho, wo = h - 2, w - 2
        cout = w_ref.shape[1]
        inp = inp.astype(jnp.bfloat16)          # MXU-native operand dtype
        if c >= 128:
            # Wide channels: K=C already fills the MXU contraction dim -> 9
            # accumulating dots; avoids the 9x im2col buffer and lane-offset
            # concatenate relayouts.
            acc = jnp.zeros((ho * wo, cout), jnp.float32)
            for dy in range(3):
                for dx in range(3):
                    patch = inp[dy:dy + ho, dx:dx + wo, :].reshape(ho * wo, c)
                    acc = acc + jnp.dot(
                        patch, w_ref[pl.ds((dy * 3 + dx) * c, c), :],
                        preferred_element_type=jnp.float32)
        else:
            # Narrow channels: one fused K=9*c contraction (densifies lanes for
            # small Cin such as the first block's 3-4 input channels).
            cols = jnp.concatenate(
                [inp[dy:dy + ho, dx:dx + wo, :]
                 for dy in range(3) for dx in range(3)],
                axis=-1).reshape(ho * wo, 9 * c)
            acc = jnp.dot(cols, w_ref[...], preferred_element_type=jnp.float32)
        # folded conv-bias + BatchNorm(inference) + ReLU, all on the VPU in f32
        return jnp.maximum(acc * s_ref[...] + t_ref[...], 0.0), ho, wo

    y, h1, w1 = conv3x3_bn_relu(xb, w1_ref, s1_ref, t1_ref)
    y = y.reshape(h1, w1, cmid)
    z, _, _ = conv3x3_bn_relu(y, w2_ref, s2_ref, t2_ref)

    o_ref[0] = z.astype(o_ref.dtype)            # (tile_h2*W2, Cpad), lane-dense


# ----------------------------------------------------------------------------
# Parameter folding (conv bias + BN -> scale/shift; bf16 weights; lane padding)
# ----------------------------------------------------------------------------
def fold_block_params(raw, eps=1e-5, weight_dtype=jnp.bfloat16, pad_out_to=_LANE):
    """Fold conv bias + BatchNorm running stats into per-channel scale/shift.

    Weights are stored flat (9*Cin, Cout) in bf16 (native-rate MXU).  The block's
    FINAL output channels (w2's N dim, s2, t2) are zero-padded to a multiple of
    128 so the kernel's store is lane-dense; the conv1 intermediate is left
    unpadded so conv2's contraction stays K = 9*Cout.
    """
    (w1, b1, g1, be1, m1, v1, w2, b2, g2, be2, m2, v2) = raw
    cin, cout = w1.shape[2], w1.shape[3]
    s1 = g1 / jnp.sqrt(v1 + eps)
    t1 = (b1 - m1) * s1 + be1
    s2 = g2 / jnp.sqrt(v2 + eps)
    t2 = (b2 - m2) * s2 + be2
    w1f = w1.reshape(9 * cin, cout).astype(weight_dtype)
    w2f = w2.reshape(9 * cout, cout).astype(weight_dtype)
    cpad = (-(-cout // pad_out_to) * pad_out_to) if pad_out_to else cout
    if cpad != cout:
        w2f = jnp.pad(w2f, ((0, 0), (0, cpad - cout)))
        s2 = jnp.pad(s2, (0, cpad - cout))
        t2 = jnp.pad(t2, (0, cpad - cout))
    return (w1f,
            s1.reshape(1, cout).astype(jnp.float32),
            t1.reshape(1, cout).astype(jnp.float32),
            w2f,
            s2.reshape(1, cpad).astype(jnp.float32),
            t2.reshape(1, cpad).astype(jnp.float32))


# ----------------------------------------------------------------------------
# Wrappers
# ----------------------------------------------------------------------------
def encode_block_nhwc(x, folded, *, maxpool, tile_h2=8,
                      vmem_limit_bytes=48 * 1024 * 1024):
    """Fused encode block, NHWC in / NHWC out.  One pallas_call, grid=(N, bands).

    tile_h2: output-row band height (rounded to a multiple of 8 when multiple
    bands are needed).  Use larger bands (e.g. 16-64) at realistic resolutions,
    especially on v5e, to amortize the ~0.35us/step grid overhead.
    """
    w1, s1, t1, w2, s2, t2 = folded
    N, H, W, Cin = x.shape
    assert w1.shape[0] == 9 * Cin, (w1.shape, Cin)
    Cout = w1.shape[1]          # real output channels of the block
    Cpad = w2.shape[1]          # lane-padded output channels (cropped below)

    # ---- ceil_mode MaxPool padding (touches HBM only when H or W is odd) ----
    if maxpool:
        Hp, Wp = H + (H % 2), W + (W % 2)
        if (Hp, Wp) != (H, W):
            x = jnp.pad(x, ((0, 0), (0, Hp - H), (0, Wp - W), (0, 0)),
                        constant_values=-jnp.inf)
        Hc, Wc = Hp // 2, Wp // 2
    else:
        Hp, Wp = H, W
        Hc, Wc = H, W
    # TODO(synk): for odd inputs this pad is an extra HBM pass; it could be
    # folded into the kernel with an in-kernel -inf fill of the last row/col.

    H2, W2 = Hc - 4, Wc - 4                 # two VALID 3x3 convs
    assert H2 > 0 and W2 > 0, "spatial size too small for two 3x3 VALID convs"

    # ---- row-band tiling (band height multiple of 8 => sublane-aligned M) ----
    if H2 <= tile_h2:
        T = H2                               # single band
    else:
        T = max(_SUBLANE, (tile_h2 // _SUBLANE) * _SUBLANE)
    nb = -(-H2 // T)
    H2p = nb * T                             # output rows incl. band padding

    rows_needed = 2 * H2p + 8 if maxpool else H2p + 4
    if rows_needed > Hp:
        # Zero rows for the last (partial) band; they only ever feed output rows
        # >= H2, which are cropped below.
        x = jnp.pad(x, ((0, 0), (0, rows_needed - Hp), (0, 0), (0, 0)))

    kernel = functools.partial(_encode_block_kernel, maxpool=maxpool, tile_h2=T)
    out = pl.pallas_call(
        kernel,
        out_shape=jax.ShapeDtypeStruct((N, H2p * W2, Cpad), x.dtype),
        grid=(N, nb),
        in_specs=[
            # Full image per batch element; index constant along the band axis,
            # so it is DMA'd once per n and stays VMEM-resident for all bands.
            pl.BlockSpec((1, rows_needed, Wp, Cin), lambda n, b: (n, 0, 0, 0)),
            # Loop-invariant operands (weights / folded BN scale & shift).
            pl.BlockSpec((9 * Cin, Cout), lambda n, b: (0, 0)),
            pl.BlockSpec((1, Cout), lambda n, b: (0, 0)),
            pl.BlockSpec((1, Cout), lambda n, b: (0, 0)),
            pl.BlockSpec((9 * Cout, Cpad), lambda n, b: (0, 0)),
            pl.BlockSpec((1, Cpad), lambda n, b: (0, 0)),
            pl.BlockSpec((1, Cpad), lambda n, b: (0, 0)),
        ],
        out_specs=pl.BlockSpec((1, T * W2, Cpad), lambda n, b: (n, b, 0)),
        compiler_params=pltpu.CompilerParams(
            dimension_semantics=("parallel", "arbitrary"),
            vmem_limit_bytes=vmem_limit_bytes),
    )(x, w1, s1, t1, w2, s2, t2)

    # matmul-layout -> NHWC; crop band padding and lane-padded channels.
    out = out.reshape(N, H2p, W2, Cpad)
    return out[:, :H2, :, :Cout]


def encode_block(x_nchw, folded, *, maxpool, tile_h2=8):
    """PyTorch-equivalent _UNetEncodeBlock.forward: NCHW in / NCHW out."""
    x = jnp.transpose(x_nchw, (0, 2, 3, 1))
    y = encode_block_nhwc(x, folded, maxpool=maxpool, tile_h2=tile_h2)
    return jnp.transpose(y, (0, 3, 1, 2))


# ----------------------------------------------------------------------------
# Pure-JAX reference (NCHW) for checking the kernel
# ----------------------------------------------------------------------------
def _ref_block(x_nchw, raw, *, maxpool, eps=1e-5):
    (w1, b1, g1, be1, m1, v1, w2, b2, g2, be2, m2, v2) = raw
    x = x_nchw
    if maxpool:
        _, _, H, W = x.shape
        ph, pw = H % 2, W % 2
        if ph or pw:
            x = jnp.pad(x, ((0, 0), (0, 0), (0, ph), (0, pw)),
                        constant_values=-jnp.inf)
        x = jax.lax.reduce_window(x, -jnp.inf, jax.lax.max,
                                  (1, 1, 2, 2), (1, 1, 2, 2), 'VALID')

    def cbr(x, w, b, g, be, m, v):
        y = jax.lax.conv_general_dilated(
            x, w, (1, 1), 'VALID', dimension_numbers=('NCHW', 'HWIO', 'NCHW'))
        y = y + b[None, :, None, None]
        y = (y - m[None, :, None, None]) * (
            g[None, :, None, None] / jnp.sqrt(v[None, :, None, None] + eps)
        ) + be[None, :, None, None]
        return jnp.maximum(y, 0.0)

    x = cbr(x, w1, b1, g1, be1, m1, v1)
    x = cbr(x, w2, b2, g2, be2, m2, v2)
    return x


# ----------------------------------------------------------------------------
# Demo / correctness check
# ----------------------------------------------------------------------------
if __name__ == "__main__":
    key = jax.random.PRNGKey(0)
    k_x, k_a, k_b = jax.random.split(key, 3)

    # Two chained encode blocks: 4 -> 16 (no maxpool, 2 row-bands exercised),
    # 16 -> 32 (maxpool=True, odd size exercises the ceil_mode path).
    N, C0, H, W = 2, 4, 17, 17
    C1, C2 = 16, 32

    x = jax.random.normal(k_x, (N, C0, H, W), jnp.float32)

    def make_raw(kw, cin, cout):
        k = jax.random.split(kw, 12)
        w1 = 0.1 * jax.random.normal(k[0], (3, 3, cin, cout), jnp.float32)
        b1 = 0.05 * jax.random.normal(k[1], (cout,), jnp.float32)
        g1 = 1.0 + 0.1 * jax.random.normal(k[2], (cout,), jnp.float32)
        be1 = 0.05 * jax.random.normal(k[3], (cout,), jnp.float32)
        m1 = 0.05 * jax.random.normal(k[4], (cout,), jnp.float32)
        v1 = 1.0 + 0.1 * jax.random.uniform(k[5], (cout,), jnp.float32)
        w2 = 0.1 * jax.random.normal(k[6], (3, 3, cout, cout), jnp.float32)
        b2 = 0.05 * jax.random.normal(k[7], (cout,), jnp.float32)
        g2 = 1.0 + 0.1 * jax.random.normal(k[8], (cout,), jnp.float32)
        be2 = 0.05 * jax.random.normal(k[9], (cout,), jnp.float32)
        m2 = 0.05 * jax.random.normal(k[10], (cout,), jnp.float32)
        v2 = 1.0 + 0.1 * jax.random.uniform(k[11], (cout,), jnp.float32)
        return (w1, b1, g1, be1, m1, v1, w2, b2, g2, be2, m2, v2)

    raw_a = make_raw(k_a, C0, C1)          # block A: maxpool=False
    raw_b = make_raw(k_b, C1, C2)          # block B: maxpool=True
    fold_a = fold_block_params(raw_a)
    fold_b = fold_block_params(raw_b)

    # Pallas path: transpose to NHWC once, chain the blocks in NHWC.
    x_nhwc = jnp.transpose(x, (0, 2, 3, 1))
    y_a = encode_block_nhwc(x_nhwc, fold_a, maxpool=False, tile_h2=8)  # 2 bands
    y_b = encode_block_nhwc(y_a, fold_b, maxpool=True, tile_h2=8)      # 1 band
    out_a = jax.block_until_ready(jnp.transpose(y_a, (0, 3, 1, 2)))
    out_b = jax.block_until_ready(jnp.transpose(y_b, (0, 3, 1, 2)))

    # Reference path (NCHW, f32 everywhere).
    ref_a = _ref_block(x, raw_a, maxpool=False)
    ref_b = _ref_block(ref_a, raw_b, maxpool=True)

    assert out_a.shape == ref_a.shape, (out_a.shape, ref_a.shape)
    assert out_b.shape == ref_b.shape, (out_b.shape, ref_b.shape)
    # bf16 MXU operands (with f32 accumulation) -> tolerance relaxed vs the
    # pure-f32 reference.
    err_a = float(jnp.max(jnp.abs(out_a - ref_a)))
    err_b = float(jnp.max(jnp.abs(out_b - ref_b)))
    assert err_a < 1e-1, err_a
    assert err_b < 1e-1, err_b

    print("KERNEL_OK")
</pallas_src>

<mosaic_0001>
module attributes {stable_mosaic.version = 11 : i64} {
  func.func @_encode_block_kernel(%arg0: i32, %arg1: i32, %arg2: memref<1x20x17x4xf32, #tpu.memory_space<vmem>>, %arg3: memref<36x16xbf16, #tpu.memory_space<vmem>>, %arg4: memref<1x16xf32, #tpu.memory_space<vmem>>, %arg5: memref<1x16xf32, #tpu.memory_space<vmem>>, %arg6: memref<144x128xbf16, #tpu.memory_space<vmem>>, %arg7: memref<1x128xf32, #tpu.memory_space<vmem>>, %arg8: memref<1x128xf32, #tpu.memory_space<vmem>>, %arg9: memref<1x104x128xf32, #tpu.memory_space<vmem>>) attributes {dimension_semantics = [#tpu.dimension_semantics<parallel>, #tpu.dimension_semantics<arbitrary>], iteration_bounds = array<i64: 2, 2>, scalar_prefetch = 0 : i64, scratch_operands = 0 : i64, tpu.core_type = #tpu.core_type<tc>, window_params = [{transform_indices = @transform_0, window_bounds = array<i64: 1, 20, 17, 4>}, {pipeline_mode = #tpu.pipeline_mode<synchronous>, transform_indices = @transform_1, window_bounds = array<i64: 36, 16>}, {pipeline_mode = #tpu.pipeline_mode<synchronous>, transform_indices = @transform_2, window_bounds = array<i64: 1, 16>}, {pipeline_mode = #tpu.pipeline_mode<synchronous>, transform_indices = @transform_3, window_bounds = array<i64: 1, 16>}, {pipeline_mode = #tpu.pipeline_mode<synchronous>, transform_indices = @transform_4, window_bounds = array<i64: 144, 128>}, {pipeline_mode = #tpu.pipeline_mode<synchronous>, transform_indices = @transform_5, window_bounds = array<i64: 1, 128>}, {pipeline_mode = #tpu.pipeline_mode<synchronous>, transform_indices = @transform_6, window_bounds = array<i64: 1, 128>}, {transform_indices = @transform_7, window_bounds = array<i64: 1, 104, 128>}]} {
    %c8_i32 = arith.constant 8 : i32
    %0 = arith.muli %arg1, %c8_i32 : i32
    %1 = tpu.assume_multiple %0, 8 : i32
    %c0 = arith.constant 0 : index
    %2 = arith.index_cast %1 : i32 to index
    %c0_0 = arith.constant 0 : index
    %c0_1 = arith.constant 0 : index
    %3 = vector.load %arg2[%c0, %2, %c0_0, %c0_1] : memref<1x20x17x4xf32, #tpu.memory_space<vmem>>, vector<1x12x17x4xf32>
    %4 = vector.shape_cast %3 : vector<1x12x17x4xf32> to vector<12x17x4xf32>
    %5 = arith.truncf %4 : vector<12x17x4xf32> to vector<12x17x4xbf16>
    %6 = vector.extract_strided_slice %5 {offsets = [0, 0, 0], sizes = [10, 15, 4], strides = [1, 1, 1]} : vector<12x17x4xbf16> to vector<10x15x4xbf16>
    %7 = vector.extract_strided_slice %5 {offsets = [0, 1, 0], sizes = [10, 15, 4], strides = [1, 1, 1]} : vector<12x17x4xbf16> to vector<10x15x4xbf16>
    %8 = vector.extract_strided_slice %5 {offsets = [0, 2, 0], sizes = [10, 15, 4], strides = [1, 1, 1]} : vector<12x17x4xbf16> to vector<10x15x4xbf16>
    %9 = vector.extract_strided_slice %5 {offsets = [1, 0, 0], sizes = [10, 15, 4], strides = [1, 1, 1]} : vector<12x17x4xbf16> to vector<10x15x4xbf16>
    %10 = vector.extract_strided_slice %5 {offsets = [1, 1, 0], sizes = [10, 15, 4], strides = [1, 1, 1]} : vector<12x17x4xbf16> to vector<10x15x4xbf16>
    %11 = vector.extract_strided_slice %5 {offsets = [1, 2, 0], sizes = [10, 15, 4], strides = [1, 1, 1]} : vector<12x17x4xbf16> to vector<10x15x4xbf16>
    %12 = vector.extract_strided_slice %5 {offsets = [2, 0, 0], sizes = [10, 15, 4], strides = [1, 1, 1]} : vector<12x17x4xbf16> to vector<10x15x4xbf16>
    %13 = vector.extract_strided_slice %5 {offsets = [2, 1, 0], sizes = [10, 15, 4], strides = [1, 1, 1]} : vector<12x17x4xbf16> to vector<10x15x4xbf16>
    %14 = vector.extract_strided_slice %5 {offsets = [2, 2, 0], sizes = [10, 15, 4], strides = [1, 1, 1]} : vector<12x17x4xbf16> to vector<10x15x4xbf16>
    %15 = tpu.concatenate %6, %7, %8, %9, %10, %11, %12, %13, %14 in 2 : vector<10x15x4xbf16>, vector<10x15x4xbf16>, vector<10x15x4xbf16>, vector<10x15x4xbf16>, vector<10x15x4xbf16>, vector<10x15x4xbf16>, vector<10x15x4xbf16>, vector<10x15x4xbf16>, vector<10x15x4xbf16> -> vector<10x15x36xbf16>
    %16 = vector.shape_cast %15 : vector<10x15x36xbf16> to vector<150x36xbf16>
    %c0_2 = arith.constant 0 : index
    %c0_3 = arith.constant 0 : index
    %17 = vector.load %arg3[%c0_2, %c0_3] : memref<36x16xbf16, #tpu.memory_space<vmem>>, vector<36x16xbf16>
    %cst = arith.constant dense<0.000000e+00> : vector<150x16xf32>
    %18 = tpu.matmul %16, %17, %cst {dimension_numbers = #tpu.dot_dimension_numbers<[1], [0], [0], [1], [0, 0, 1, 1], [], []>} : vector<150x36xbf16>, vector<36x16xbf16>, vector<150x16xf32> -> vector<150x16xf32>
    %c0_4 = arith.constant 0 : index
    %c0_5 = arith.constant 0 : index
    %19 = vector.load %arg4[%c0_4, %c0_5] : memref<1x16xf32, #tpu.memory_space<vmem>>, vector<1x16xf32>
    %20 = vector.broadcast %19 : vector<1x16xf32> to vector<150x16xf32>
    %21 = arith.mulf %18, %20 : vector<150x16xf32>
    %c0_6 = arith.constant 0 : index
    %c0_7 = arith.constant 0 : index
    %22 = vector.load %arg5[%c0_6, %c0_7] : memref<1x16xf32, #tpu.memory_space<vmem>>, vector<1x16xf32>
    %23 = vector.broadcast %22 : vector<1x16xf32> to vector<150x16xf32>
    %24 = arith.addf %21, %23 : vector<150x16xf32>
    %cst_8 = arith.constant 0.000000e+00 : f32
    %25 = vector.broadcast %cst_8 : f32 to vector<150x16xf32>
    %26 = arith.maximumf %24, %25 : vector<150x16xf32>
    %27 = vector.shape_cast %26 : vector<150x16xf32> to vector<10x15x16xf32>
    %28 = arith.truncf %27 : vector<10x15x16xf32> to vector<10x15x16xbf16>
    %29 = vector.extract_strided_slice %28 {offsets = [0, 0, 0], sizes = [8, 13, 16], strides = [1, 1, 1]} : vector<10x15x16xbf16> to vector<8x13x16xbf16>
    %30 = vector.extract_strided_slice %28 {offsets = [0, 1, 0], sizes = [8, 13, 16], strides = [1, 1, 1]} : vector<10x15x16xbf16> to vector<8x13x16xbf16>
    %31 = vector.extract_strided_slice %28 {offsets = [0, 2, 0], sizes = [8, 13, 16], strides = [1, 1, 1]} : vector<10x15x16xbf16> to vector<8x13x16xbf16>
    %32 = vector.extract_strided_slice %28 {offsets = [1, 0, 0], sizes = [8, 13, 16], strides = [1, 1, 1]} : vector<10x15x16xbf16> to vector<8x13x16xbf16>
    %33 = vector.extract_strided_slice %28 {offsets = [1, 1, 0], sizes = [8, 13, 16], strides = [1, 1, 1]} : vector<10x15x16xbf16> to vector<8x13x16xbf16>
    %34 = vector.extract_strided_slice %28 {offsets = [1, 2, 0], sizes = [8, 13, 16], strides = [1, 1, 1]} : vector<10x15x16xbf16> to vector<8x13x16xbf16>
    %35 = vector.extract_strided_slice %28 {offsets = [2, 0, 0], sizes = [8, 13, 16], strides = [1, 1, 1]} : vector<10x15x16xbf16> to vector<8x13x16xbf16>
    %36 = vector.extract_strided_slice %28 {offsets = [2, 1, 0], sizes = [8, 13, 16], strides = [1, 1, 1]} : vector<10x15x16xbf16> to vector<8x13x16xbf16>
    %37 = vector.extract_strided_slice %28 {offsets = [2, 2, 0], sizes = [8, 13, 16], strides = [1, 1, 1]} : vector<10x15x16xbf16> to vector<8x13x16xbf16>
    %38 = tpu.concatenate %29, %30, %31, %32, %33, %34, %35, %36, %37 in 2 : vector<8x13x16xbf16>, vector<8x13x16xbf16>, vector<8x13x16xbf16>, vector<8x13x16xbf16>, vector<8x13x16xbf16>, vector<8x13x16xbf16>, vector<8x13x16xbf16>, vector<8x13x16xbf16>, vector<8x13x16xbf16> -> vector<8x13x144xbf16>
    %39 = vector.shape_cast %38 : vector<8x13x144xbf16> to vector<104x144xbf16>
    %c0_9 = arith.constant 0 : index
    %c0_10 = arith.constant 0 : index
    %40 = vector.load %arg6[%c0_9, %c0_10] : memref<144x128xbf16, #tpu.memory_space<vmem>>, vector<144x128xbf16>
    %cst_11 = arith.constant dense<0.000000e+00> : vector<104x128xf32>
    %41 = tpu.matmul %39, %40, %cst_11 {dimension_numbers = #tpu.dot_dimension_numbers<[1], [0], [0], [1], [0, 0, 1, 1], [], []>} : vector<104x144xbf16>, vector<144x128xbf16>, vector<104x128xf32> -> vector<104x128xf32>
    %c0_12 = arith.constant 0 : index
    %c0_13 = arith.constant 0 : index
    %42 = vector.load %arg7[%c0_12, %c0_13] : memref<1x128xf32, #tpu.memory_space<vmem>>, vector<1x128xf32>
    %43 = vector.broadcast %42 : vector<1x128xf32> to vector<104x128xf32>
    %44 = arith.mulf %41, %43 : vector<104x128xf32>
    %c0_14 = arith.constant 0 : index
    %c0_15 = arith.constant 0 : index
    %45 = vector.load %arg8[%c0_14, %c0_15] : memref<1x128xf32, #tpu.memory_space<vmem>>, vector<1x128xf32>
    %46 = vector.broadcast %45 : vector<1x128xf32> to vector<104x128xf32>
    %47 = arith.addf %44, %46 : vector<104x128xf32>
    %cst_16 = arith.constant 0.000000e+00 : f32
    %48 = vector.broadcast %cst_16 : f32 to vector<104x128xf32>
    %49 = arith.maximumf %47, %48 : vector<104x128xf32>
    %c0_17 = arith.constant 0 : index
    %c0_18 = arith.constant 0 : index
    %c0_19 = arith.constant 0 : index
    %50 = vector.load %arg9[%c0_17, %c0_18, %c0_19] : memref<1x104x128xf32, #tpu.memory_space<vmem>>, vector<1x104x128xf32>
    %51 = vector.shape_cast %50 : vector<1x104x128xf32> to vector<104x128xf32>
    %52 = vector.shape_cast %49 : vector<104x128xf32> to vector<1x104x128xf32>
    tpu.vector_store %arg9[%c0_17, %c0_18, %c0_19], %52 {strides = array<i32>} : memref<1x104x128xf32, #tpu.memory_space<vmem>>, vector<1x104x128xf32>,
    return
  }
  func.func @transform_0(%arg0: i32, %arg1: i32) -> (i32, i32, i32, i32) {
    %c0_i32 = arith.constant 0 : i32
    %c0_i32_0 = arith.constant 0 : i32
    %c0_i32_1 = arith.constant 0 : i32
    %c0_i32_2 = arith.constant 0 : i32
    return %arg0, %c0_i32, %c0_i32_0, %c0_i32_1 : i32, i32, i32, i32
  }
  func.func @transform_1(%arg0: i32, %arg1: i32) -> (i32, i32) {
    %c0_i32 = arith.constant 0 : i32
    %c0_i32_0 = arith.constant 0 : i32
    %c0_i32_1 = arith.constant 0 : i32
    return %c0_i32, %c0_i32_0 : i32, i32
  }
  func.func @transform_2(%arg0: i32, %arg1: i32) -> (i32, i32) {
    %c0_i32 = arith.constant 0 : i32
    %c0_i32_0 = arith.constant 0 : i32
    %c0_i32_1 = arith.constant 0 : i32
    return %c0_i32, %c0_i32_0 : i32, i32
  }
  func.func @transform_3(%arg0: i32, %arg1: i32) -> (i32, i32) {
    %c0_i32 = arith.constant 0 : i32
    %c0_i32_0 = arith.constant 0 : i32
    %c0_i32_1 = arith.constant 0 : i32
    return %c0_i32, %c0_i32_0 : i32, i32
  }
  func.func @transform_4(%arg0: i32, %arg1: i32) -> (i32, i32) {
    %c0_i32 = arith.constant 0 : i32
    %c0_i32_0 = arith.constant 0 : i32
    %c0_i32_1 = arith.constant 0 : i32
    return %c0_i32, %c0_i32_0 : i32, i32
  }
  func.func @transform_5(%arg0: i32, %arg1: i32) -> (i32, i32) {
    %c0_i32 = arith.constant 0 : i32
    %c0_i32_0 = arith.constant 0 : i32
    %c0_i32_1 = arith.constant 0 : i32
    return %c0_i32, %c0_i32_0 : i32, i32
  }
  func.func @transform_6(%arg0: i32, %arg1: i32) -> (i32, i32) {
    %c0_i32 = arith.constant 0 : i32
    %c0_i32_0 = arith.constant 0 : i32
    %c0_i32_1 = arith.constant 0 : i32
    return %c0_i32, %c0_i32_0 : i32, i32
  }
  func.func @transform_7(%arg0: i32, %arg1: i32) -> (i32, i32, i32) {
    %c0_i32 = arith.constant 0 : i32
    %c0_i32_0 = arith.constant 0 : i32
    return %arg0, %arg1, %c0_i32 : i32, i32, i32
  }
}

</mosaic_0001>

<llo_original>
// kernel: tpu_custom_call.1
$region0: #{tpu_custom_call.1}
  #allocation0 [shape = 'u32[]', space=smem, size = 0x4, offset = 0x4, fixed_abs, tag = 'smem constant byte address 0x4 - core index']
  #allocation1 [shape = 'u32[144,128]{1,0:T(1,128)}', space=vmem, size = 0x12000, scoped, tag = 'internal scratch']
  %s0 = inlined_call_operand.vmem [shape: f32[2,20,17,4], index: 0, kind: input, shape index: {}]
  %s1 = inlined_call_operand.vmem [shape: bf16[36,16], index: 1, kind: input, shape index: {}]
  %s2 = inlined_call_operand.vmem [shape: f32[1,16], index: 2, kind: input, shape index: {}]
  %s3 = inlined_call_operand.vmem [shape: f32[1,16], index: 3, kind: input, shape index: {}]
  %s4 = inlined_call_operand.vmem [shape: bf16[144,128], index: 4, kind: input, shape index: {}]
  %s5 = inlined_call_operand.vmem [shape: f32[1,128], index: 5, kind: input, shape index: {}]
  %s6 = inlined_call_operand.vmem [shape: f32[1,128], index: 6, kind: input, shape index: {}]
  %s7 = inlined_call_operand.hbm [shape: f32[2,208,128], index: 7, kind: output, shape index: {}]
  %s8 = sld [smem:[#allocation0]]
  $region61: #{tpu_custom_call.1} parent=0
    _
  %s10 = ssub.s32 1, %s8
  %s11 = scalar_select 0, %s10, %s8
  $region1: #{tpu_custom_call.1} parent=0
    #allocation2 [shape = 'u8[106496]{0}', space=vmem, size = 0x1a000, scoped, tag = 'output window, operand 0']
    #allocation3 [shape = 's32[2]{0}', space=sflag, size = 0x8, scoped, tag = 'scoped memory for tpu_custom_call.1']
    %12 = vsyncpa [#allocation3], 0
    %s13 = scalar_lea.sflag [#allocation3], 1
    %14 = vsyncpa %s13, 0
    loop: start=0, step=1, limit=6
    $region2: #{tpu_custom_call.1} parent=1 // loop_pre_header
      _
    $region3: #{tpu_custom_call.1} parent=1 // loop_header
      %s16 = sphi 0, %s20
      %p17 = scmp.ge.s32.totalorder %s16, 6
      %s23 = sphi 0, %s35
      %s24 = sphi 0, %s31
      %s25 = sphi 0, %s23
      %s26 = sphi 0, %s24
      %s27 = sphi 0, %s25
      %s28 = sphi 0, %s26
      %s38 = sphi 0, %s40
      %s41 = sphi 0, %s38
      %s42 = sphi 0, %s41
      %s58 = sphi 0, %s42
      %s62 = sphi 0, %s62
      %s64 = sphi 0, %s62
      %s65 = sphi 0, %s64
      %s79 = sphi 0, %s65
      %s83 = sphi 0, %s83
      %s85 = sphi 0, %s83
      %s86 = sphi 0, %s85
      %s100 = sphi 0, %s86
      %s104 = sphi 0, %s104
      %s106 = sphi 0, %s104
      %s107 = sphi 0, %s106
      %s121 = sphi 0, %s107
      %s125 = sphi 0, %s125
      %s127 = sphi 0, %s125
      %s128 = sphi 0, %s127
      %s142 = sphi 0, %s128
      %s146 = sphi 0, %s146
      %s148 = sphi 0, %s146
      %s149 = sphi 0, %s148
      %s163 = sphi 0, %s149
      %s167 = sphi 0, %s167
      %s169 = sphi 0, %s167
      %s170 = sphi 0, %s169
      %s184 = sphi 0, %s170
      %s192 = sphi 0, %s194
      %s195 = sphi 0, %s192
      %s196 = sphi 0, %s195
      %s212 = sphi 0, %s196
    $region4: #{tpu_custom_call.1} parent=1 // loop_header_branch
      %19 = sbr.rel (%p17) target = $region8
    $region5: #{tpu_custom_call.1} parent=1 // loop_body
      %s21 = ssub.s32 %s16, 1
      %s22 = ssub.s32 %s16, 2
      %s29 = sadd.s32 1, %s24
      %p30 = scmp.ge.s32.totalorder %s29, 2
      %s31 = scalar_select %p30, 0, %s29
      %s32 = sadd.s32 1, %s23
      %s33 = scalar_select %p30, %s32, %s23
      %p34 = scmp.ge.s32.totalorder %s33, 2
      %s35 = scalar_select %p34, 0, %s33
      %s36 = ssub.s32 %s23, %s35
      %p37 = scmp.eq.s32.totalorder %s36, 0
      %s39 = sadd.s32 %s38, 1
      %s40 = scalar_select %p37, %s38, %s39
      %p43 = pneg %p37
      %p44 = scmp.eq.s32.totalorder %s16, 3
      %p45 = por %p43, %p44
      %p46 = scmp.ne.s32.totalorder %s38, %s41
      %p47 = scmp.eq.s32.totalorder %s16, 0
      %p48 = por %p46, %p47
      %p49 = scmp.ne.s32.totalorder %s38, %s41
      %p50 = scmp.eq.s32.totalorder %s21, 3
      %p51 = por %p49, %p50
      %p52 = scmp.ne.s32.totalorder %s41, %s42
      %p53 = scmp.eq.s32.totalorder %s21, 0
      %p54 = por %p52, %p53
      %p55 = scmp.ne.s32.totalorder %s41, %s42
      %p56 = scmp.eq.s32.totalorder %s22, 3
      %p57 = por %p55, %p56
      %p59 = scmp.ne.s32.totalorder %s42, %s58
      %p60 = scmp.eq.s32.totalorder %s22, 0
      %p61 = por %p59, %p60
      %s63 = sadd.s32 %s62, 1
      %p66 = scmp.eq.s32.totalorder %s16, 3
      %p67 = scmp.ne.s32.totalorder %s62, %s64
      %p68 = scmp.eq.s32.totalorder %s16, 0
      %p69 = por %p67, %p68
      %p70 = scmp.ne.s32.totalorder %s62, %s64
      %p71 = scmp.eq.s32.totalorder %s21, 3
      %p72 = por %p70, %p71
      %p73 = scmp.ne.s32.totalorder %s64, %s65
      %p74 = scmp.eq.s32.totalorder %s21, 0
      %p75 = por %p73, %p74
      %p76 = scmp.ne.s32.totalorder %s64, %s65
      %p77 = scmp.eq.s32.totalorder %s22, 3
      %p78 = por %p76, %p77
      %p80 = scmp.ne.s32.totalorder %s65, %s79
      %p81 = scmp.eq.s32.totalorder %s22, 0
      %p82 = por %p80, %p81
      %s84 = sadd.s32 %s83, 1
      %p87 = scmp.eq.s32.totalorder %s16, 3
      %p88 = scmp.ne.s32.totalorder %s83, %s85
      %p89 = scmp.eq.s32.totalorder %s16, 0
      %p90 = por %p88, %p89
      %p91 = scmp.ne.s32.totalorder %s83, %s85
      %p92 = scmp.eq.s32.totalorder %s21, 3
      %p93 = por %p91, %p92
      %p94 = scmp.ne.s32.totalorder %s85, %s86
      %p95 = scmp.eq.s32.totalorder %s21, 0
      %p96 = por %p94, %p95
      %p97 = scmp.ne.s32.totalorder %s85, %s86
      %p98 = scmp.eq.s32.totalorder %s22, 3
      %p99 = por %p97, %p98
      %p101 = scmp.ne.s32.totalorder %s86, %s100
      %p102 = scmp.eq.s32.totalorder %s22, 0
      %p103 = por %p101, %p102
      %s105 = sadd.s32 %s104, 1
      %p108 = scmp.eq.s32.totalorder %s16, 3
      %p109 = scmp.ne.s32.totalorder %s104, %s106
      %p110 = scmp.eq.s32.totalorder %s16, 0
      %p111 = por %p109, %p110
      %p112 = scmp.ne.s32.totalorder %s104, %s106
      %p113 = scmp.eq.s32.totalorder %s21, 3
      %p114 = por %p112, %p113
      %p115 = scmp.ne.s32.totalorder %s106, %s107
      %p116 = scmp.eq.s32.totalorder %s21, 0
      %p117 = por %p115, %p116
      %p118 = scmp.ne.s32.totalorder %s106, %s107
      %p119 = scmp.eq.s32.totalorder %s22, 3
      %p120 = por %p118, %p119
      %p122 = scmp.ne.s32.totalorder %s107, %s121
      %p123 = scmp.eq.s32.totalorder %s22, 0
      %p124 = por %p122, %p123
      %s126 = sadd.s32 %s125, 1
      %p129 = scmp.eq.s32.totalorder %s16, 3
      %p130 = scmp.ne.s32.totalorder %s125, %s127
      %p131 = scmp.eq.s32.totalorder %s16, 0
      %p132 = por %p130, %p131
      %p133 = scmp.ne.s32.totalorder %s125, %s127
      %p134 = scmp.eq.s32.totalorder %s21, 3
      %p135 = por %p133, %p134
      %p136 = scmp.ne.s32.totalorder %s127, %s128
      %p137 = scmp.eq.s32.totalorder %s21, 0
      %p138 = por %p136, %p137
      %p139 = scmp.ne.s32.totalorder %s127, %s128
      %p140 = scmp.eq.s32.totalorder %s22, 3
      %p141 = por %p139, %p140
      %p143 = scmp.ne.s32.totalorder %s128, %s142
      %p144 = scmp.eq.s32.totalorder %s22, 0
      %p145 = por %p143, %p144
      %s147 = sadd.s32 %s146, 1
      %p150 = scmp.eq.s32.totalorder %s16, 3
      %p151 = scmp.ne.s32.totalorder %s146, %s148
      %p152 = scmp.eq.s32.totalorder %s16, 0
      %p153 = por %p151, %p152
      %p154 = scmp.ne.s32.totalorder %s146, %s148
      %p155 = scmp.eq.s32.totalorder %s21, 3
      %p156 = por %p154, %p155
      %p157 = scmp.ne.s32.totalorder %s148, %s149
      %p158 = scmp.eq.s32.totalorder %s21, 0
      %p159 = por %p157, %p158
      %p160 = scmp.ne.s32.totalorder %s148, %s149
      %p161 = scmp.eq.s32.totalorder %s22, 3
      %p162 = por %p160, %p161
      %p164 = scmp.ne.s32.totalorder %s149, %s163
      %p165 = scmp.eq.s32.totalorder %s22, 0
      %p166 = por %p164, %p165
      %s168 = sadd.s32 %s167, 1
      %p171 = scmp.eq.s32.totalorder %s16, 3
      %p172 = scmp.ne.s32.totalorder %s167, %s169
      %p173 = scmp.eq.s32.totalorder %s16, 0
      %p174 = por %p172, %p173
      %p175 = scmp.ne.s32.totalorder %s167, %s169
      %p176 = scmp.eq.s32.totalorder %s21, 3
      %p177 = por %p175, %p176
      %p178 = scmp.ne.s32.totalorder %s169, %s170
      %p179 = scmp.eq.s32.totalorder %s21, 0
      %p180 = por %p178, %p179
      %p181 = scmp.ne.s32.totalorder %s169, %s170
      %p182 = scmp.eq.s32.totalorder %s22, 3
      %p183 = por %p181, %p182
      %p185 = scmp.ne.s32.totalorder %s170, %s184
      %p186 = scmp.eq.s32.totalorder %s22, 0
      %p187 = por %p185, %p186
      %s188 = ssub.s32 %s23, %s35
      %s189 = ssub.s32 %s24, %s31
      %s190 = sor.u32 %s188, %s189
      %p191 = scmp.eq.s32.totalorder %s190, 0
      %s193 = sadd.s32 %s192, 1
      %s194 = scalar_select %p191, %s192, %s193
      %p197 = pneg %p191
      %p198 = scmp.eq.s32.totalorder %s16, 3
      %p199 = por %p197, %p198
      %p200 = scmp.ne.s32.totalorder %s192, %s195
      %p201 = scmp.eq.s32.totalorder %s16, 0
      %p202 = por %p200, %p201
      %p203 = scmp.ne.s32.totalorder %s192, %s195
      %p204 = scmp.eq.s32.totalorder %s21, 3
      %p205 = por %p203, %p204
      %p206 = scmp.ne.s32.totalorder %s195, %s196
      %p207 = scmp.eq.s32.totalorder %s21, 0
      %p208 = por %p206, %p207
      %p209 = scmp.ne.s32.totalorder %s195, %s196
      %p210 = scmp.eq.s32.totalorder %s22, 3
      %p211 = por %p209, %p210
      %p213 = scmp.ne.s32.totalorder %s196, %s212
      %p214 = scmp.eq.s32.totalorder %s22, 0
      %p215 = por %p213, %p214
      %p216 = scmp.le.s32.totalorder 1, %s16
      %p217 = scmp.lt.s32.totalorder %s16, 5
      %p218 = pnand %p216, %p217
      %p219 = pneg %p218
      // Predicated region
      $region9: #{tpu_custom_call.1} parent=5 // pred_check
        _
      $region10: #{tpu_custom_call.1} parent=5 // pred_check_branch
        %221 = sbr.rel (%p218) target = $region12
      $region11: #{tpu_custom_call.1} parent=5 // pred_region
        %s222 = ssub.s32 %s16, 1
        // Predicated region
        $region13: #{tpu_custom_call.1} parent=11 // pred_check
          %p223 = pneg %p75
        $region14: #{tpu_custom_call.1} parent=11 // pred_check_branch
          %225 = sbr.rel (%p223) target = $region16
        $region15: #{tpu_custom_call.1} parent=11 // pred_region
          _
        $region16: #{tpu_custom_call.1} parent=11 // pred_fallthru
          _
        // Predicated region
        $region17: #{tpu_custom_call.1} parent=11 // pred_check
          %p226 = pneg %p96
        $region18: #{tpu_custom_call.1} parent=11 // pred_check_branch
          %228 = sbr.rel (%p226) target = $region20
        $region19: #{tpu_custom_call.1} parent=11 // pred_region
          _
        $region20: #{tpu_custom_call.1} parent=11 // pred_fallthru
          _
        // Predicated region
        $region21: #{tpu_custom_call.1} parent=11 // pred_check
          %p229 = pneg %p117
        $region22: #{tpu_custom_call.1} parent=11 // pred_check_branch
          %231 = sbr.rel (%p229) target = $region24
        $region23: #{tpu_custom_call.1} parent=11 // pred_region
          _
        $region24: #{tpu_custom_call.1} parent=11 // pred_fallthru
          _
        // Predicated region
        $region25: #{tpu_custom_call.1} parent=11 // pred_check
          %p232 = pneg %p138
        $region26: #{tpu_custom_call.1} parent=11 // pred_check_branch
          %234 = sbr.rel (%p232) target = $region28
        $region27: #{tpu_custom_call.1} parent=11 // pred_region
          _
        $region28: #{tpu_custom_call.1} parent=11 // pred_fallthru
          _
        // Predicated region
        $region29: #{tpu_custom_call.1} parent=11 // pred_check
          %p235 = pneg %p159
        $region30: #{tpu_custom_call.1} parent=11 // pred_check_branch
          %237 = sbr.rel (%p235) target = $region32
        $region31: #{tpu_custom_call.1} parent=11 // pred_region
          _
        $region32: #{tpu_custom_call.1} parent=11 // pred_fallthru
          _
        // Predicated region
        $region33: #{tpu_custom_call.1} parent=11 // pred_check
          %p238 = pneg %p180
        $region34: #{tpu_custom_call.1} parent=11 // pred_check_branch
          %240 = sbr.rel (%p238) target = $region36
        $region35: #{tpu_custom_call.1} parent=11 // pred_region
          _
        $region36: #{tpu_custom_call.1} parent=11 // pred_fallthru
          _
      $region12: #{tpu_custom_call.1} parent=5 // pred_fallthru
        _
      %p241 = scmp.lt.s32.totalorder %s16, 4
      // Predicated region
      $region37: #{tpu_custom_call.1} parent=5 // pred_check
        %p242 = pneg %p241
      $region38: #{tpu_custom_call.1} parent=5 // pred_check_branch
        %244 = sbr.rel (%p242) target = $region40
      $region39: #{tpu_custom_call.1} parent=5 // pred_region
        // Predicated region
        $region41: #{tpu_custom_call.1} parent=39 // pred_check
          %p245 = pneg %p48
        $region42: #{tpu_custom_call.1} parent=39 // pred_check_branch
          %247 = sbr.rel (%p245) target = $region44
        $region43: #{tpu_custom_call.1} parent=39 // pred_region
          %p248 = scmp.lt.s32.totalorder %s23, 1
          %s249 = scalar_select %p248, %s23, 1
          %s250 = smul.addr %s249, 60
          %s251 = smul.addr %s250, 8
          %s252 = scalar_lea.vmem %s0, %s251
        $region44: #{tpu_custom_call.1} parent=39 // pred_fallthru
          _
      $region40: #{tpu_custom_call.1} parent=5 // pred_fallthru
        _
      %p253 = scmp.le.s32.totalorder 1, %s16
      %p254 = scmp.lt.s32.totalorder %s16, 5
      %p255 = pnand %p253, %p254
      %p256 = pneg %p255
      // Predicated region
      $region45: #{tpu_custom_call.1} parent=5 // pred_check
        _
      $region46: #{tpu_custom_call.1} parent=5 // pred_check_branch
        %258 = sbr.rel (%p255) target = $region48
      $region47: #{tpu_custom_call.1} parent=5 // pred_region
        %s259 = ssub.s32 %s16, 1
        %p260 = scmp.lt.s32.totalorder %s25, 1
        %s261 = scalar_select %p260, %s25, 1
        %s262 = smul.addr %s261, 60
        %s263 = smul.addr %s262, 8
        %s264 = scalar_lea.vmem %s0, %s263
        %p265 = pneg %p54
        %p266 = pneg %p51
        %p267 = pneg %p75
        %p268 = pneg %p72
        %p269 = pneg %p96
        %p270 = pneg %p93
        %p271 = pneg %p117
        %p272 = pneg %p114
        %p273 = pneg %p138
        %p274 = pneg %p135
        %p275 = pneg %p159
        %p276 = pneg %p156
        %p277 = pneg %p180
        %p278 = pneg %p177
        %p279 = pneg %p208
        %p280 = pneg %p205
        %s281 = sand.u32 %s195, 1
        %s282 = scalar_lea.sflag [#allocation3], %s281
        %s283 = sand.u32 %s195, 1
        %s284 = smul.addr %s283, 104
        %s285 = scalar_lea.vmem [#allocation2], %s284
        %p286 = scmp.lt.s32.totalorder %s25, 1
        %s287 = scalar_select %p286, %s25, 1
        %s288 = smul.addr %s287, 60
        %s289 = smul.addr %s288, 8
        %s290 = scalar_lea.vmem %s0, %s289
        %s291 = smul.u32 13, %s26
        %s293 = smul.u32 %s26, 8
        %s294 = smul.u32 %s293, 24
        %s295 = scalar_lea.vmem %s290, %s294
        %v296 = vld [vmem:[%s295] sm:$0xff]
        %v297 = vld [vmem:[%s295 + $0x8] sm:$0xff]
        %v298 = vld [vmem:[%s295 + $0x10] sm:$0x1]
        %v299 = vld [vmem:[%s295 + $0x18] sm:$0xff]
        %v300 = vld [vmem:[%s295 + $0x20] sm:$0xff]
        %v301 = vld [vmem:[%s295 + $0x28] sm:$0x1]
        %v302 = vld [vmem:[%s295 + $0x30] sm:$0xff]
        %v303 = vld [vmem:[%s295 + $0x38] sm:$0xff]
        %v304 = vld [vmem:[%s295 + $0x40] sm:$0x1]
        %v305 = vld [vmem:[%s295 + $0x48] sm:$0xff]
        %v306 = vld [vmem:[%s295 + $0x50] sm:$0xff]
        %v307 = vld [vmem:[%s295 + $0x58] sm:$0x1]
        %v308 = vld [vmem:[%s295 + $0x60] sm:$0xff]
        %v309 = vld [vmem:[%s295 + $0x68] sm:$0xff]
        %v310 = vld [vmem:[%s295 + $0x70] sm:$0x1]
        %v311 = vld [vmem:[%s295 + $0x78] sm:$0xff]
        %v312 = vld [vmem:[%s295 + $0x80] sm:$0xff]
        %v313 = vld [vmem:[%s295 + $0x88] sm:$0x1]
        %v314 = vld [vmem:[%s295 + $0x90] sm:$0xff]
        %v315 = vld [vmem:[%s295 + $0x98] sm:$0xff]
        %v316 = vld [vmem:[%s295 + $0xa0] sm:$0x1]
        %v317 = vld [vmem:[%s295 + $0xa8] sm:$0xff]
        %v318 = vld [vmem:[%s295 + $0xb0] sm:$0xff]
        %v319 = vld [vmem:[%s295 + $0xb8] sm:$0x1]
        %v320 = vld [vmem:[%s295 + $0xc0] sm:$0xff]
        %v321 = vld [vmem:[%s295 + $0xc8] sm:$0xff]
        %v322 = vld [vmem:[%s295 + $0xd0] sm:$0x1]
        %v323 = vld [vmem:[%s295 + $0xd8] sm:$0xff]
        %v324 = vld [vmem:[%s295 + $0xe0] sm:$0xff]
        %v325 = vld [vmem:[%s295 + $0xe8] sm:$0x1]
        %v326 = vld [vmem:[%s295 + $0xf0] sm:$0xff]
        %v327 = vld [vmem:[%s295 + $0xf8] sm:$0xff]
        %v328 = vld [vmem:[%s295 + $0x100] sm:$0x1]
        %v329 = vld [vmem:[%s295 + $0x108] sm:$0xff]
        %v330 = vld [vmem:[%s295 + $0x110] sm:$0xff]
        %v331 = vld [vmem:[%s295 + $0x118] sm:$0x1]
        %v332 = vpack.c.bf16 %v297, %v296
        %v333 = vpack.c.bf16 %v298, %v298
        %v334 = vpack.c.bf16 %v300, %v299
        %v335 = vpack.c.bf16 %v301, %v301
        %v336 = vpack.c.bf16 %v303, %v302
        %v337 = vpack.c.bf16 %v304, %v304
        %v338 = vpack.c.bf16 %v306, %v305
        %v339 = vpack.c.bf16 %v307, %v307
        %v340 = vpack.c.bf16 %v309, %v308
        %v341 = vpack.c.bf16 %v310, %v310
        %v342 = vpack.c.bf16 %v312, %v311
        %v343 = vpack.c.bf16 %v313, %v313
        %v344 = vpack.c.bf16 %v315, %v314
        %v345 = vpack.c.bf16 %v316, %v316
        %v346 = vpack.c.bf16 %v318, %v317
        %v347 = vpack.c.bf16 %v319, %v319
        %v348 = vpack.c.bf16 %v321, %v320
        %v349 = vpack.c.bf16 %v322, %v322
        %v350 = vpack.c.bf16 %v324, %v323
        %v351 = vpack.c.bf16 %v325, %v325
        %v352 = vpack.c.bf16 %v327, %v326
        %v353 = vpack.c.bf16 %v328, %v328
        %v354 = vpack.c.bf16 %v330, %v329
        %v355 = vpack.c.bf16 %v331, %v331
        %v357 = vshrl.u32 %v332, 16
        %v359 = vshll.u32 %v332, 16
        %v361 = vrot.slane %v359, 1
        %v362 = vor.u32 %v357, %v361
        %v364 = vshrl.u32 %v334, 16
        %v366 = vshll.u32 %v334, 16
        %v368 = vrot.slane %v366, 1
        %v369 = vor.u32 %v364, %v368
        %v371 = vshrl.u32 %v336, 16
        %v373 = vshll.u32 %v336, 16
        %v375 = vrot.slane %v373, 1
        %v376 = vor.u32 %v371, %v375
        %v378 = vshrl.u32 %v338, 16
        %v380 = vshll.u32 %v338, 16
        %v382 = vrot.slane %v380, 1
        %v383 = vor.u32 %v378, %v382
        %v385 = vshrl.u32 %v340, 16
        %v387 = vshll.u32 %v340, 16
        %v389 = vrot.slane %v387, 1
        %v390 = vor.u32 %v385, %v389
        %v392 = vshrl.u32 %v342, 16
        %v394 = vshll.u32 %v342, 16
        %v396 = vrot.slane %v394, 1
        %v397 = vor.u32 %v392, %v396
        %v399 = vshrl.u32 %v344, 16
        %v401 = vshll.u32 %v344, 16
        %v403 = vrot.slane %v401, 1
        %v404 = vor.u32 %v399, %v403
        %v406 = vshrl.u32 %v346, 16
        %v408 = vshll.u32 %v346, 16
        %v410 = vrot.slane %v408, 1
        %v411 = vor.u32 %v406, %v410
        %v413 = vshrl.u32 %v348, 16
        %v415 = vshll.u32 %v348, 16
        %v417 = vrot.slane %v415, 1
        %v418 = vor.u32 %v413, %v417
        %v420 = vshrl.u32 %v350, 16
        %v422 = vshll.u32 %v350, 16
        %v424 = vrot.slane %v422, 1
        %v425 = vor.u32 %v420, %v424
        %426 = vrot.lane.b32.xlu0 %v362, 4
        %v427 = vpop.permute.xlu0 %426
        %428 = vrot.lane.b32.xlu0 %v369, 4
        %v429 = vpop.permute.xlu0 %428
        %430 = vrot.lane.b32.xlu0 %v376, 4
        %v431 = vpop.permute.xlu0 %430
        %432 = vrot.lane.b32.xlu0 %v383, 4
        %v433 = vpop.permute.xlu0 %432
        %434 = vrot.lane.b32.xlu0 %v390, 4
        %v435 = vpop.permute.xlu0 %434
        %436 = vrot.lane.b32.xlu0 %v397, 4
        %v437 = vpop.permute.xlu0 %436
        %438 = vrot.lane.b32.xlu0 %v404, 4
        %v439 = vpop.permute.xlu0 %438
        %440 = vrot.lane.b32.xlu0 %v411, 4
        %v441 = vpop.permute.xlu0 %440
        %442 = vrot.lane.b32.xlu0 %v418, 4
        %v443 = vpop.permute.xlu0 %442
        %444 = vrot.lane.b32.xlu0 %v425, 4
        %v445 = vpop.permute.xlu0 %444
        %vm466 = vcmask 1046528
        %v467 = vrot.slane %v332, 1
        %v468 = vrot.slane %v333, 1
        %v469 = vsel %vm466, %v467, %v468
        %v470 = vrot.slane %v334, 1
        %v471 = vrot.slane %v335, 1
        %v472 = vsel %vm466, %v470, %v471
        %v473 = vrot.slane %v336, 1
        %v474 = vrot.slane %v337, 1
        %v475 = vsel %vm466, %v473, %v474
        %v476 = vrot.slane %v338, 1
        %v477 = vrot.slane %v339, 1
        %v478 = vsel %vm466, %v476, %v477
        %v479 = vrot.slane %v340, 1
        %v480 = vrot.slane %v341, 1
        %v481 = vsel %vm466, %v479, %v480
        %v482 = vrot.slane %v342, 1
        %v483 = vrot.slane %v343, 1
        %v484 = vsel %vm466, %v482, %v483
        %v485 = vrot.slane %v344, 1
        %v486 = vrot.slane %v345, 1
        %v487 = vsel %vm466, %v485, %v486
        %v488 = vrot.slane %v346, 1
        %v489 = vrot.slane %v347, 1
        %v490 = vsel %vm466, %v488, %v489
        %v491 = vrot.slane %v348, 1
        %v492 = vrot.slane %v349, 1
        %v493 = vsel %vm466, %v491, %v492
        %v494 = vrot.slane %v350, 1
        %v495 = vrot.slane %v351, 1
        %v496 = vsel %vm466, %v494, %v495
        %497 = vrot.lane.b32.xlu0 %v469, 8
        %v498 = vpop.permute.xlu0 %497
        %499 = vrot.lane.b32.xlu0 %v472, 8
        %v500 = vpop.permute.xlu0 %499
        %501 = vrot.lane.b32.xlu0 %v475, 8
        %v502 = vpop.permute.xlu0 %501
        %503 = vrot.lane.b32.xlu0 %v478, 8
        %v504 = vpop.permute.xlu0 %503
        %505 = vrot.lane.b32.xlu0 %v481, 8
        %v506 = vpop.permute.xlu0 %505
        %507 = vrot.lane.b32.xlu0 %v484, 8
        %v508 = vpop.permute.xlu0 %507
        %509 = vrot.lane.b32.xlu0 %v487, 8
        %v510 = vpop.permute.xlu0 %509
        %511 = vrot.lane.b32.xlu0 %v490, 8
        %v512 = vpop.permute.xlu0 %511
        %513 = vrot.lane.b32.xlu0 %v493, 8
        %v514 = vpop.permute.xlu0 %513
        %515 = vrot.lane.b32.xlu0 %v496, 8
        %v516 = vpop.permute.xlu0 %515
        %518 = vrot.lane.b32.xlu0 %v334, 12
        %v519 = vpop.permute.xlu0 %518
        %520 = vrot.lane.b32.xlu0 %v336, 12
        %v521 = vpop.permute.xlu0 %520
        %522 = vrot.lane.b32.xlu0 %v338, 12
        %v523 = vpop.permute.xlu0 %522
        %524 = vrot.lane.b32.xlu0 %v340, 12
        %v525 = vpop.permute.xlu0 %524
        %526 = vrot.lane.b32.xlu0 %v342, 12
        %v527 = vpop.permute.xlu0 %526
        %528 = vrot.lane.b32.xlu0 %v344, 12
        %v529 = vpop.permute.xlu0 %528
        %530 = vrot.lane.b32.xlu0 %v346, 12
        %v531 = vpop.permute.xlu0 %530
        %532 = vrot.lane.b32.xlu0 %v348, 12
        %v533 = vpop.permute.xlu0 %532
        %534 = vrot.lane.b32.xlu0 %v350, 12
        %v535 = vpop.permute.xlu0 %534
        %536 = vrot.lane.b32.xlu0 %v352, 12
        %v537 = vpop.permute.xlu0 %536
        %v539 = vshrl.u32 %v352, 16
        %v541 = vshll.u32 %v352, 16
        %v543 = vrot.slane %v541, 1
        %v544 = vor.u32 %v539, %v543
        %545 = vrot.lane.b32.xlu0 %v369, 16
        %v546 = vpop.permute.xlu0 %545
        %547 = vrot.lane.b32.xlu0 %v376, 16
        %v548 = vpop.permute.xlu0 %547
        %549 = vrot.lane.b32.xlu0 %v383, 16
        %v550 = vpop.permute.xlu0 %549
        %551 = vrot.lane.b32.xlu0 %v390, 16
        %v552 = vpop.permute.xlu0 %551
        %553 = vrot.lane.b32.xlu0 %v397, 16
        %v554 = vpop.permute.xlu0 %553
        %555 = vrot.lane.b32.xlu0 %v404, 16
        %v556 = vpop.permute.xlu0 %555
        %557 = vrot.lane.b32.xlu0 %v411, 16
        %v558 = vpop.permute.xlu0 %557
        %559 = vrot.lane.b32.xlu0 %v418, 16
        %v560 = vpop.permute.xlu0 %559
        %561 = vrot.lane.b32.xlu0 %v425, 16
        %v562 = vpop.permute.xlu0 %561
        %563 = vrot.lane.b32.xlu0 %v544, 16
        %v564 = vpop.permute.xlu0 %563
        %v566 = vrot.slane %v352, 1
        %v567 = vrot.slane %v353, 1
        %v568 = vsel %vm466, %v566, %v567
        %569 = vrot.lane.b32.xlu0 %v472, 20
        %v570 = vpop.permute.xlu0 %569
        %571 = vrot.lane.b32.xlu0 %v475, 20
        %v572 = vpop.permute.xlu0 %571
        %573 = vrot.lane.b32.xlu0 %v478, 20
        %v574 = vpop.permute.xlu0 %573
        %575 = vrot.lane.b32.xlu0 %v481, 20
        %v576 = vpop.permute.xlu0 %575
        %577 = vrot.lane.b32.xlu0 %v484, 20
        %v578 = vpop.permute.xlu0 %577
        %579 = vrot.lane.b32.xlu0 %v487, 20
        %v580 = vpop.permute.xlu0 %579
        %581 = vrot.lane.b32.xlu0 %v490, 20
        %v582 = vpop.permute.xlu0 %581
        %583 = vrot.lane.b32.xlu0 %v493, 20
        %v584 = vpop.permute.xlu0 %583
        %585 = vrot.lane.b32.xlu0 %v496, 20
        %v586 = vpop.permute.xlu0 %585
        %587 = vrot.lane.b32.xlu0 %v568, 20
        %v588 = vpop.permute.xlu0 %587
        %590 = vrot.lane.b32.xlu0 %v336, 24
        %v591 = vpop.permute.xlu0 %590
        %592 = vrot.lane.b32.xlu0 %v338, 24
        %v593 = vpop.permute.xlu0 %592
        %594 = vrot.lane.b32.xlu0 %v340, 24
        %v595 = vpop.permute.xlu0 %594
        %596 = vrot.lane.b32.xlu0 %v342, 24
        %v597 = vpop.permute.xlu0 %596
        %598 = vrot.lane.b32.xlu0 %v344, 24
        %v599 = vpop.permute.xlu0 %598
        %600 = vrot.lane.b32.xlu0 %v346, 24
        %v601 = vpop.permute.xlu0 %600
        %602 = vrot.lane.b32.xlu0 %v348, 24
        %v603 = vpop.permute.xlu0 %602
        %604 = vrot.lane.b32.xlu0 %v350, 24
        %v605 = vpop.permute.xlu0 %604
        %606 = vrot.lane.b32.xlu0 %v352, 24
        %v607 = vpop.permute.xlu0 %606
        %608 = vrot.lane.b32.xlu0 %v354, 24
        %v609 = vpop.permute.xlu0 %608
        %v611 = vshrl.u32 %v354, 16
        %v613 = vshll.u32 %v354, 16
        %v615 = vrot.slane %v613, 1
        %v616 = vor.u32 %v611, %v615
        %617 = vrot.lane.b32.xlu0 %v376, 28
        %v618 = vpop.permute.xlu0 %617
        %619 = vrot.lane.b32.xlu0 %v383, 28
        %v620 = vpop.permute.xlu0 %619
        %621 = vrot.lane.b32.xlu0 %v390, 28
        %v622 = vpop.permute.xlu0 %621
        %623 = vrot.lane.b32.xlu0 %v397, 28
        %v624 = vpop.permute.xlu0 %623
        %625 = vrot.lane.b32.xlu0 %v404, 28
        %v626 = vpop.permute.xlu0 %625
        %627 = vrot.lane.b32.xlu0 %v411, 28
        %v628 = vpop.permute.xlu0 %627
        %629 = vrot.lane.b32.xlu0 %v418, 28
        %v630 = vpop.permute.xlu0 %629
        %631 = vrot.lane.b32.xlu0 %v425, 28
        %v632 = vpop.permute.xlu0 %631
        %633 = vrot.lane.b32.xlu0 %v544, 28
        %v634 = vpop.permute.xlu0 %633
        %635 = vrot.lane.b32.xlu0 %v616, 28
        %v636 = vpop.permute.xlu0 %635
        %v638 = vrot.slane %v354, 1
        %v639 = vrot.slane %v355, 1
        %v640 = vsel %vm466, %v638, %v639
        %641 = vrot.lane.b32.xlu0 %v475, 32
        %v642 = vpop.permute.xlu0 %641
        %643 = vrot.lane.b32.xlu0 %v478, 32
        %v644 = vpop.permute.xlu0 %643
        %645 = vrot.lane.b32.xlu0 %v481, 32
        %v646 = vpop.permute.xlu0 %645
        %647 = vrot.lane.b32.xlu0 %v484, 32
        %v648 = vpop.permute.xlu0 %647
        %649 = vrot.lane.b32.xlu0 %v487, 32
        %v650 = vpop.permute.xlu0 %649
        %651 = vrot.lane.b32.xlu0 %v490, 32
        %v652 = vpop.permute.xlu0 %651
        %653 = vrot.lane.b32.xlu0 %v493, 32
        %v654 = vpop.permute.xlu0 %653
        %655 = vrot.lane.b32.xlu0 %v496, 32
        %v656 = vpop.permute.xlu0 %655
        %657 = vrot.lane.b32.xlu0 %v568, 32
        %v658 = vpop.permute.xlu0 %657
        %659 = vrot.lane.b32.xlu0 %v640, 32
        %v660 = vpop.permute.xlu0 %659
        %vm661 = vcmask 31744
        %v663 = vsel %vm661, %v332, %v427
        %v665 = vsel %vm661, %v334, %v429
        %v667 = vsel %vm661, %v336, %v431
        %v669 = vsel %vm661, %v338, %v433
        %v671 = vsel %vm661, %v340, %v435
        %v673 = vsel %vm661, %v342, %v437
        %v675 = vsel %vm661, %v344, %v439
        %v677 = vsel %vm661, %v346, %v441
        %v679 = vsel %vm661, %v348, %v443
        %v681 = vsel %vm661, %v350, %v445
        %vm682 = vcmask 64512
        %v684 = vsel %vm682, %v663, %v498
        %v686 = vsel %vm682, %v665, %v500
        %v688 = vsel %vm682, %v667, %v502
        %v690 = vsel %vm682, %v669, %v504
        %v692 = vsel %vm682, %v671, %v506
        %v694 = vsel %vm682, %v673, %v508
        %v696 = vsel %vm682, %v675, %v510
        %v698 = vsel %vm682, %v677, %v512
        %v700 = vsel %vm682, %v679, %v514
        %v702 = vsel %vm682, %v681, %v516
        %vm703 = vcmask 97280
        %v705 = vsel %vm703, %v684, %v519
        %v707 = vsel %vm703, %v686, %v521
        %v709 = vsel %vm703, %v688, %v523
        %v711 = vsel %vm703, %v690, %v525
        %v713 = vsel %vm703, %v692, %v527
        %v715 = vsel %vm703, %v694, %v529
        %v717 = vsel %vm703, %v696, %v531
        %v719 = vsel %vm703, %v698, %v533
        %v721 = vsel %vm703, %v700, %v535
        %v723 = vsel %vm703, %v702, %v537
        %vm724 = vcmask 130048
        %v726 = vsel %vm724, %v705, %v546
        %v728 = vsel %vm724, %v707, %v548
        %v730 = vsel %vm724, %v709, %v550
        %v732 = vsel %vm724, %v711, %v552
        %v734 = vsel %vm724, %v713, %v554
        %v736 = vsel %vm724, %v715, %v556
        %v738 = vsel %vm724, %v717, %v558
        %v740 = vsel %vm724, %v719, %v560
        %v742 = vsel %vm724, %v721, %v562
        %v744 = vsel %vm724, %v723, %v564
        %vm745 = vcmask 162816
        %v747 = vsel %vm745, %v726, %v570
        %v749 = vsel %vm745, %v728, %v572
        %v751 = vsel %vm745, %v730, %v574
        %v753 = vsel %vm745, %v732, %v576
        %v755 = vsel %vm745, %v734, %v578
        %v757 = vsel %vm745, %v736, %v580
        %v759 = vsel %vm745, %v738, %v582
        %v761 = vsel %vm745, %v740, %v584
        %v763 = vsel %vm745, %v742, %v586
        %v765 = vsel %vm745, %v744, %v588
        %vm766 = vcmask 195584
        %v768 = vsel %vm766, %v747, %v591
        %v770 = vsel %vm766, %v749, %v593
        %v772 = vsel %vm766, %v751, %v595
        %v774 = vsel %vm766, %v753, %v597
        %v776 = vsel %vm766, %v755, %v599
        %v778 = vsel %vm766, %v757, %v601
        %v780 = vsel %vm766, %v759, %v603
        %v782 = vsel %vm766, %v761, %v605
        %v784 = vsel %vm766, %v763, %v607
        %v786 = vsel %vm766, %v765, %v609
        %vm787 = vcmask 228352
        %v789 = vsel %vm787, %v768, %v618
        %v791 = vsel %vm787, %v770, %v620
        %v793 = vsel %vm787, %v772, %v622
        %v795 = vsel %vm787, %v774, %v624
        %v797 = vsel %vm787, %v776, %v626
        %v799 = vsel %vm787, %v778, %v628
        %v801 = vsel %vm787, %v780, %v630
        %v803 = vsel %vm787, %v782, %v632
        %v805 = vsel %vm787, %v784, %v634
        %v807 = vsel %vm787, %v786, %v636
        %vm808 = vcmask 261120
        %v810 = vsel %vm808, %v789, %v642
        %v812 = vsel %vm808, %v791, %v644
        %v814 = vsel %vm808, %v793, %v646
        %v816 = vsel %vm808, %v795, %v648
        %v818 = vsel %vm808, %v797, %v650
        %v820 = vsel %vm808, %v799, %v652
        %v822 = vsel %vm808, %v801, %v654
        %v824 = vsel %vm808, %v803, %v656
        %v826 = vsel %vm808, %v805, %v658
        %v828 = vsel %vm808, %v807, %v660
        %v839 = vcombine.high %v810, %v810
        %v841 = vunpack.c.l.s4 1966171168
        %v842 = vunpack.c.0.s8 %v841
        %v843 = vlaneseq
        %v844 = vshrl.u32 %v843, 7
        %v845 = vsub.s32 %v842, %v844
        %v846 = vrot.slane %v810, %v845
        %v848 = vunpack.c.l.s4 1966171168
        %v849 = vunpack.c.0.s8 %v848
        %v850 = vlaneseq
        %v851 = vshrl.u32 %v850, 7
        %v852 = vsub.s32 %v849, %v851
        %v853 = vrot.slane %v839, %v852
        %v854 = vcombine.high %v846, %v846
        %v855 = vcombine.high %v853, %v853
        %v857 = vunpack.c.l.s4 1966171168
        %v858 = vunpack.c.0.s8 %v857
        %v859 = vlaneseq
        %v860 = vshrl.u32 %v859, 7
        %v861 = vsub.s32 %v858, %v860
        %v862 = vrot.slane %v846, %v861
        %v864 = vunpack.c.l.s4 1966171168
        %v865 = vunpack.c.0.s8 %v864
        %v866 = vlaneseq
        %v867 = vshrl.u32 %v866, 7
        %v868 = vsub.s32 %v865, %v867
        %v869 = vrot.slane %v853, %v868
        %v871 = vunpack.c.l.s4 1966171168
        %v872 = vunpack.c.0.s8 %v871
        %v873 = vlaneseq
        %v874 = vshrl.u32 %v873, 7
        %v875 = vsub.s32 %v872, %v874
        %v876 = vrot.slane %v854, %v875
        %v878 = vunpack.c.l.s4 1966171168
        %v879 = vunpack.c.0.s8 %v878
        %v880 = vlaneseq
        %v881 = vshrl.u32 %v880, 7
        %v882 = vsub.s32 %v879, %v881
        %v883 = vrot.slane %v855, %v882
        %v884 = vcombine.high %v862, %v862
        %v885 = vcombine.high %v869, %v869
        %v886 = vcombine.high %v876, %v876
        %v887 = vcombine.high %v883, %v883
        %v888 = vcombine.high %v812, %v812
        %v890 = vunpack.c.l.s4 1966171168
        %v891 = vunpack.c.0.s8 %v890
        %v892 = vlaneseq
        %v893 = vshrl.u32 %v892, 7
        %v894 = vsub.s32 %v891, %v893
        %v895 = vrot.slane %v812, %v894
        %v897 = vunpack.c.l.s4 1966171168
        %v898 = vunpack.c.0.s8 %v897
        %v899 = vlaneseq
        %v900 = vshrl.u32 %v899, 7
        %v901 = vsub.s32 %v898, %v900
        %v902 = vrot.slane %v888, %v901
        %v903 = vcombine.high %v895, %v895
        %v904 = vcombine.high %v902, %v902
        %v906 = vunpack.c.l.s4 1966171168
        %v907 = vunpack.c.0.s8 %v906
        %v908 = vlaneseq
        %v909 = vshrl.u32 %v908, 7
        %v910 = vsub.s32 %v907, %v909
        %v911 = vrot.slane %v895, %v910
        %v913 = vunpack.c.l.s4 1966171168
        %v914 = vunpack.c.0.s8 %v913
        %v915 = vlaneseq
        %v916 = vshrl.u32 %v915, 7
        %v917 = vsub.s32 %v914, %v916
        %v918 = vrot.slane %v902, %v917
        %v920 = vunpack.c.l.s4 1966171168
        %v921 = vunpack.c.0.s8 %v920
        %v922 = vlaneseq
        %v923 = vshrl.u32 %v922, 7
        %v924 = vsub.s32 %v921, %v923
        %v925 = vrot.slane %v903, %v924
        %v927 = vunpack.c.l.s4 1966171168
        %v928 = vunpack.c.0.s8 %v927
        %v929 = vlaneseq
        %v930 = vshrl.u32 %v929, 7
        %v931 = vsub.s32 %v928, %v930
        %v932 = vrot.slane %v904, %v931
        %v933 = vcombine.high %v911, %v911
        %v934 = vcombine.high %v918, %v918
        %v935 = vcombine.high %v925, %v925
        %v936 = vcombine.high %v932, %v932
        %v937 = vcombine.high %v814, %v814
        %v939 = vunpack.c.l.s4 1966171168
        %v940 = vunpack.c.0.s8 %v939
        %v941 = vlaneseq
        %v942 = vshrl.u32 %v941, 7
        %v943 = vsub.s32 %v940, %v942
        %v944 = vrot.slane %v814, %v943
        %v946 = vunpack.c.l.s4 1966171168
        %v947 = vunpack.c.0.s8 %v946
        %v948 = vlaneseq
        %v949 = vshrl.u32 %v948, 7
        %v950 = vsub.s32 %v947, %v949
        %v951 = vrot.slane %v937, %v950
        %v952 = vcombine.high %v944, %v944
        %v953 = vcombine.high %v951, %v951
        %v955 = vunpack.c.l.s4 1966171168
        %v956 = vunpack.c.0.s8 %v955
        %v957 = vlaneseq
        %v958 = vshrl.u32 %v957, 7
        %v959 = vsub.s32 %v956, %v958
        %v960 = vrot.slane %v944, %v959
        %v962 = vunpack.c.l.s4 1966171168
        %v963 = vunpack.c.0.s8 %v962
        %v964 = vlaneseq
        %v965 = vshrl.u32 %v964, 7
        %v966 = vsub.s32 %v963, %v965
        %v967 = vrot.slane %v951, %v966
        %v969 = vunpack.c.l.s4 1966171168
        %v970 = vunpack.c.0.s8 %v969
        %v971 = vlaneseq
        %v972 = vshrl.u32 %v971, 7
        %v973 = vsub.s32 %v970, %v972
        %v974 = vrot.slane %v952, %v973
        %v976 = vunpack.c.l.s4 1966171168
        %v977 = vunpack.c.0.s8 %v976
        %v978 = vlaneseq
        %v979 = vshrl.u32 %v978, 7
        %v980 = vsub.s32 %v977, %v979
        %v981 = vrot.slane %v953, %v980
        %v982 = vcombine.high %v960, %v960
        %v983 = vcombine.high %v967, %v967
        %v984 = vcombine.high %v974, %v974
        %v985 = vcombine.high %v981, %v981
        %v986 = vcombine.high %v816, %v816
        %v988 = vunpack.c.l.s4 1966171168
        %v989 = vunpack.c.0.s8 %v988
        %v990 = vlaneseq
        %v991 = vshrl.u32 %v990, 7
        %v992 = vsub.s32 %v989, %v991
        %v993 = vrot.slane %v816, %v992
        %v995 = vunpack.c.l.s4 1966171168
        %v996 = vunpack.c.0.s8 %v995
        %v997 = vlaneseq
        %v998 = vshrl.u32 %v997, 7
        %v999 = vsub.s32 %v996, %v998
        %v1000 = vrot.slane %v986, %v999
        %v1001 = vcombine.high %v993, %v993
        %v1002 = vcombine.high %v1000, %v1000
        %v1004 = vunpack.c.l.s4 1966171168
        %v1005 = vunpack.c.0.s8 %v1004
        %v1006 = vlaneseq
        %v1007 = vshrl.u32 %v1006, 7
        %v1008 = vsub.s32 %v1005, %v1007
        %v1009 = vrot.slane %v993, %v1008
        %v1011 = vunpack.c.l.s4 1966171168
        %v1012 = vunpack.c.0.s8 %v1011
        %v1013 = vlaneseq
        %v1014 = vshrl.u32 %v1013, 7
        %v1015 = vsub.s32 %v1012, %v1014
        %v1016 = vrot.slane %v1000, %v1015
        %v1018 = vunpack.c.l.s4 1966171168
        %v1019 = vunpack.c.0.s8 %v1018
        %v1020 = vlaneseq
        %v1021 = vshrl.u32 %v1020, 7
        %v1022 = vsub.s32 %v1019, %v1021
        %v1023 = vrot.slane %v1001, %v1022
        %v1025 = vunpack.c.l.s4 1966171168
        %v1026 = vunpack.c.0.s8 %v1025
        %v1027 = vlaneseq
        %v1028 = vshrl.u32 %v1027, 7
        %v1029 = vsub.s32 %v1026, %v1028
        %v1030 = vrot.slane %v1002, %v1029
        %v1031 = vcombine.high %v1009, %v1009
        %v1032 = vcombine.high %v1016, %v1016
        %v1033 = vcombine.high %v1023, %v1023
        %v1034 = vcombine.high %v1030, %v1030
        %v1035 = vcombine.high %v818, %v818
        %v1037 = vunpack.c.l.s4 1966171168
        %v1038 = vunpack.c.0.s8 %v1037
        %v1039 = vlaneseq
        %v1040 = vshrl.u32 %v1039, 7
        %v1041 = vsub.s32 %v1038, %v1040
        %v1042 = vrot.slane %v818, %v1041
        %v1044 = vunpack.c.l.s4 1966171168
        %v1045 = vunpack.c.0.s8 %v1044
        %v1046 = vlaneseq
        %v1047 = vshrl.u32 %v1046, 7
        %v1048 = vsub.s32 %v1045, %v1047
        %v1049 = vrot.slane %v1035, %v1048
        %v1050 = vcombine.high %v1042, %v1042
        %v1051 = vcombine.high %v1049, %v1049
        %v1053 = vunpack.c.l.s4 1966171168
        %v1054 = vunpack.c.0.s8 %v1053
        %v1055 = vlaneseq
        %v1056 = vshrl.u32 %v1055, 7
        %v1057 = vsub.s32 %v1054, %v1056
        %v1058 = vrot.slane %v1042, %v1057
        %v1060 = vunpack.c.l.s4 1966171168
        %v1061 = vunpack.c.0.s8 %v1060
        %v1062 = vlaneseq
        %v1063 = vshrl.u32 %v1062, 7
        %v1064 = vsub.s32 %v1061, %v1063
        %v1065 = vrot.slane %v1049, %v1064
        %v1067 = vunpack.c.l.s4 1966171168
        %v1068 = vunpack.c.0.s8 %v1067
        %v1069 = vlaneseq
        %v1070 = vshrl.u32 %v1069, 7
        %v1071 = vsub.s32 %v1068, %v1070
        %v1072 = vrot.slane %v1050, %v1071
        %v1074 = vunpack.c.l.s4 1966171168
        %v1075 = vunpack.c.0.s8 %v1074
        %v1076 = vlaneseq
        %v1077 = vshrl.u32 %v1076, 7
        %v1078 = vsub.s32 %v1075, %v1077
        %v1079 = vrot.slane %v1051, %v1078
        %v1080 = vcombine.high %v1058, %v1058
        %v1081 = vcombine.high %v1065, %v1065
        %v1082 = vcombine.high %v1072, %v1072
        %v1083 = vcombine.high %v1079, %v1079
        %v1084 = vcombine.high %v820, %v820
        %v1086 = vunpack.c.l.s4 1966171168
        %v1087 = vunpack.c.0.s8 %v1086
        %v1088 = vlaneseq
        %v1089 = vshrl.u32 %v1088, 7
        %v1090 = vsub.s32 %v1087, %v1089
        %v1091 = vrot.slane %v820, %v1090
        %v1093 = vunpack.c.l.s4 1966171168
        %v1094 = vunpack.c.0.s8 %v1093
        %v1095 = vlaneseq
        %v1096 = vshrl.u32 %v1095, 7
        %v1097 = vsub.s32 %v1094, %v1096
        %v1098 = vrot.slane %v1084, %v1097
        %v1099 = vcombine.high %v1091, %v1091
        %v1100 = vcombine.high %v1098, %v1098
        %v1102 = vunpack.c.l.s4 1966171168
        %v1103 = vunpack.c.0.s8 %v1102
        %v1104 = vlaneseq
        %v1105 = vshrl.u32 %v1104, 7
        %v1106 = vsub.s32 %v1103, %v1105
        %v1107 = vrot.slane %v1091, %v1106
        %v1109 = vunpack.c.l.s4 1966171168
        %v1110 = vunpack.c.0.s8 %v1109
        %v1111 = vlaneseq
        %v1112 = vshrl.u32 %v1111, 7
        %v1113 = vsub.s32 %v1110, %v1112
        %v1114 = vrot.slane %v1098, %v1113
        %v1116 = vunpack.c.l.s4 1966171168
        %v1117 = vunpack.c.0.s8 %v1116
        %v1118 = vlaneseq
        %v1119 = vshrl.u32 %v1118, 7
        %v1120 = vsub.s32 %v1117, %v1119
        %v1121 = vrot.slane %v1099, %v1120
        %v1123 = vunpack.c.l.s4 1966171168
        %v1124 = vunpack.c.0.s8 %v1123
        %v1125 = vlaneseq
        %v1126 = vshrl.u32 %v1125, 7
        %v1127 = vsub.s32 %v1124, %v1126
        %v1128 = vrot.slane %v1100, %v1127
        %v1129 = vcombine.high %v1107, %v1107
        %v1130 = vcombine.high %v1114, %v1114
        %v1131 = vcombine.high %v1121, %v1121
        %v1132 = vcombine.high %v1128, %v1128
        %v1133 = vcombine.high %v822, %v822
        %v1135 = vunpack.c.l.s4 1966171168
        %v1136 = vunpack.c.0.s8 %v1135
        %v1137 = vlaneseq
        %v1138 = vshrl.u32 %v1137, 7
        %v1139 = vsub.s32 %v1136, %v1138
        %v1140 = vrot.slane %v822, %v1139
        %v1142 = vunpack.c.l.s4 1966171168
        %v1143 = vunpack.c.0.s8 %v1142
        %v1144 = vlaneseq
        %v1145 = vshrl.u32 %v1144, 7
        %v1146 = vsub.s32 %v1143, %v1145
        %v1147 = vrot.slane %v1133, %v1146
        %v1148 = vcombine.high %v1140, %v1140
        %v1149 = vcombine.high %v1147, %v1147
        %v1151 = vunpack.c.l.s4 1966171168
        %v1152 = vunpack.c.0.s8 %v1151
        %v1153 = vlaneseq
        %v1154 = vshrl.u32 %v1153, 7
        %v1155 = vsub.s32 %v1152, %v1154
        %v1156 = vrot.slane %v1140, %v1155
        %v1158 = vunpack.c.l.s4 1966171168
        %v1159 = vunpack.c.0.s8 %v1158
        %v1160 = vlaneseq
        %v1161 = vshrl.u32 %v1160, 7
        %v1162 = vsub.s32 %v1159, %v1161
        %v1163 = vrot.slane %v1147, %v1162
        %v1165 = vunpack.c.l.s4 1966171168
        %v1166 = vunpack.c.0.s8 %v1165
        %v1167 = vlaneseq
        %v1168 = vshrl.u32 %v1167, 7
        %v1169 = vsub.s32 %v1166, %v1168
        %v1170 = vrot.slane %v1148, %v1169
        %v1172 = vunpack.c.l.s4 1966171168
        %v1173 = vunpack.c.0.s8 %v1172
        %v1174 = vlaneseq
        %v1175 = vshrl.u32 %v1174, 7
        %v1176 = vsub.s32 %v1173, %v1175
        %v1177 = vrot.slane %v1149, %v1176
        %v1178 = vcombine.high %v1156, %v1156
        %v1179 = vcombine.high %v1163, %v1163
        %v1180 = vcombine.high %v1170, %v1170
        %v1181 = vcombine.high %v1177, %v1177
        %v1182 = vcombine.high %v824, %v824
        %v1184 = vunpack.c.l.s4 1966171168
        %v1185 = vunpack.c.0.s8 %v1184
        %v1186 = vlaneseq
        %v1187 = vshrl.u32 %v1186, 7
        %v1188 = vsub.s32 %v1185, %v1187
        %v1189 = vrot.slane %v824, %v1188
        %v1191 = vunpack.c.l.s4 1966171168
        %v1192 = vunpack.c.0.s8 %v1191
        %v1193 = vlaneseq
        %v1194 = vshrl.u32 %v1193, 7
        %v1195 = vsub.s32 %v1192, %v1194
        %v1196 = vrot.slane %v1182, %v1195
        %v1197 = vcombine.high %v1189, %v1189
        %v1198 = vcombine.high %v1196, %v1196
        %v1200 = vunpack.c.l.s4 1966171168
        %v1201 = vunpack.c.0.s8 %v1200
        %v1202 = vlaneseq
        %v1203 = vshrl.u32 %v1202, 7
        %v1204 = vsub.s32 %v1201, %v1203
        %v1205 = vrot.slane %v1189, %v1204
        %v1207 = vunpack.c.l.s4 1966171168
        %v1208 = vunpack.c.0.s8 %v1207
        %v1209 = vlaneseq
        %v1210 = vshrl.u32 %v1209, 7
        %v1211 = vsub.s32 %v1208, %v1210
        %v1212 = vrot.slane %v1196, %v1211
        %v1214 = vunpack.c.l.s4 1966171168
        %v1215 = vunpack.c.0.s8 %v1214
        %v1216 = vlaneseq
        %v1217 = vshrl.u32 %v1216, 7
        %v1218 = vsub.s32 %v1215, %v1217
        %v1219 = vrot.slane %v1197, %v1218
        %v1221 = vunpack.c.l.s4 1966171168
        %v1222 = vunpack.c.0.s8 %v1221
        %v1223 = vlaneseq
        %v1224 = vshrl.u32 %v1223, 7
        %v1225 = vsub.s32 %v1222, %v1224
        %v1226 = vrot.slane %v1198, %v1225
        %v1227 = vcombine.high %v1205, %v1205
        %v1228 = vcombine.high %v1212, %v1212
        %v1229 = vcombine.high %v1219, %v1219
        %v1230 = vcombine.high %v1226, %v1226
        %v1231 = vcombine.high %v826, %v826
        %v1233 = vunpack.c.l.s4 1966171168
        %v1234 = vunpack.c.0.s8 %v1233
        %v1235 = vlaneseq
        %v1236 = vshrl.u32 %v1235, 7
        %v1237 = vsub.s32 %v1234, %v1236
        %v1238 = vrot.slane %v826, %v1237
        %v1240 = vunpack.c.l.s4 1966171168
        %v1241 = vunpack.c.0.s8 %v1240
        %v1242 = vlaneseq
        %v1243 = vshrl.u32 %v1242, 7
        %v1244 = vsub.s32 %v1241, %v1243
        %v1245 = vrot.slane %v1231, %v1244
        %v1246 = vcombine.high %v1238, %v1238
        %v1247 = vcombine.high %v1245, %v1245
        %v1249 = vunpack.c.l.s4 1966171168
        %v1250 = vunpack.c.0.s8 %v1249
        %v1251 = vlaneseq
        %v1252 = vshrl.u32 %v1251, 7
        %v1253 = vsub.s32 %v1250, %v1252
        %v1254 = vrot.slane %v1238, %v1253
        %v1256 = vunpack.c.l.s4 1966171168
        %v1257 = vunpack.c.0.s8 %v1256
        %v1258 = vlaneseq
        %v1259 = vshrl.u32 %v1258, 7
        %v1260 = vsub.s32 %v1257, %v1259
        %v1261 = vrot.slane %v1245, %v1260
        %v1263 = vunpack.c.l.s4 1966171168
        %v1264 = vunpack.c.0.s8 %v1263
        %v1265 = vlaneseq
        %v1266 = vshrl.u32 %v1265, 7
        %v1267 = vsub.s32 %v1264, %v1266
        %v1268 = vrot.slane %v1246, %v1267
        %v1270 = vunpack.c.l.s4 1966171168
        %v1271 = vunpack.c.0.s8 %v1270
        %v1272 = vlaneseq
        %v1273 = vshrl.u32 %v1272, 7
        %v1274 = vsub.s32 %v1271, %v1273
        %v1275 = vrot.slane %v1247, %v1274
        %v1276 = vcombine.high %v1254, %v1254
        %v1277 = vcombine.high %v1261, %v1261
        %v1278 = vcombine.high %v1268, %v1268
        %v1279 = vcombine.high %v1275, %v1275
        %v1280 = vcombine.high %v828, %v828
        %v1282 = vunpack.c.l.s4 1966171168
        %v1283 = vunpack.c.0.s8 %v1282
        %v1284 = vlaneseq
        %v1285 = vshrl.u32 %v1284, 7
        %v1286 = vsub.s32 %v1283, %v1285
        %v1287 = vrot.slane %v828, %v1286
        %v1289 = vunpack.c.l.s4 1966171168
        %v1290 = vunpack.c.0.s8 %v1289
        %v1291 = vlaneseq
        %v1292 = vshrl.u32 %v1291, 7
        %v1293 = vsub.s32 %v1290, %v1292
        %v1294 = vrot.slane %v1280, %v1293
        %v1295 = vcombine.high %v1287, %v1287
        %v1296 = vcombine.high %v1294, %v1294
        %v1298 = vunpack.c.l.s4 1966171168
        %v1299 = vunpack.c.0.s8 %v1298
        %v1300 = vlaneseq
        %v1301 = vshrl.u32 %v1300, 7
        %v1302 = vsub.s32 %v1299, %v1301
        %v1303 = vrot.slane %v1287, %v1302
        %v1305 = vunpack.c.l.s4 1966171168
        %v1306 = vunpack.c.0.s8 %v1305
        %v1307 = vlaneseq
        %v1308 = vshrl.u32 %v1307, 7
        %v1309 = vsub.s32 %v1306, %v1308
        %v1310 = vrot.slane %v1294, %v1309
        %v1312 = vunpack.c.l.s4 1966171168
        %v1313 = vunpack.c.0.s8 %v1312
        %v1314 = vlaneseq
        %v1315 = vshrl.u32 %v1314, 7
        %v1316 = vsub.s32 %v1313, %v1315
        %v1317 = vrot.slane %v1295, %v1316
        %v1319 = vunpack.c.l.s4 1966171168
        %v1320 = vunpack.c.0.s8 %v1319
        %v1321 = vlaneseq
        %v1322 = vshrl.u32 %v1321, 7
        %v1323 = vsub.s32 %v1320, %v1322
        %v1324 = vrot.slane %v1296, %v1323
        %v1325 = vcombine.high %v1303, %v1303
        %v1326 = vcombine.high %v1310, %v1310
        %v1327 = vcombine.high %v1317, %v1317
        %v1328 = vcombine.high %v1324, %v1324
        %v1329 = vunpack.i.l.s16 %v862
        %v1330 = vunpack.i.h.s16 %v862
        %v1331 = vunpack.i.l.s16 %v876
        %v1332 = vunpack.i.h.s16 %v876
        %v1333 = vunpack.i.l.s16 %v884
        %v1334 = vunpack.i.h.s16 %v884
        %v1335 = vunpack.i.l.s16 %v886
        %v1336 = vunpack.i.h.s16 %v886
        %v1337 = vunpack.i.l.s16 %v869
        %v1338 = vunpack.i.h.s16 %v869
        %v1339 = vunpack.i.l.s16 %v883
        %v1340 = vunpack.i.h.s16 %v883
        %v1341 = vunpack.i.l.s16 %v885
        %v1342 = vunpack.i.h.s16 %v885
        %v1343 = vunpack.i.l.s16 %v887
        %v1344 = vunpack.i.l.s16 %v911
        %v1345 = vunpack.i.h.s16 %v911
        %v1346 = vunpack.i.l.s16 %v925
        %v1347 = vunpack.i.h.s16 %v925
        %v1348 = vunpack.i.l.s16 %v933
        %v1349 = vunpack.i.h.s16 %v933
        %v1350 = vunpack.i.l.s16 %v935
        %v1351 = vunpack.i.h.s16 %v935
        %v1352 = vunpack.i.l.s16 %v918
        %v1353 = vunpack.i.h.s16 %v918
        %v1354 = vunpack.i.l.s16 %v932
        %v1355 = vunpack.i.h.s16 %v932
        %v1356 = vunpack.i.l.s16 %v934
        %v1357 = vunpack.i.h.s16 %v934
        %v1358 = vunpack.i.l.s16 %v936
        %v1359 = vunpack.i.l.s16 %v960
        %v1360 = vunpack.i.h.s16 %v960
        %v1361 = vunpack.i.l.s16 %v974
        %v1362 = vunpack.i.h.s16 %v974
        %v1363 = vunpack.i.l.s16 %v982
        %v1364 = vunpack.i.h.s16 %v982
        %v1365 = vunpack.i.l.s16 %v984
        %v1366 = vunpack.i.h.s16 %v984
        %v1367 = vunpack.i.l.s16 %v967
        %v1368 = vunpack.i.h.s16 %v967
        %v1369 = vunpack.i.l.s16 %v981
        %v1370 = vunpack.i.h.s16 %v981
        %v1371 = vunpack.i.l.s16 %v983
        %v1372 = vunpack.i.h.s16 %v983
        %v1373 = vunpack.i.l.s16 %v985
        %v1374 = vunpack.i.l.s16 %v1009
        %v1375 = vunpack.i.h.s16 %v1009
        %v1376 = vunpack.i.l.s16 %v1023
        %v1377 = vunpack.i.h.s16 %v1023
        %v1378 = vunpack.i.l.s16 %v1031
        %v1379 = vunpack.i.h.s16 %v1031
        %v1380 = vunpack.i.l.s16 %v1033
        %v1381 = vunpack.i.h.s16 %v1033
        %v1382 = vunpack.i.l.s16 %v1016
        %v1383 = vunpack.i.h.s16 %v1016
        %v1384 = vunpack.i.l.s16 %v1030
        %v1385 = vunpack.i.h.s16 %v1030
        %v1386 = vunpack.i.l.s16 %v1032
        %v1387 = vunpack.i.h.s16 %v1032
        %v1388 = vunpack.i.l.s16 %v1034
        %v1389 = vunpack.i.l.s16 %v1058
        %v1390 = vunpack.i.h.s16 %v1058
        %v1391 = vunpack.i.l.s16 %v1072
        %v1392 = vunpack.i.h.s16 %v1072
        %v1393 = vunpack.i.l.s16 %v1080
        %v1394 = vunpack.i.h.s16 %v1080
        %v1395 = vunpack.i.l.s16 %v1082
        %v1396 = vunpack.i.h.s16 %v1082
        %v1397 = vunpack.i.l.s16 %v1065
        %v1398 = vunpack.i.h.s16 %v1065
        %v1399 = vunpack.i.l.s16 %v1079
        %v1400 = vunpack.i.h.s16 %v1079
        %v1401 = vunpack.i.l.s16 %v1081
        %v1402 = vunpack.i.h.s16 %v1081
        %v1403 = vunpack.i.l.s16 %v1083
        %v1404 = vunpack.i.l.s16 %v1107
        %v1405 = vunpack.i.h.s16 %v1107
        %v1406 = vunpack.i.l.s16 %v1121
        %v1407 = vunpack.i.h.s16 %v1121
        %v1408 = vunpack.i.l.s16 %v1129
        %v1409 = vunpack.i.h.s16 %v1129
        %v1410 = vunpack.i.l.s16 %v1131
        %v1411 = vunpack.i.h.s16 %v1131
        %v1412 = vunpack.i.l.s16 %v1114
        %v1413 = vunpack.i.h.s16 %v1114
        %v1414 = vunpack.i.l.s16 %v1128
        %v1415 = vunpack.i.h.s16 %v1128
        %v1416 = vunpack.i.l.s16 %v1130
        %v1417 = vunpack.i.h.s16 %v1130
        %v1418 = vunpack.i.l.s16 %v1132
        %v1419 = vunpack.i.l.s16 %v1156
        %v1420 = vunpack.i.h.s16 %v1156
        %v1421 = vunpack.i.l.s16 %v1170
        %v1422 = vunpack.i.h.s16 %v1170
        %v1423 = vunpack.i.l.s16 %v1178
        %v1424 = vunpack.i.h.s16 %v1178
        %v1425 = vunpack.i.l.s16 %v1180
        %v1426 = vunpack.i.h.s16 %v1180
        %v1427 = vunpack.i.l.s16 %v1163
        %v1428 = vunpack.i.h.s16 %v1163
        %v1429 = vunpack.i.l.s16 %v1177
        %v1430 = vunpack.i.h.s16 %v1177
        %v1431 = vunpack.i.l.s16 %v1179
        %v1432 = vunpack.i.h.s16 %v1179
        %v1433 = vunpack.i.l.s16 %v1181
        %v1434 = vunpack.i.l.s16 %v1205
        %v1435 = vunpack.i.h.s16 %v1205
        %v1436 = vunpack.i.l.s16 %v1219
        %v1437 = vunpack.i.h.s16 %v1219
        %v1438 = vunpack.i.l.s16 %v1227
        %v1439 = vunpack.i.h.s16 %v1227
        %v1440 = vunpack.i.l.s16 %v1229
        %v1441 = vunpack.i.h.s16 %v1229
        %v1442 = vunpack.i.l.s16 %v1212
        %v1443 = vunpack.i.h.s16 %v1212
        %v1444 = vunpack.i.l.s16 %v1226
        %v1445 = vunpack.i.h.s16 %v1226
        %v1446 = vunpack.i.l.s16 %v1228
        %v1447 = vunpack.i.h.s16 %v1228
        %v1448 = vunpack.i.l.s16 %v1230
        %v1449 = vunpack.i.l.s16 %v1254
        %v1450 = vunpack.i.h.s16 %v1254
        %v1451 = vunpack.i.l.s16 %v1268
        %v1452 = vunpack.i.h.s16 %v1268
        %v1453 = vunpack.i.l.s16 %v1276
        %v1454 = vunpack.i.h.s16 %v1276
        %v1455 = vunpack.i.l.s16 %v1278
        %v1456 = vunpack.i.h.s16 %v1278
        %v1457 = vunpack.i.l.s16 %v1261
        %v1458 = vunpack.i.h.s16 %v1261
        %v1459 = vunpack.i.l.s16 %v1275
        %v1460 = vunpack.i.h.s16 %v1275
        %v1461 = vunpack.i.l.s16 %v1277
        %v1462 = vunpack.i.h.s16 %v1277
        %v1463 = vunpack.i.l.s16 %v1279
        %v1464 = vunpack.i.l.s16 %v1303
        %v1465 = vunpack.i.h.s16 %v1303
        %v1466 = vunpack.i.l.s16 %v1317
        %v1467 = vunpack.i.h.s16 %v1317
        %v1468 = vunpack.i.l.s16 %v1325
        %v1469 = vunpack.i.h.s16 %v1325
        %v1470 = vunpack.i.l.s16 %v1327
        %v1471 = vunpack.i.h.s16 %v1327
        %v1472 = vunpack.i.l.s16 %v1310
        %v1473 = vunpack.i.h.s16 %v1310
        %v1474 = vunpack.i.l.s16 %v1324
        %v1475 = vunpack.i.h.s16 %v1324
        %v1476 = vunpack.i.l.s16 %v1326
        %v1477 = vunpack.i.h.s16 %v1326
        %v1478 = vunpack.i.l.s16 %v1328
        %v1479 = vld [vmem:[%s1] sm:$0xf]
        %v1480 = vld [vmem:[%s1 + $0x4] sm:$0xf]
        %v1481 = vld [vmem:[%s1 + $0x8] sm:$0xf]
        %v1482 = vld [vmem:[%s1 + $0xc] sm:$0xf]
        %v1483 = vld [vmem:[%s1 + $0x10] sm:$0x3]
        %v1484 = vpack.i.b16 %v1330, %v1329
        %v1485 = vpack.i.b16 %v1332, %v1331
        %v1486 = vpack.i.b16 %v1334, %v1333
        %v1487 = vpack.i.b16 %v1336, %v1335
        %v1488 = vpack.i.b16 %v1338, %v1337
        %v1489 = vpack.i.b16 %v1340, %v1339
        %v1490 = vpack.i.b16 %v1342, %v1341
        %v1491 = vpack.i.b16 %v1344, %v1343
        %v1492 = vpack.i.b16 %v1346, %v1345
        %v1493 = vpack.i.b16 %v1348, %v1347
        %v1494 = vpack.i.b16 %v1350, %v1349
        %v1495 = vpack.i.b16 %v1352, %v1351
        %v1496 = vpack.i.b16 %v1354, %v1353
        %v1497 = vpack.i.b16 %v1356, %v1355
        %v1498 = vpack.i.b16 %v1358, %v1357
        %v1499 = vpack.i.b16 %v1360, %v1359
        %v1500 = vpack.i.b16 %v1362, %v1361
        %v1501 = vpack.i.b16 %v1364, %v1363
        %v1502 = vpack.i.b16 %v1366, %v1365
        %v1503 = vpack.i.b16 %v1368, %v1367
        %v1504 = vpack.i.b16 %v1370, %v1369
        %v1505 = vpack.i.b16 %v1372, %v1371
        %v1506 = vpack.i.b16 %v1374, %v1373
        %v1507 = vpack.i.b16 %v1376, %v1375
        %v1508 = vpack.i.b16 %v1378, %v1377
        %v1509 = vpack.i.b16 %v1380, %v1379
        %v1510 = vpack.i.b16 %v1382, %v1381
        %v1511 = vpack.i.b16 %v1384, %v1383
        %v1512 = vpack.i.b16 %v1386, %v1385
        %v1513 = vpack.i.b16 %v1388, %v1387
        %v1514 = vpack.i.b16 %v1390, %v1389
        %v1515 = vpack.i.b16 %v1392, %v1391
        %v1516 = vpack.i.b16 %v1394, %v1393
        %v1517 = vpack.i.b16 %v1396, %v1395
        %v1518 = vpack.i.b16 %v1398, %v1397
        %v1519 = vpack.i.b16 %v1400, %v1399
        %v1520 = vpack.i.b16 %v1402, %v1401
        %v1521 = vpack.i.b16 %v1404, %v1403
        %v1522 = vpack.i.b16 %v1406, %v1405
        %v1523 = vpack.i.b16 %v1408, %v1407
        %v1524 = vpack.i.b16 %v1410, %v1409
        %v1525 = vpack.i.b16 %v1412, %v1411
        %v1526 = vpack.i.b16 %v1414, %v1413
        %v1527 = vpack.i.b16 %v1416, %v1415
        %v1528 = vpack.i.b16 %v1418, %v1417
        %v1529 = vpack.i.b16 %v1420, %v1419
        %v1530 = vpack.i.b16 %v1422, %v1421
        %v1531 = vpack.i.b16 %v1424, %v1423
        %v1532 = vpack.i.b16 %v1426, %v1425
        %v1533 = vpack.i.b16 %v1428, %v1427
        %v1534 = vpack.i.b16 %v1430, %v1429
        %v1535 = vpack.i.b16 %v1432, %v1431
        %v1536 = vpack.i.b16 %v1434, %v1433
        %v1537 = vpack.i.b16 %v1436, %v1435
        %v1538 = vpack.i.b16 %v1438, %v1437
        %v1539 = vpack.i.b16 %v1440, %v1439
        %v1540 = vpack.i.b16 %v1442, %v1441
        %v1541 = vpack.i.b16 %v1444, %v1443
        %v1542 = vpack.i.b16 %v1446, %v1445
        %v1543 = vpack.i.b16 %v1448, %v1447
        %v1544 = vpack.i.b16 %v1450, %v1449
        %v1545 = vpack.i.b16 %v1452, %v1451
        %v1546 = vpack.i.b16 %v1454, %v1453
        %v1547 = vpack.i.b16 %v1456, %v1455
        %v1548 = vpack.i.b16 %v1458, %v1457
        %v1549 = vpack.i.b16 %v1460, %v1459
        %v1550 = vpack.i.b16 %v1462, %v1461
        %v1551 = vpack.i.b16 %v1464, %v1463
        %v1552 = vpack.i.b16 %v1466, %v1465
        %v1553 = vpack.i.b16 %v1468, %v1467
        %v1554 = vpack.i.b16 %v1470, %v1469
        %v1555 = vpack.i.b16 %v1472, %v1471
        %v1556 = vpack.i.b16 %v1474, %v1473
        %v1557 = vpack.i.b16 %v1476, %v1475
        %v1558 = vpack.i.b16 %v1478, %v1477
        %v1559 = vcombine.low %v1484, %v1485
        %v1560 = vcombine.low %v1486, %v1487
        %v1561 = vcombine.low %v1488, %v1489
        %v1562 = vcombine.low %v1490, %v1491
        %v1564 = vunpack.c.l.s4 1966171168
        %v1565 = vunpack.c.0.s8 %v1564
        %v1566 = vlaneseq
        %v1567 = vshrl.u32 %v1566, 7
        %v1568 = vsub.s32 %v1565, %v1567
        %v1569 = vrot.slane %v1559, %v1568
        %v1571 = vunpack.c.l.s4 1966171168
        %v1572 = vunpack.c.0.s8 %v1571
        %v1573 = vlaneseq
        %v1574 = vshrl.u32 %v1573, 7
        %v1575 = vsub.s32 %v1572, %v1574
        %v1576 = vrot.slane %v1560, %v1575
        %v1578 = vunpack.c.l.s4 1966171168
        %v1579 = vunpack.c.0.s8 %v1578
        %v1580 = vlaneseq
        %v1581 = vshrl.u32 %v1580, 7
        %v1582 = vsub.s32 %v1579, %v1581
        %v1583 = vrot.slane %v1561, %v1582
        %v1585 = vunpack.c.l.s4 1966171168
        %v1586 = vunpack.c.0.s8 %v1585
        %v1587 = vlaneseq
        %v1588 = vshrl.u32 %v1587, 7
        %v1589 = vsub.s32 %v1586, %v1588
        %v1590 = vrot.slane %v1562, %v1589
        %v1591 = vcombine.low %v1569, %v1576
        %v1592 = vcombine.low %v1583, %v1590
        %v1594 = vunpack.c.l.s4 1966171168
        %v1595 = vunpack.c.0.s8 %v1594
        %v1596 = vlaneseq
        %v1597 = vshrl.u32 %v1596, 7
        %v1598 = vsub.s32 %v1595, %v1597
        %v1599 = vrot.slane %v1591, %v1598
        %v1601 = vunpack.c.l.s4 1966171168
        %v1602 = vunpack.c.0.s8 %v1601
        %v1603 = vlaneseq
        %v1604 = vshrl.u32 %v1603, 7
        %v1605 = vsub.s32 %v1602, %v1604
        %v1606 = vrot.slane %v1592, %v1605
        %v1607 = vcombine.low %v1599, %v1606
        %v1608 = vcombine.low %v1492, %v1493
        %v1609 = vcombine.low %v1494, %v1495
        %v1610 = vcombine.low %v1496, %v1497
        %v1611 = vcombine.low %v1498, %v1499
        %v1613 = vunpack.c.l.s4 1966171168
        %v1614 = vunpack.c.0.s8 %v1613
        %v1615 = vlaneseq
        %v1616 = vshrl.u32 %v1615, 7
        %v1617 = vsub.s32 %v1614, %v1616
        %v1618 = vrot.slane %v1608, %v1617
        %v1620 = vunpack.c.l.s4 1966171168
        %v1621 = vunpack.c.0.s8 %v1620
        %v1622 = vlaneseq
        %v1623 = vshrl.u32 %v1622, 7
        %v1624 = vsub.s32 %v1621, %v1623
        %v1625 = vrot.slane %v1609, %v1624
        %v1627 = vunpack.c.l.s4 1966171168
        %v1628 = vunpack.c.0.s8 %v1627
        %v1629 = vlaneseq
        %v1630 = vshrl.u32 %v1629, 7
        %v1631 = vsub.s32 %v1628, %v1630
        %v1632 = vrot.slane %v1610, %v1631
        %v1634 = vunpack.c.l.s4 1966171168
        %v1635 = vunpack.c.0.s8 %v1634
        %v1636 = vlaneseq
        %v1637 = vshrl.u32 %v1636, 7
        %v1638 = vsub.s32 %v1635, %v1637
        %v1639 = vrot.slane %v1611, %v1638
        %v1640 = vcombine.low %v1618, %v1625
        %v1641 = vcombine.low %v1632, %v1639
        %v1643 = vunpack.c.l.s4 1966171168
        %v1644 = vunpack.c.0.s8 %v1643
        %v1645 = vlaneseq
        %v1646 = vshrl.u32 %v1645, 7
        %v1647 = vsub.s32 %v1644, %v1646
        %v1648 = vrot.slane %v1640, %v1647
        %v1650 = vunpack.c.l.s4 1966171168
        %v1651 = vunpack.c.0.s8 %v1650
        %v1652 = vlaneseq
        %v1653 = vshrl.u32 %v1652, 7
        %v1654 = vsub.s32 %v1651, %v1653
        %v1655 = vrot.slane %v1641, %v1654
        %v1656 = vcombine.low %v1648, %v1655
        %v1657 = vcombine.low %v1500, %v1501
        %v1658 = vcombine.low %v1502, %v1503
        %v1659 = vcombine.low %v1504, %v1505
        %v1660 = vcombine.low %v1506, %v1507
        %v1662 = vunpack.c.l.s4 1966171168
        %v1663 = vunpack.c.0.s8 %v1662
        %v1664 = vlaneseq
        %v1665 = vshrl.u32 %v1664, 7
        %v1666 = vsub.s32 %v1663, %v1665
        %v1667 = vrot.slane %v1657, %v1666
        %v1669 = vunpack.c.l.s4 1966171168
        %v1670 = vunpack.c.0.s8 %v1669
        %v1671 = vlaneseq
        %v1672 = vshrl.u32 %v1671, 7
        %v1673 = vsub.s32 %v1670, %v1672
        %v1674 = vrot.slane %v1658, %v1673
        %v1676 = vunpack.c.l.s4 1966171168
        %v1677 = vunpack.c.0.s8 %v1676
        %v1678 = vlaneseq
        %v1679 = vshrl.u32 %v1678, 7
        %v1680 = vsub.s32 %v1677, %v1679
        %v1681 = vrot.slane %v1659, %v1680
        %v1683 = vunpack.c.l.s4 1966171168
        %v1684 = vunpack.c.0.s8 %v1683
        %v1685 = vlaneseq
        %v1686 = vshrl.u32 %v1685, 7
        %v1687 = vsub.s32 %v1684, %v1686
        %v1688 = vrot.slane %v1660, %v1687
        %v1689 = vcombine.low %v1667, %v1674
        %v1690 = vcombine.low %v1681, %v1688
        %v1692 = vunpack.c.l.s4 1966171168
        %v1693 = vunpack.c.0.s8 %v1692
        %v1694 = vlaneseq
        %v1695 = vshrl.u32 %v1694, 7
        %v1696 = vsub.s32 %v1693, %v1695
        %v1697 = vrot.slane %v1689, %v1696
        %v1699 = vunpack.c.l.s4 1966171168
        %v1700 = vunpack.c.0.s8 %v1699
        %v1701 = vlaneseq
        %v1702 = vshrl.u32 %v1701, 7
        %v1703 = vsub.s32 %v1700, %v1702
        %v1704 = vrot.slane %v1690, %v1703
        %v1705 = vcombine.low %v1697, %v1704
        %v1706 = vcombine.low %v1508, %v1509
        %v1707 = vcombine.low %v1510, %v1511
        %v1708 = vcombine.low %v1512, %v1513
        %v1709 = vcombine.low %v1514, %v1515
        %v1711 = vunpack.c.l.s4 1966171168
        %v1712 = vunpack.c.0.s8 %v1711
        %v1713 = vlaneseq
        %v1714 = vshrl.u32 %v1713, 7
        %v1715 = vsub.s32 %v1712, %v1714
        %v1716 = vrot.slane %v1706, %v1715
        %v1718 = vunpack.c.l.s4 1966171168
        %v1719 = vunpack.c.0.s8 %v1718
        %v1720 = vlaneseq
        %v1721 = vshrl.u32 %v1720, 7
        %v1722 = vsub.s32 %v1719, %v1721
        %v1723 = vrot.slane %v1707, %v1722
        %v1725 = vunpack.c.l.s4 1966171168
        %v1726 = vunpack.c.0.s8 %v1725
        %v1727 = vlaneseq
        %v1728 = vshrl.u32 %v1727, 7
        %v1729 = vsub.s32 %v1726, %v1728
        %v1730 = vrot.slane %v1708, %v1729
        %v1732 = vunpack.c.l.s4 1966171168
        %v1733 = vunpack.c.0.s8 %v1732
        %v1734 = vlaneseq
        %v1735 = vshrl.u32 %v1734, 7
        %v1736 = vsub.s32 %v1733, %v1735
        %v1737 = vrot.slane %v1709, %v1736
        %v1738 = vcombine.low %v1716, %v1723
        %v1739 = vcombine.low %v1730, %v1737
        %v1741 = vunpack.c.l.s4 1966171168
        %v1742 = vunpack.c.0.s8 %v1741
        %v1743 = vlaneseq
        %v1744 = vshrl.u32 %v1743, 7
        %v1745 = vsub.s32 %v1742, %v1744
        %v1746 = vrot.slane %v1738, %v1745
        %v1748 = vunpack.c.l.s4 1966171168
        %v1749 = vunpack.c.0.s8 %v1748
        %v1750 = vlaneseq
        %v1751 = vshrl.u32 %v1750, 7
        %v1752 = vsub.s32 %v1749, %v1751
        %v1753 = vrot.slane %v1739, %v1752
        %v1754 = vcombine.low %v1746, %v1753
        %v1755 = vcombine.low %v1516, %v1517
        %v1756 = vcombine.low %v1518, %v1519
        %v1757 = vcombine.low %v1520, %v1521
        %v1758 = vcombine.low %v1522, %v1523
        %v1760 = vunpack.c.l.s4 1966171168
        %v1761 = vunpack.c.0.s8 %v1760
        %v1762 = vlaneseq
        %v1763 = vshrl.u32 %v1762, 7
        %v1764 = vsub.s32 %v1761, %v1763
        %v1765 = vrot.slane %v1755, %v1764
        %v1767 = vunpack.c.l.s4 1966171168
        %v1768 = vunpack.c.0.s8 %v1767
        %v1769 = vlaneseq
        %v1770 = vshrl.u32 %v1769, 7
        %v1771 = vsub.s32 %v1768, %v1770
        %v1772 = vrot.slane %v1756, %v1771
        %v1774 = vunpack.c.l.s4 1966171168
        %v1775 = vunpack.c.0.s8 %v1774
        %v1776 = vlaneseq
        %v1777 = vshrl.u32 %v1776, 7
        %v1778 = vsub.s32 %v1775, %v1777
        %v1779 = vrot.slane %v1757, %v1778
        %v1781 = vunpack.c.l.s4 1966171168
        %v1782 = vunpack.c.0.s8 %v1781
        %v1783 = vlaneseq
        %v1784 = vshrl.u32 %v1783, 7
        %v1785 = vsub.s32 %v1782, %v1784
        %v1786 = vrot.slane %v1758, %v1785
        %v1787 = vcombine.low %v1765, %v1772
        %v1788 = vcombine.low %v1779, %v1786
        %v1790 = vunpack.c.l.s4 1966171168
        %v1791 = vunpack.c.0.s8 %v1790
        %v1792 = vlaneseq
        %v1793 = vshrl.u32 %v1792, 7
        %v1794 = vsub.s32 %v1791, %v1793
        %v1795 = vrot.slane %v1787, %v1794
        %v1797 = vunpack.c.l.s4 1966171168
        %v1798 = vunpack.c.0.s8 %v1797
        %v1799 = vlaneseq
        %v1800 = vshrl.u32 %v1799, 7
        %v1801 = vsub.s32 %v1798, %v1800
        %v1802 = vrot.slane %v1788, %v1801
        %v1803 = vcombine.low %v1795, %v1802
        %v1804 = vcombine.low %v1524, %v1525
        %v1805 = vcombine.low %v1526, %v1527
        %v1806 = vcombine.low %v1528, %v1529
        %v1807 = vcombine.low %v1530, %v1531
        %v1809 = vunpack.c.l.s4 1966171168
        %v1810 = vunpack.c.0.s8 %v1809
        %v1811 = vlaneseq
        %v1812 = vshrl.u32 %v1811, 7
        %v1813 = vsub.s32 %v1810, %v1812
        %v1814 = vrot.slane %v1804, %v1813
        %v1816 = vunpack.c.l.s4 1966171168
        %v1817 = vunpack.c.0.s8 %v1816
        %v1818 = vlaneseq
        %v1819 = vshrl.u32 %v1818, 7
        %v1820 = vsub.s32 %v1817, %v1819
        %v1821 = vrot.slane %v1805, %v1820
        %v1823 = vunpack.c.l.s4 1966171168
        %v1824 = vunpack.c.0.s8 %v1823
        %v1825 = vlaneseq
        %v1826 = vshrl.u32 %v1825, 7
        %v1827 = vsub.s32 %v1824, %v1826
        %v1828 = vrot.slane %v1806, %v1827
        %v1830 = vunpack.c.l.s4 1966171168
        %v1831 = vunpack.c.0.s8 %v1830
        %v1832 = vlaneseq
        %v1833 = vshrl.u32 %v1832, 7
        %v1834 = vsub.s32 %v1831, %v1833
        %v1835 = vrot.slane %v1807, %v1834
        %v1836 = vcombine.low %v1814, %v1821
        %v1837 = vcombine.low %v1828, %v1835
        %v1839 = vunpack.c.l.s4 1966171168
        %v1840 = vunpack.c.0.s8 %v1839
        %v1841 = vlaneseq
        %v1842 = vshrl.u32 %v1841, 7
        %v1843 = vsub.s32 %v1840, %v1842
        %v1844 = vrot.slane %v1836, %v1843
        %v1846 = vunpack.c.l.s4 1966171168
        %v1847 = vunpack.c.0.s8 %v1846
        %v1848 = vlaneseq
        %v1849 = vshrl.u32 %v1848, 7
        %v1850 = vsub.s32 %v1847, %v1849
        %v1851 = vrot.slane %v1837, %v1850
        %v1852 = vcombine.low %v1844, %v1851
        %v1853 = vcombine.low %v1532, %v1533
        %v1854 = vcombine.low %v1534, %v1535
        %v1855 = vcombine.low %v1536, %v1537
        %v1856 = vcombine.low %v1538, %v1539
        %v1858 = vunpack.c.l.s4 1966171168
        %v1859 = vunpack.c.0.s8 %v1858
        %v1860 = vlaneseq
        %v1861 = vshrl.u32 %v1860, 7
        %v1862 = vsub.s32 %v1859, %v1861
        %v1863 = vrot.slane %v1853, %v1862
        %v1865 = vunpack.c.l.s4 1966171168
        %v1866 = vunpack.c.0.s8 %v1865
        %v1867 = vlaneseq
        %v1868 = vshrl.u32 %v1867, 7
        %v1869 = vsub.s32 %v1866, %v1868
        %v1870 = vrot.slane %v1854, %v1869
        %v1872 = vunpack.c.l.s4 1966171168
        %v1873 = vunpack.c.0.s8 %v1872
        %v1874 = vlaneseq
        %v1875 = vshrl.u32 %v1874, 7
        %v1876 = vsub.s32 %v1873, %v1875
        %v1877 = vrot.slane %v1855, %v1876
        %v1879 = vunpack.c.l.s4 1966171168
        %v1880 = vunpack.c.0.s8 %v1879
        %v1881 = vlaneseq
        %v1882 = vshrl.u32 %v1881, 7
        %v1883 = vsub.s32 %v1880, %v1882
        %v1884 = vrot.slane %v1856, %v1883
        %v1885 = vcombine.low %v1863, %v1870
        %v1886 = vcombine.low %v1877, %v1884
        %v1888 = vunpack.c.l.s4 1966171168
        %v1889 = vunpack.c.0.s8 %v1888
        %v1890 = vlaneseq
        %v1891 = vshrl.u32 %v1890, 7
        %v1892 = vsub.s32 %v1889, %v1891
        %v1893 = vrot.slane %v1885, %v1892
        %v1895 = vunpack.c.l.s4 1966171168
        %v1896 = vunpack.c.0.s8 %v1895
        %v1897 = vlaneseq
        %v1898 = vshrl.u32 %v1897, 7
        %v1899 = vsub.s32 %v1896, %v1898
        %v1900 = vrot.slane %v1886, %v1899
        %v1901 = vcombine.low %v1893, %v1900
        %v1902 = vcombine.low %v1540, %v1541
        %v1903 = vcombine.low %v1542, %v1543
        %v1904 = vcombine.low %v1544, %v1545
        %v1905 = vcombine.low %v1546, %v1547
        %v1907 = vunpack.c.l.s4 1966171168
        %v1908 = vunpack.c.0.s8 %v1907
        %v1909 = vlaneseq
        %v1910 = vshrl.u32 %v1909, 7
        %v1911 = vsub.s32 %v1908, %v1910
        %v1912 = vrot.slane %v1902, %v1911
        %v1914 = vunpack.c.l.s4 1966171168
        %v1915 = vunpack.c.0.s8 %v1914
        %v1916 = vlaneseq
        %v1917 = vshrl.u32 %v1916, 7
        %v1918 = vsub.s32 %v1915, %v1917
        %v1919 = vrot.slane %v1903, %v1918
        %v1921 = vunpack.c.l.s4 1966171168
        %v1922 = vunpack.c.0.s8 %v1921
        %v1923 = vlaneseq
        %v1924 = vshrl.u32 %v1923, 7
        %v1925 = vsub.s32 %v1922, %v1924
        %v1926 = vrot.slane %v1904, %v1925
        %v1928 = vunpack.c.l.s4 1966171168
        %v1929 = vunpack.c.0.s8 %v1928
        %v1930 = vlaneseq
        %v1931 = vshrl.u32 %v1930, 7
        %v1932 = vsub.s32 %v1929, %v1931
        %v1933 = vrot.slane %v1905, %v1932
        %v1934 = vcombine.low %v1912, %v1919
        %v1935 = vcombine.low %v1926, %v1933
        %v1937 = vunpack.c.l.s4 1966171168
        %v1938 = vunpack.c.0.s8 %v1937
        %v1939 = vlaneseq
        %v1940 = vshrl.u32 %v1939, 7
        %v1941 = vsub.s32 %v1938, %v1940
        %v1942 = vrot.slane %v1934, %v1941
        %v1944 = vunpack.c.l.s4 1966171168
        %v1945 = vunpack.c.0.s8 %v1944
        %v1946 = vlaneseq
        %v1947 = vshrl.u32 %v1946, 7
        %v1948 = vsub.s32 %v1945, %v1947
        %v1949 = vrot.slane %v1935, %v1948
        %v1950 = vcombine.low %v1942, %v1949
        %v1951 = vcombine.low %v1548, %v1549
        %v1952 = vcombine.low %v1550, %v1551
        %v1953 = vcombine.low %v1552, %v1553
        %v1954 = vcombine.low %v1554, %v1555
        %v1956 = vunpack.c.l.s4 1966171168
        %v1957 = vunpack.c.0.s8 %v1956
        %v1958 = vlaneseq
        %v1959 = vshrl.u32 %v1958, 7
        %v1960 = vsub.s32 %v1957, %v1959
        %v1961 = vrot.slane %v1951, %v1960
        %v1963 = vunpack.c.l.s4 1966171168
        %v1964 = vunpack.c.0.s8 %v1963
        %v1965 = vlaneseq
        %v1966 = vshrl.u32 %v1965, 7
        %v1967 = vsub.s32 %v1964, %v1966
        %v1968 = vrot.slane %v1952, %v1967
        %v1970 = vunpack.c.l.s4 1966171168
        %v1971 = vunpack.c.0.s8 %v1970
        %v1972 = vlaneseq
        %v1973 = vshrl.u32 %v1972, 7
        %v1974 = vsub.s32 %v1971, %v1973
        %v1975 = vrot.slane %v1953, %v1974
        %v1977 = vunpack.c.l.s4 1966171168
        %v1978 = vunpack.c.0.s8 %v1977
        %v1979 = vlaneseq
        %v1980 = vshrl.u32 %v1979, 7
        %v1981 = vsub.s32 %v1978, %v1980
        %v1982 = vrot.slane %v1954, %v1981
        %v1983 = vcombine.low %v1961, %v1968
        %v1984 = vcombine.low %v1975, %v1982
        %v1986 = vunpack.c.l.s4 1966171168
        %v1987 = vunpack.c.0.s8 %v1986
        %v1988 = vlaneseq
        %v1989 = vshrl.u32 %v1988, 7
        %v1990 = vsub.s32 %v1987, %v1989
        %v1991 = vrot.slane %v1983, %v1990
        %v1993 = vunpack.c.l.s4 1966171168
        %v1994 = vunpack.c.0.s8 %v1993
        %v1995 = vlaneseq
        %v1996 = vshrl.u32 %v1995, 7
        %v1997 = vsub.s32 %v1994, %v1996
        %v1998 = vrot.slane %v1984, %v1997
        %v1999 = vcombine.low %v1991, %v1998
        %v2000 = vcombine.low %v1556, %v1557
        %v2002 = vunpack.c.l.s4 1966171168
        %v2003 = vunpack.c.0.s8 %v2002
        %v2004 = vlaneseq
        %v2005 = vshrl.u32 %v2004, 7
        %v2006 = vsub.s32 %v2003, %v2005
        %v2007 = vrot.slane %v2000, %v2006
        %v2009 = vunpack.c.l.s4 1966171168
        %v2010 = vunpack.c.0.s8 %v2009
        %v2011 = vlaneseq
        %v2012 = vshrl.u32 %v2011, 7
        %v2013 = vsub.s32 %v2010, %v2012
        %v2014 = vrot.slane %v1558, %v2013
        %v2015 = vcombine.low %v2007, %v2014
        %v2017 = vunpack.c.l.s4 1966171168
        %v2018 = vunpack.c.0.s8 %v2017
        %v2019 = vlaneseq
        %v2020 = vshrl.u32 %v2019, 7
        %v2021 = vsub.s32 %v2018, %v2020
        %v2022 = vrot.slane %v2015, %v2021
        %v2028 = vunpack.c.l.b16 %v1479
        %v2029 = vunpack.c.l.b16 %v1480
        %v2030 = vunpack.c.l.b16 %v1481
        %v2031 = vunpack.c.l.b16 %v1482
        %v2032 = vunpack.c.l.b16 %v1483
        %v2033 = vpack.c.b16 %v2029, %v2028
        %v2034 = vpack.c.b16 %v2031, %v2030
        %v2035 = vpack.c.b16 %v2032, %v2032
        %vm2038 = vcmask 293888
        %v2040 = vsel %vm2038, %v1607, 0
        %v2043 = vsel %vm2038, %v1656, 0
        %v2046 = vsel %vm2038, %v1705, 0
        %v2049 = vsel %vm2038, %v1754, 0
        %v2052 = vsel %vm2038, %v1803, 0
        %v2055 = vsel %vm2038, %v1852, 0
        %v2058 = vsel %vm2038, %v1901, 0
        %v2061 = vsel %vm2038, %v1950, 0
        %v2064 = vsel %vm2038, %v1999, 0
        %v2067 = vsel %vm2038, %v2022, 0
        %vm2069 = vcmask 1041408
        %v2071 = vsel %vm2069, %v2035, 0
        %2073 = vmatprep.subr.bf16.mxu0 0
        %2074 = vmatpush1.bf16.msra.mxu0 %v2033
        %2075 = vmatprep.subr.bf16.mxu0 0
        %2076 = vmatpush1.bf16.msra.mxu0 %v2034
        %2077 = vmatprep.subr.bf16.mxu0 0
        %2078 = vmatpush1.bf16.msra.mxu0 %v2071
        %2079 = vmatprep.subr.bf16.mxu0 0
        %2080 = vmatpush1.bf16.msra.mxu0 0
        %2081 = vmatprep.subr.bf16.mxu0 0
        %2082 = vmatpush1.bf16.msra.mxu0 0
        %2083 = vmatprep.subr.bf16.mxu0 0
        %2084 = vmatpush1.bf16.msra.mxu0 0
        %2085 = vmatprep.subr.bf16.mxu0 0
        %2086 = vmatpush1.bf16.msra.mxu0 0
        %2087 = vmatprep.subr.bf16.mxu0 0
        %2088 = vmatpush1.bf16.msra.mxu0 0
        %2089 = vmatprep.subr.bf16.mxu0 0
        %2090 = vmatpush1.bf16.msra.mxu0 0
        %2091 = vmatprep.subr.bf16.mxu0 0
        %2092 = vmatpush1.bf16.msra.mxu0 0
        %2093 = vmatprep.subr.bf16.mxu0 0
        %2094 = vmatpush1.bf16.msra.mxu0 0
        %2095 = vmatprep.subr.bf16.mxu0 0
        %2096 = vmatpush1.bf16.msra.mxu0 0
        %2097 = vmatprep.subr.bf16.mxu0 0
        %2098 = vmatpush1.bf16.msra.mxu0 0
        %2099 = vmatprep.subr.bf16.mxu0 0
        %2100 = vmatpush1.bf16.msra.mxu0 0
        %2101 = vmatprep.subr.bf16.mxu0 0
        %2102 = vmatpush1.bf16.msra.mxu0 0
        %2103 = vmatprep.subr.bf16.mxu0 0
        %2104 = vmatpush1.bf16.msra.mxu0 0
        %2105 = vmatprep.mubr.bf16.mxu0 0
        %2106 = vmatmul.mubr.bf16.gmra.mrb[0].mxu0 %v2040
        %v2107 = vpop.f32.mrb[0].mxu0
        %v2108 = vadd.f32 0.0, %v2107
        %v2109 = vpop.f32.mrb[0].mxu0
        %v2110 = vpop.f32.mrb[0].mxu0
        %v2111 = vadd.f32 0.0, %v2110
        %v2112 = vpop.f32.mrb[0].mxu0
        %2113 = vmatprep.mubr.bf16.mxu0 0
        %2114 = vmatmul.mubr.bf16.gmra.mrb[0].mxu0 %v2043
        %v2115 = vpop.f32.mrb[0].mxu0
        %v2116 = vadd.f32 0.0, %v2115
        %v2117 = vpop.f32.mrb[0].mxu0
        %v2118 = vpop.f32.mrb[0].mxu0
        %v2119 = vadd.f32 0.0, %v2118
        %v2120 = vpop.f32.mrb[0].mxu0
        %2121 = vmatprep.mubr.bf16.mxu0 0
        %2122 = vmatmul.mubr.bf16.gmra.mrb[0].mxu0 %v2046
        %v2123 = vpop.f32.mrb[0].mxu0
        %v2124 = vadd.f32 0.0, %v2123
        %v2125 = vpop.f32.mrb[0].mxu0
        %v2126 = vpop.f32.mrb[0].mxu0
        %v2127 = vadd.f32 0.0, %v2126
        %v2128 = vpop.f32.mrb[0].mxu0
        %2129 = vmatprep.mubr.bf16.mxu0 0
        %2130 = vmatmul.mubr.bf16.gmra.mrb[0].mxu0 %v2049
        %v2131 = vpop.f32.mrb[0].mxu0
        %v2132 = vadd.f32 0.0, %v2131
        %v2133 = vpop.f32.mrb[0].mxu0
        %v2134 = vpop.f32.mrb[0].mxu0
        %v2135 = vadd.f32 0.0, %v2134
        %v2136 = vpop.f32.mrb[0].mxu0
        %2137 = vmatprep.mubr.bf16.mxu0 0
        %2138 = vmatmul.mubr.bf16.gmra.mrb[0].mxu0 %v2052
        %v2139 = vpop.f32.mrb[0].mxu0
        %v2140 = vadd.f32 0.0, %v2139
        %v2141 = vpop.f32.mrb[0].mxu0
        %v2142 = vpop.f32.mrb[0].mxu0
        %v2143 = vadd.f32 0.0, %v2142
        %v2144 = vpop.f32.mrb[0].mxu0
        %2145 = vmatprep.mubr.bf16.mxu0 0
        %2146 = vmatmul.mubr.bf16.gmra.mrb[0].mxu0 %v2055
        %v2147 = vpop.f32.mrb[0].mxu0
        %v2148 = vadd.f32 0.0, %v2147
        %v2149 = vpop.f32.mrb[0].mxu0
        %v2150 = vpop.f32.mrb[0].mxu0
        %v2151 = vadd.f32 0.0, %v2150
        %v2152 = vpop.f32.mrb[0].mxu0
        %2153 = vmatprep.mubr.bf16.mxu0 0
        %2154 = vmatmul.mubr.bf16.gmra.mrb[0].mxu0 %v2058
        %v2155 = vpop.f32.mrb[0].mxu0
        %v2156 = vadd.f32 0.0, %v2155
        %v2157 = vpop.f32.mrb[0].mxu0
        %v2158 = vpop.f32.mrb[0].mxu0
        %v2159 = vadd.f32 0.0, %v2158
        %v2160 = vpop.f32.mrb[0].mxu0
        %2161 = vmatprep.mubr.bf16.mxu0 0
        %2162 = vmatmul.mubr.bf16.gmra.mrb[0].mxu0 %v2061
        %v2163 = vpop.f32.mrb[0].mxu0
        %v2164 = vadd.f32 0.0, %v2163
        %v2165 = vpop.f32.mrb[0].mxu0
        %v2166 = vpop.f32.mrb[0].mxu0
        %v2167 = vadd.f32 0.0, %v2166
        %v2168 = vpop.f32.mrb[0].mxu0
        %2169 = vmatprep.mubr.bf16.mxu0 0
        %2170 = vmatmul.mubr.bf16.gmra.mrb[0].mxu0 %v2064
        %v2171 = vpop.f32.mrb[0].mxu0
        %v2172 = vadd.f32 0.0, %v2171
        %v2173 = vpop.f32.mrb[0].mxu0
        %v2174 = vpop.f32.mrb[0].mxu0
        %v2175 = vadd.f32 0.0, %v2174
        %v2176 = vpop.f32.mrb[0].mxu0
        %2177 = vmatprep.mubr.bf16.mxu0 0
        %2178 = vmatmul.mubr.bf16.gmra.mrb[0].mxu0 %v2067
        %v2179 = vpop.f32.mrb[0].mxu0
        %v2180 = vadd.f32 0.0, %v2179
        %v2181 = vpop.f32.mrb[0].mxu0
        %v2182 = vpop.f32.mrb[0].mxu0
        %v2183 = vpop.f32.mrb[0].mxu0
        %2184 = vdwg.mxu0
        %v2185 = vld [vmem:[%s2] sm:$0x1]
        %v2187 = vlaneseq
        %v2188 = vshrl.u32 %v2187, 7
        %v2189 = vsub.s32 0, %v2188
        %v2190 = vrot.slane %v2185, %v2189
        %v2192 = vmul.f32 %v2108, %v2190
        %v2193 = vmul.f32 %v2111, %v2190
        %v2194 = vmul.f32 %v2116, %v2190
        %v2195 = vmul.f32 %v2119, %v2190
        %v2196 = vmul.f32 %v2124, %v2190
        %v2197 = vmul.f32 %v2127, %v2190
        %v2198 = vmul.f32 %v2132, %v2190
        %v2199 = vmul.f32 %v2135, %v2190
        %v2200 = vmul.f32 %v2140, %v2190
        %v2201 = vmul.f32 %v2143, %v2190
        %v2202 = vmul.f32 %v2148, %v2190
        %v2203 = vmul.f32 %v2151, %v2190
        %v2204 = vmul.f32 %v2156, %v2190
        %v2205 = vmul.f32 %v2159, %v2190
        %v2206 = vmul.f32 %v2164, %v2190
        %v2207 = vmul.f32 %v2167, %v2190
        %v2208 = vmul.f32 %v2172, %v2190
        %v2209 = vmul.f32 %v2175, %v2190
        %v2210 = vmul.f32 %v2180, %v2190
        %v2211 = vld [vmem:[%s3] sm:$0x1]
        %v2213 = vlaneseq
        %v2214 = vshrl.u32 %v2213, 7
        %v2215 = vsub.s32 0, %v2214
        %v2216 = vrot.slane %v2211, %v2215
        %v2218 = vadd.f32 %v2192, %v2216
        %v2219 = vadd.f32 %v2193, %v2216
        %v2220 = vadd.f32 %v2194, %v2216
        %v2221 = vadd.f32 %v2195, %v2216
        %v2222 = vadd.f32 %v2196, %v2216
        %v2223 = vadd.f32 %v2197, %v2216
        %v2224 = vadd.f32 %v2198, %v2216
        %v2225 = vadd.f32 %v2199, %v2216
        %v2226 = vadd.f32 %v2200, %v2216
        %v2227 = vadd.f32 %v2201, %v2216
        %v2228 = vadd.f32 %v2202, %v2216
        %v2229 = vadd.f32 %v2203, %v2216
        %v2230 = vadd.f32 %v2204, %v2216
        %v2231 = vadd.f32 %v2205, %v2216
        %v2232 = vadd.f32 %v2206, %v2216
        %v2233 = vadd.f32 %v2207, %v2216
        %v2234 = vadd.f32 %v2208, %v2216
        %v2235 = vadd.f32 %v2209, %v2216
        %v2236 = vadd.f32 %v2210, %v2216
        %v2237 = vmax.f32 %v2218, 0.0
        %v2238 = vmax.f32 %v2219, 0.0
        %v2239 = vmax.f32 %v2220, 0.0
        %v2240 = vmax.f32 %v2221, 0.0
        %v2241 = vmax.f32 %v2222, 0.0
        %v2242 = vmax.f32 %v2223, 0.0
        %v2243 = vmax.f32 %v2224, 0.0
        %v2244 = vmax.f32 %v2225, 0.0
        %v2245 = vmax.f32 %v2226, 0.0
        %v2246 = vmax.f32 %v2227, 0.0
        %v2247 = vmax.f32 %v2228, 0.0
        %v2248 = vmax.f32 %v2229, 0.0
        %v2249 = vmax.f32 %v2230, 0.0
        %v2250 = vmax.f32 %v2231, 0.0
        %v2251 = vmax.f32 %v2232, 0.0
        %v2252 = vmax.f32 %v2233, 0.0
        %v2253 = vmax.f32 %v2234, 0.0
        %v2254 = vmax.f32 %v2235, 0.0
        %v2255 = vmax.f32 %v2236, 0.0
        %v2275 = vcombine.high %v2237, %v2237
        %v2277 = vunpack.c.l.s4 1966171168
        %v2278 = vunpack.c.0.s8 %v2277
        %v2279 = vlaneseq
        %v2280 = vshrl.u32 %v2279, 7
        %v2281 = vsub.s32 %v2278, %v2280
        %v2282 = vrot.slane %v2237, %v2281
        %v2284 = vunpack.c.l.s4 1966171168
        %v2285 = vunpack.c.0.s8 %v2284
        %v2286 = vlaneseq
        %v2287 = vshrl.u32 %v2286, 7
        %v2288 = vsub.s32 %v2285, %v2287
        %v2289 = vrot.slane %v2275, %v2288
        %v2290 = vcombine.high %v2282, %v2282
        %v2291 = vcombine.high %v2289, %v2289
        %v2293 = vunpack.c.l.s4 1966171168
        %v2294 = vunpack.c.0.s8 %v2293
        %v2295 = vlaneseq
        %v2296 = vshrl.u32 %v2295, 7
        %v2297 = vsub.s32 %v2294, %v2296
        %v2298 = vrot.slane %v2282, %v2297
        %v2300 = vunpack.c.l.s4 1966171168
        %v2301 = vunpack.c.0.s8 %v2300
        %v2302 = vlaneseq
        %v2303 = vshrl.u32 %v2302, 7
        %v2304 = vsub.s32 %v2301, %v2303
        %v2305 = vrot.slane %v2289, %v2304
        %v2307 = vunpack.c.l.s4 1966171168
        %v2308 = vunpack.c.0.s8 %v2307
        %v2309 = vlaneseq
        %v2310 = vshrl.u32 %v2309, 7
        %v2311 = vsub.s32 %v2308, %v2310
        %v2312 = vrot.slane %v2290, %v2311
        %v2314 = vunpack.c.l.s4 1966171168
        %v2315 = vunpack.c.0.s8 %v2314
        %v2316 = vlaneseq
        %v2317 = vshrl.u32 %v2316, 7
        %v2318 = vsub.s32 %v2315, %v2317
        %v2319 = vrot.slane %v2291, %v2318
        %v2320 = vcombine.high %v2298, %v2298
        %v2321 = vcombine.high %v2305, %v2305
        %v2322 = vcombine.high %v2312, %v2312
        %v2323 = vcombine.high %v2319, %v2319
        %v2324 = vcombine.high %v2238, %v2238
        %v2326 = vunpack.c.l.s4 1966171168
        %v2327 = vunpack.c.0.s8 %v2326
        %v2328 = vlaneseq
        %v2329 = vshrl.u32 %v2328, 7
        %v2330 = vsub.s32 %v2327, %v2329
        %v2331 = vrot.slane %v2238, %v2330
        %v2333 = vunpack.c.l.s4 1966171168
        %v2334 = vunpack.c.0.s8 %v2333
        %v2335 = vlaneseq
        %v2336 = vshrl.u32 %v2335, 7
        %v2337 = vsub.s32 %v2334, %v2336
        %v2338 = vrot.slane %v2324, %v2337
        %v2339 = vcombine.high %v2331, %v2331
        %v2340 = vcombine.high %v2338, %v2338
        %v2342 = vunpack.c.l.s4 1966171168
        %v2343 = vunpack.c.0.s8 %v2342
        %v2344 = vlaneseq
        %v2345 = vshrl.u32 %v2344, 7
        %v2346 = vsub.s32 %v2343, %v2345
        %v2347 = vrot.slane %v2331, %v2346
        %v2349 = vunpack.c.l.s4 1966171168
        %v2350 = vunpack.c.0.s8 %v2349
        %v2351 = vlaneseq
        %v2352 = vshrl.u32 %v2351, 7
        %v2353 = vsub.s32 %v2350, %v2352
        %v2354 = vrot.slane %v2338, %v2353
        %v2356 = vunpack.c.l.s4 1966171168
        %v2357 = vunpack.c.0.s8 %v2356
        %v2358 = vlaneseq
        %v2359 = vshrl.u32 %v2358, 7
        %v2360 = vsub.s32 %v2357, %v2359
        %v2361 = vrot.slane %v2339, %v2360
        %v2363 = vunpack.c.l.s4 1966171168
        %v2364 = vunpack.c.0.s8 %v2363
        %v2365 = vlaneseq
        %v2366 = vshrl.u32 %v2365, 7
        %v2367 = vsub.s32 %v2364, %v2366
        %v2368 = vrot.slane %v2340, %v2367
        %v2369 = vcombine.high %v2347, %v2347
        %v2370 = vcombine.high %v2354, %v2354
        %v2371 = vcombine.high %v2361, %v2361
        %v2372 = vcombine.high %v2368, %v2368
        %v2373 = vcombine.high %v2239, %v2239
        %v2375 = vunpack.c.l.s4 1966171168
        %v2376 = vunpack.c.0.s8 %v2375
        %v2377 = vlaneseq
        %v2378 = vshrl.u32 %v2377, 7
        %v2379 = vsub.s32 %v2376, %v2378
        %v2380 = vrot.slane %v2239, %v2379
        %v2382 = vunpack.c.l.s4 1966171168
        %v2383 = vunpack.c.0.s8 %v2382
        %v2384 = vlaneseq
        %v2385 = vshrl.u32 %v2384, 7
        %v2386 = vsub.s32 %v2383, %v2385
        %v2387 = vrot.slane %v2373, %v2386
        %v2388 = vcombine.high %v2380, %v2380
        %v2389 = vcombine.high %v2387, %v2387
        %v2391 = vunpack.c.l.s4 1966171168
        %v2392 = vunpack.c.0.s8 %v2391
        %v2393 = vlaneseq
        %v2394 = vshrl.u32 %v2393, 7
        %v2395 = vsub.s32 %v2392, %v2394
        %v2396 = vrot.slane %v2380, %v2395
        %v2398 = vunpack.c.l.s4 1966171168
        %v2399 = vunpack.c.0.s8 %v2398
        %v2400 = vlaneseq
        %v2401 = vshrl.u32 %v2400, 7
        %v2402 = vsub.s32 %v2399, %v2401
        %v2403 = vrot.slane %v2387, %v2402
        %v2405 = vunpack.c.l.s4 1966171168
        %v2406 = vunpack.c.0.s8 %v2405
        %v2407 = vlaneseq
        %v2408 = vshrl.u32 %v2407, 7
        %v2409 = vsub.s32 %v2406, %v2408
        %v2410 = vrot.slane %v2388, %v2409
        %v2412 = vunpack.c.l.s4 1966171168
        %v2413 = vunpack.c.0.s8 %v2412
        %v2414 = vlaneseq
        %v2415 = vshrl.u32 %v2414, 7
        %v2416 = vsub.s32 %v2413, %v2415
        %v2417 = vrot.slane %v2389, %v2416
        %v2418 = vcombine.high %v2396, %v2396
        %v2419 = vcombine.high %v2403, %v2403
        %v2420 = vcombine.high %v2410, %v2410
        %v2421 = vcombine.high %v2417, %v2417
        %v2422 = vcombine.high %v2240, %v2240
        %v2424 = vunpack.c.l.s4 1966171168
        %v2425 = vunpack.c.0.s8 %v2424
        %v2426 = vlaneseq
        %v2427 = vshrl.u32 %v2426, 7
        %v2428 = vsub.s32 %v2425, %v2427
        %v2429 = vrot.slane %v2240, %v2428
        %v2431 = vunpack.c.l.s4 1966171168
        %v2432 = vunpack.c.0.s8 %v2431
        %v2433 = vlaneseq
        %v2434 = vshrl.u32 %v2433, 7
        %v2435 = vsub.s32 %v2432, %v2434
        %v2436 = vrot.slane %v2422, %v2435
        %v2437 = vcombine.high %v2429, %v2429
        %v2438 = vcombine.high %v2436, %v2436
        %v2440 = vunpack.c.l.s4 1966171168
        %v2441 = vunpack.c.0.s8 %v2440
        %v2442 = vlaneseq
        %v2443 = vshrl.u32 %v2442, 7
        %v2444 = vsub.s32 %v2441, %v2443
        %v2445 = vrot.slane %v2429, %v2444
        %v2447 = vunpack.c.l.s4 1966171168
        %v2448 = vunpack.c.0.s8 %v2447
        %v2449 = vlaneseq
        %v2450 = vshrl.u32 %v2449, 7
        %v2451 = vsub.s32 %v2448, %v2450
        %v2452 = vrot.slane %v2436, %v2451
        %v2454 = vunpack.c.l.s4 1966171168
        %v2455 = vunpack.c.0.s8 %v2454
        %v2456 = vlaneseq
        %v2457 = vshrl.u32 %v2456, 7
        %v2458 = vsub.s32 %v2455, %v2457
        %v2459 = vrot.slane %v2437, %v2458
        %v2461 = vunpack.c.l.s4 1966171168
        %v2462 = vunpack.c.0.s8 %v2461
        %v2463 = vlaneseq
        %v2464 = vshrl.u32 %v2463, 7
        %v2465 = vsub.s32 %v2462, %v2464
        %v2466 = vrot.slane %v2438, %v2465
        %v2467 = vcombine.high %v2445, %v2445
        %v2468 = vcombine.high %v2452, %v2452
        %v2469 = vcombine.high %v2459, %v2459
        %v2470 = vcombine.high %v2466, %v2466
        %v2471 = vcombine.high %v2241, %v2241
        %v2473 = vunpack.c.l.s4 1966171168
        %v2474 = vunpack.c.0.s8 %v2473
        %v2475 = vlaneseq
        %v2476 = vshrl.u32 %v2475, 7
        %v2477 = vsub.s32 %v2474, %v2476
        %v2478 = vrot.slane %v2241, %v2477
        %v2480 = vunpack.c.l.s4 1966171168
        %v2481 = vunpack.c.0.s8 %v2480
        %v2482 = vlaneseq
        %v2483 = vshrl.u32 %v2482, 7
        %v2484 = vsub.s32 %v2481, %v2483
        %v2485 = vrot.slane %v2471, %v2484
        %v2486 = vcombine.high %v2478, %v2478
        %v2487 = vcombine.high %v2485, %v2485
        %v2489 = vunpack.c.l.s4 1966171168
        %v2490 = vunpack.c.0.s8 %v2489
        %v2491 = vlaneseq
        %v2492 = vshrl.u32 %v2491, 7
        %v2493 = vsub.s32 %v2490, %v2492
        %v2494 = vrot.slane %v2478, %v2493
        %v2496 = vunpack.c.l.s4 1966171168
        %v2497 = vunpack.c.0.s8 %v2496
        %v2498 = vlaneseq
        %v2499 = vshrl.u32 %v2498, 7
        %v2500 = vsub.s32 %v2497, %v2499
        %v2501 = vrot.slane %v2485, %v2500
        %v2503 = vunpack.c.l.s4 1966171168
        %v2504 = vunpack.c.0.s8 %v2503
        %v2505 = vlaneseq
        %v2506 = vshrl.u32 %v2505, 7
        %v2507 = vsub.s32 %v2504, %v2506
        %v2508 = vrot.slane %v2486, %v2507
        %v2510 = vunpack.c.l.s4 1966171168
        %v2511 = vunpack.c.0.s8 %v2510
        %v2512 = vlaneseq
        %v2513 = vshrl.u32 %v2512, 7
        %v2514 = vsub.s32 %v2511, %v2513
        %v2515 = vrot.slane %v2487, %v2514
        %v2516 = vcombine.high %v2494, %v2494
        %v2517 = vcombine.high %v2501, %v2501
        %v2518 = vcombine.high %v2508, %v2508
        %v2519 = vcombine.high %v2515, %v2515
        %v2520 = vcombine.high %v2242, %v2242
        %v2522 = vunpack.c.l.s4 1966171168
        %v2523 = vunpack.c.0.s8 %v2522
        %v2524 = vlaneseq
        %v2525 = vshrl.u32 %v2524, 7
        %v2526 = vsub.s32 %v2523, %v2525
        %v2527 = vrot.slane %v2242, %v2526
        %v2529 = vunpack.c.l.s4 1966171168
        %v2530 = vunpack.c.0.s8 %v2529
        %v2531 = vlaneseq
        %v2532 = vshrl.u32 %v2531, 7
        %v2533 = vsub.s32 %v2530, %v2532
        %v2534 = vrot.slane %v2520, %v2533
        %v2535 = vcombine.high %v2527, %v2527
        %v2536 = vcombine.high %v2534, %v2534
        %v2538 = vunpack.c.l.s4 1966171168
        %v2539 = vunpack.c.0.s8 %v2538
        %v2540 = vlaneseq
        %v2541 = vshrl.u32 %v2540, 7
        %v2542 = vsub.s32 %v2539, %v2541
        %v2543 = vrot.slane %v2527, %v2542
        %v2545 = vunpack.c.l.s4 1966171168
        %v2546 = vunpack.c.0.s8 %v2545
        %v2547 = vlaneseq
        %v2548 = vshrl.u32 %v2547, 7
        %v2549 = vsub.s32 %v2546, %v2548
        %v2550 = vrot.slane %v2534, %v2549
        %v2552 = vunpack.c.l.s4 1966171168
        %v2553 = vunpack.c.0.s8 %v2552
        %v2554 = vlaneseq
        %v2555 = vshrl.u32 %v2554, 7
        %v2556 = vsub.s32 %v2553, %v2555
        %v2557 = vrot.slane %v2535, %v2556
        %v2559 = vunpack.c.l.s4 1966171168
        %v2560 = vunpack.c.0.s8 %v2559
        %v2561 = vlaneseq
        %v2562 = vshrl.u32 %v2561, 7
        %v2563 = vsub.s32 %v2560, %v2562
        %v2564 = vrot.slane %v2536, %v2563
        %v2565 = vcombine.high %v2543, %v2543
        %v2566 = vcombine.high %v2550, %v2550
        %v2567 = vcombine.high %v2557, %v2557
        %v2568 = vcombine.high %v2564, %v2564
        %v2569 = vcombine.high %v2243, %v2243
        %v2571 = vunpack.c.l.s4 1966171168
        %v2572 = vunpack.c.0.s8 %v2571
        %v2573 = vlaneseq
        %v2574 = vshrl.u32 %v2573, 7
        %v2575 = vsub.s32 %v2572, %v2574
        %v2576 = vrot.slane %v2243, %v2575
        %v2578 = vunpack.c.l.s4 1966171168
        %v2579 = vunpack.c.0.s8 %v2578
        %v2580 = vlaneseq
        %v2581 = vshrl.u32 %v2580, 7
        %v2582 = vsub.s32 %v2579, %v2581
        %v2583 = vrot.slane %v2569, %v2582
        %v2584 = vcombine.high %v2576, %v2576
        %v2585 = vcombine.high %v2583, %v2583
        %v2587 = vunpack.c.l.s4 1966171168
        %v2588 = vunpack.c.0.s8 %v2587
        %v2589 = vlaneseq
        %v2590 = vshrl.u32 %v2589, 7
        %v2591 = vsub.s32 %v2588, %v2590
        %v2592 = vrot.slane %v2576, %v2591
        %v2594 = vunpack.c.l.s4 1966171168
        %v2595 = vunpack.c.0.s8 %v2594
        %v2596 = vlaneseq
        %v2597 = vshrl.u32 %v2596, 7
        %v2598 = vsub.s32 %v2595, %v2597
        %v2599 = vrot.slane %v2583, %v2598
        %v2601 = vunpack.c.l.s4 1966171168
        %v2602 = vunpack.c.0.s8 %v2601
        %v2603 = vlaneseq
        %v2604 = vshrl.u32 %v2603, 7
        %v2605 = vsub.s32 %v2602, %v2604
        %v2606 = vrot.slane %v2584, %v2605
        %v2608 = vunpack.c.l.s4 1966171168
        %v2609 = vunpack.c.0.s8 %v2608
        %v2610 = vlaneseq
        %v2611 = vshrl.u32 %v2610, 7
        %v2612 = vsub.s32 %v2609, %v2611
        %v2613 = vrot.slane %v2585, %v2612
        %v2614 = vcombine.high %v2592, %v2592
        %v2615 = vcombine.high %v2599, %v2599
        %v2616 = vcombine.high %v2606, %v2606
        %v2617 = vcombine.high %v2613, %v2613
        %v2618 = vcombine.high %v2244, %v2244
        %v2620 = vunpack.c.l.s4 1966171168
        %v2621 = vunpack.c.0.s8 %v2620
        %v2622 = vlaneseq
        %v2623 = vshrl.u32 %v2622, 7
        %v2624 = vsub.s32 %v2621, %v2623
        %v2625 = vrot.slane %v2244, %v2624
        %v2627 = vunpack.c.l.s4 1966171168
        %v2628 = vunpack.c.0.s8 %v2627
        %v2629 = vlaneseq
        %v2630 = vshrl.u32 %v2629, 7
        %v2631 = vsub.s32 %v2628, %v2630
        %v2632 = vrot.slane %v2618, %v2631
        %v2633 = vcombine.high %v2625, %v2625
        %v2634 = vcombine.high %v2632, %v2632
        %v2636 = vunpack.c.l.s4 1966171168
        %v2637 = vunpack.c.0.s8 %v2636
        %v2638 = vlaneseq
        %v2639 = vshrl.u32 %v2638, 7
        %v2640 = vsub.s32 %v2637, %v2639
        %v2641 = vrot.slane %v2625, %v2640
        %v2643 = vunpack.c.l.s4 1966171168
        %v2644 = vunpack.c.0.s8 %v2643
        %v2645 = vlaneseq
        %v2646 = vshrl.u32 %v2645, 7
        %v2647 = vsub.s32 %v2644, %v2646
        %v2648 = vrot.slane %v2632, %v2647
        %v2650 = vunpack.c.l.s4 1966171168
        %v2651 = vunpack.c.0.s8 %v2650
        %v2652 = vlaneseq
        %v2653 = vshrl.u32 %v2652, 7
        %v2654 = vsub.s32 %v2651, %v2653
        %v2655 = vrot.slane %v2633, %v2654
        %v2657 = vunpack.c.l.s4 1966171168
        %v2658 = vunpack.c.0.s8 %v2657
        %v2659 = vlaneseq
        %v2660 = vshrl.u32 %v2659, 7
        %v2661 = vsub.s32 %v2658, %v2660
        %v2662 = vrot.slane %v2634, %v2661
        %v2663 = vcombine.high %v2641, %v2641
        %v2664 = vcombine.high %v2648, %v2648
        %v2665 = vcombine.high %v2655, %v2655
        %v2666 = vcombine.high %v2662, %v2662
        %v2667 = vcombine.high %v2245, %v2245
        %v2669 = vunpack.c.l.s4 1966171168
        %v2670 = vunpack.c.0.s8 %v2669
        %v2671 = vlaneseq
        %v2672 = vshrl.u32 %v2671, 7
        %v2673 = vsub.s32 %v2670, %v2672
        %v2674 = vrot.slane %v2245, %v2673
        %v2676 = vunpack.c.l.s4 1966171168
        %v2677 = vunpack.c.0.s8 %v2676
        %v2678 = vlaneseq
        %v2679 = vshrl.u32 %v2678, 7
        %v2680 = vsub.s32 %v2677, %v2679
        %v2681 = vrot.slane %v2667, %v2680
        %v2682 = vcombine.high %v2674, %v2674
        %v2683 = vcombine.high %v2681, %v2681
        %v2685 = vunpack.c.l.s4 1966171168
        %v2686 = vunpack.c.0.s8 %v2685
        %v2687 = vlaneseq
        %v2688 = vshrl.u32 %v2687, 7
        %v2689 = vsub.s32 %v2686, %v2688
        %v2690 = vrot.slane %v2674, %v2689
        %v2692 = vunpack.c.l.s4 1966171168
        %v2693 = vunpack.c.0.s8 %v2692
        %v2694 = vlaneseq
        %v2695 = vshrl.u32 %v2694, 7
        %v2696 = vsub.s32 %v2693, %v2695
        %v2697 = vrot.slane %v2681, %v2696
        %v2699 = vunpack.c.l.s4 1966171168
        %v2700 = vunpack.c.0.s8 %v2699
        %v2701 = vlaneseq
        %v2702 = vshrl.u32 %v2701, 7
        %v2703 = vsub.s32 %v2700, %v2702
        %v2704 = vrot.slane %v2682, %v2703
        %v2706 = vunpack.c.l.s4 1966171168
        %v2707 = vunpack.c.0.s8 %v2706
        %v2708 = vlaneseq
        %v2709 = vshrl.u32 %v2708, 7
        %v2710 = vsub.s32 %v2707, %v2709
        %v2711 = vrot.slane %v2683, %v2710
        %v2712 = vcombine.high %v2690, %v2690
        %v2713 = vcombine.high %v2697, %v2697
        %v2714 = vcombine.high %v2704, %v2704
        %v2715 = vcombine.high %v2711, %v2711
        %v2716 = vcombine.high %v2246, %v2246
        %v2718 = vunpack.c.l.s4 1966171168
        %v2719 = vunpack.c.0.s8 %v2718
        %v2720 = vlaneseq
        %v2721 = vshrl.u32 %v2720, 7
        %v2722 = vsub.s32 %v2719, %v2721
        %v2723 = vrot.slane %v2246, %v2722
        %v2725 = vunpack.c.l.s4 1966171168
        %v2726 = vunpack.c.0.s8 %v2725
        %v2727 = vlaneseq
        %v2728 = vshrl.u32 %v2727, 7
        %v2729 = vsub.s32 %v2726, %v2728
        %v2730 = vrot.slane %v2716, %v2729
        %v2731 = vcombine.high %v2723, %v2723
        %v2732 = vcombine.high %v2730, %v2730
        %v2734 = vunpack.c.l.s4 1966171168
        %v2735 = vunpack.c.0.s8 %v2734
        %v2736 = vlaneseq
        %v2737 = vshrl.u32 %v2736, 7
        %v2738 = vsub.s32 %v2735, %v2737
        %v2739 = vrot.slane %v2723, %v2738
        %v2741 = vunpack.c.l.s4 1966171168
        %v2742 = vunpack.c.0.s8 %v2741
        %v2743 = vlaneseq
        %v2744 = vshrl.u32 %v2743, 7
        %v2745 = vsub.s32 %v2742, %v2744
        %v2746 = vrot.slane %v2730, %v2745
        %v2748 = vunpack.c.l.s4 1966171168
        %v2749 = vunpack.c.0.s8 %v2748
        %v2750 = vlaneseq
        %v2751 = vshrl.u32 %v2750, 7
        %v2752 = vsub.s32 %v2749, %v2751
        %v2753 = vrot.slane %v2731, %v2752
        %v2755 = vunpack.c.l.s4 1966171168
        %v2756 = vunpack.c.0.s8 %v2755
        %v2757 = vlaneseq
        %v2758 = vshrl.u32 %v2757, 7
        %v2759 = vsub.s32 %v2756, %v2758
        %v2760 = vrot.slane %v2732, %v2759
        %v2761 = vcombine.high %v2739, %v2739
        %v2762 = vcombine.high %v2746, %v2746
        %v2763 = vcombine.high %v2753, %v2753
        %v2764 = vcombine.high %v2760, %v2760
        %v2765 = vcombine.high %v2247, %v2247
        %v2767 = vunpack.c.l.s4 1966171168
        %v2768 = vunpack.c.0.s8 %v2767
        %v2769 = vlaneseq
        %v2770 = vshrl.u32 %v2769, 7
        %v2771 = vsub.s32 %v2768, %v2770
        %v2772 = vrot.slane %v2247, %v2771
        %v2774 = vunpack.c.l.s4 1966171168
        %v2775 = vunpack.c.0.s8 %v2774
        %v2776 = vlaneseq
        %v2777 = vshrl.u32 %v2776, 7
        %v2778 = vsub.s32 %v2775, %v2777
        %v2779 = vrot.slane %v2765, %v2778
        %v2780 = vcombine.high %v2772, %v2772
        %v2781 = vcombine.high %v2779, %v2779
        %v2783 = vunpack.c.l.s4 1966171168
        %v2784 = vunpack.c.0.s8 %v2783
        %v2785 = vlaneseq
        %v2786 = vshrl.u32 %v2785, 7
        %v2787 = vsub.s32 %v2784, %v2786
        %v2788 = vrot.slane %v2772, %v2787
        %v2790 = vunpack.c.l.s4 1966171168
        %v2791 = vunpack.c.0.s8 %v2790
        %v2792 = vlaneseq
        %v2793 = vshrl.u32 %v2792, 7
        %v2794 = vsub.s32 %v2791, %v2793
        %v2795 = vrot.slane %v2779, %v2794
        %v2797 = vunpack.c.l.s4 1966171168
        %v2798 = vunpack.c.0.s8 %v2797
        %v2799 = vlaneseq
        %v2800 = vshrl.u32 %v2799, 7
        %v2801 = vsub.s32 %v2798, %v2800
        %v2802 = vrot.slane %v2780, %v2801
        %v2804 = vunpack.c.l.s4 1966171168
        %v2805 = vunpack.c.0.s8 %v2804
        %v2806 = vlaneseq
        %v2807 = vshrl.u32 %v2806, 7
        %v2808 = vsub.s32 %v2805, %v2807
        %v2809 = vrot.slane %v2781, %v2808
        %v2810 = vcombine.high %v2788, %v2788
        %v2811 = vcombine.high %v2795, %v2795
        %v2812 = vcombine.high %v2802, %v2802
        %v2813 = vcombine.high %v2809, %v2809
        %v2814 = vcombine.high %v2248, %v2248
        %v2816 = vunpack.c.l.s4 1966171168
        %v2817 = vunpack.c.0.s8 %v2816
        %v2818 = vlaneseq
        %v2819 = vshrl.u32 %v2818, 7
        %v2820 = vsub.s32 %v2817, %v2819
        %v2821 = vrot.slane %v2248, %v2820
        %v2823 = vunpack.c.l.s4 1966171168
        %v2824 = vunpack.c.0.s8 %v2823
        %v2825 = vlaneseq
        %v2826 = vshrl.u32 %v2825, 7
        %v2827 = vsub.s32 %v2824, %v2826
        %v2828 = vrot.slane %v2814, %v2827
        %v2829 = vcombine.high %v2821, %v2821
        %v2830 = vcombine.high %v2828, %v2828
        %v2832 = vunpack.c.l.s4 1966171168
        %v2833 = vunpack.c.0.s8 %v2832
        %v2834 = vlaneseq
        %v2835 = vshrl.u32 %v2834, 7
        %v2836 = vsub.s32 %v2833, %v2835
        %v2837 = vrot.slane %v2821, %v2836
        %v2839 = vunpack.c.l.s4 1966171168
        %v2840 = vunpack.c.0.s8 %v2839
        %v2841 = vlaneseq
        %v2842 = vshrl.u32 %v2841, 7
        %v2843 = vsub.s32 %v2840, %v2842
        %v2844 = vrot.slane %v2828, %v2843
        %v2846 = vunpack.c.l.s4 1966171168
        %v2847 = vunpack.c.0.s8 %v2846
        %v2848 = vlaneseq
        %v2849 = vshrl.u32 %v2848, 7
        %v2850 = vsub.s32 %v2847, %v2849
        %v2851 = vrot.slane %v2829, %v2850
        %v2853 = vunpack.c.l.s4 1966171168
        %v2854 = vunpack.c.0.s8 %v2853
        %v2855 = vlaneseq
        %v2856 = vshrl.u32 %v2855, 7
        %v2857 = vsub.s32 %v2854, %v2856
        %v2858 = vrot.slane %v2830, %v2857
        %v2859 = vcombine.high %v2837, %v2837
        %v2860 = vcombine.high %v2844, %v2844
        %v2861 = vcombine.high %v2851, %v2851
        %v2862 = vcombine.high %v2858, %v2858
        %v2863 = vcombine.high %v2249, %v2249
        %v2865 = vunpack.c.l.s4 1966171168
        %v2866 = vunpack.c.0.s8 %v2865
        %v2867 = vlaneseq
        %v2868 = vshrl.u32 %v2867, 7
        %v2869 = vsub.s32 %v2866, %v2868
        %v2870 = vrot.slane %v2249, %v2869
        %v2872 = vunpack.c.l.s4 1966171168
        %v2873 = vunpack.c.0.s8 %v2872
        %v2874 = vlaneseq
        %v2875 = vshrl.u32 %v2874, 7
        %v2876 = vsub.s32 %v2873, %v2875
        %v2877 = vrot.slane %v2863, %v2876
        %v2878 = vcombine.high %v2870, %v2870
        %v2879 = vcombine.high %v2877, %v2877
        %v2881 = vunpack.c.l.s4 1966171168
        %v2882 = vunpack.c.0.s8 %v2881
        %v2883 = vlaneseq
        %v2884 = vshrl.u32 %v2883, 7
        %v2885 = vsub.s32 %v2882, %v2884
        %v2886 = vrot.slane %v2870, %v2885
        %v2888 = vunpack.c.l.s4 1966171168
        %v2889 = vunpack.c.0.s8 %v2888
        %v2890 = vlaneseq
        %v2891 = vshrl.u32 %v2890, 7
        %v2892 = vsub.s32 %v2889, %v2891
        %v2893 = vrot.slane %v2877, %v2892
        %v2895 = vunpack.c.l.s4 1966171168
        %v2896 = vunpack.c.0.s8 %v2895
        %v2897 = vlaneseq
        %v2898 = vshrl.u32 %v2897, 7
        %v2899 = vsub.s32 %v2896, %v2898
        %v2900 = vrot.slane %v2878, %v2899
        %v2902 = vunpack.c.l.s4 1966171168
        %v2903 = vunpack.c.0.s8 %v2902
        %v2904 = vlaneseq
        %v2905 = vshrl.u32 %v2904, 7
        %v2906 = vsub.s32 %v2903, %v2905
        %v2907 = vrot.slane %v2879, %v2906
        %v2908 = vcombine.high %v2886, %v2886
        %v2909 = vcombine.high %v2893, %v2893
        %v2910 = vcombine.high %v2900, %v2900
        %v2911 = vcombine.high %v2907, %v2907
        %v2912 = vcombine.high %v2250, %v2250
        %v2914 = vunpack.c.l.s4 1966171168
        %v2915 = vunpack.c.0.s8 %v2914
        %v2916 = vlaneseq
        %v2917 = vshrl.u32 %v2916, 7
        %v2918 = vsub.s32 %v2915, %v2917
        %v2919 = vrot.slane %v2250, %v2918
        %v2921 = vunpack.c.l.s4 1966171168
        %v2922 = vunpack.c.0.s8 %v2921
        %v2923 = vlaneseq
        %v2924 = vshrl.u32 %v2923, 7
        %v2925 = vsub.s32 %v2922, %v2924
        %v2926 = vrot.slane %v2912, %v2925
        %v2927 = vcombine.high %v2919, %v2919
        %v2928 = vcombine.high %v2926, %v2926
        %v2930 = vunpack.c.l.s4 1966171168
        %v2931 = vunpack.c.0.s8 %v2930
        %v2932 = vlaneseq
        %v2933 = vshrl.u32 %v2932, 7
        %v2934 = vsub.s32 %v2931, %v2933
        %v2935 = vrot.slane %v2919, %v2934
        %v2937 = vunpack.c.l.s4 1966171168
        %v2938 = vunpack.c.0.s8 %v2937
        %v2939 = vlaneseq
        %v2940 = vshrl.u32 %v2939, 7
        %v2941 = vsub.s32 %v2938, %v2940
        %v2942 = vrot.slane %v2926, %v2941
        %v2944 = vunpack.c.l.s4 1966171168
        %v2945 = vunpack.c.0.s8 %v2944
        %v2946 = vlaneseq
        %v2947 = vshrl.u32 %v2946, 7
        %v2948 = vsub.s32 %v2945, %v2947
        %v2949 = vrot.slane %v2927, %v2948
        %v2951 = vunpack.c.l.s4 1966171168
        %v2952 = vunpack.c.0.s8 %v2951
        %v2953 = vlaneseq
        %v2954 = vshrl.u32 %v2953, 7
        %v2955 = vsub.s32 %v2952, %v2954
        %v2956 = vrot.slane %v2928, %v2955
        %v2957 = vcombine.high %v2935, %v2935
        %v2958 = vcombine.high %v2942, %v2942
        %v2959 = vcombine.high %v2949, %v2949
        %v2960 = vcombine.high %v2956, %v2956
        %v2961 = vcombine.high %v2251, %v2251
        %v2963 = vunpack.c.l.s4 1966171168
        %v2964 = vunpack.c.0.s8 %v2963
        %v2965 = vlaneseq
        %v2966 = vshrl.u32 %v2965, 7
        %v2967 = vsub.s32 %v2964, %v2966
        %v2968 = vrot.slane %v2251, %v2967
        %v2970 = vunpack.c.l.s4 1966171168
        %v2971 = vunpack.c.0.s8 %v2970
        %v2972 = vlaneseq
        %v2973 = vshrl.u32 %v2972, 7
        %v2974 = vsub.s32 %v2971, %v2973
        %v2975 = vrot.slane %v2961, %v2974
        %v2976 = vcombine.high %v2968, %v2968
        %v2977 = vcombine.high %v2975, %v2975
        %v2979 = vunpack.c.l.s4 1966171168
        %v2980 = vunpack.c.0.s8 %v2979
        %v2981 = vlaneseq
        %v2982 = vshrl.u32 %v2981, 7
        %v2983 = vsub.s32 %v2980, %v2982
        %v2984 = vrot.slane %v2968, %v2983
        %v2986 = vunpack.c.l.s4 1966171168
        %v2987 = vunpack.c.0.s8 %v2986
        %v2988 = vlaneseq
        %v2989 = vshrl.u32 %v2988, 7
        %v2990 = vsub.s32 %v2987, %v2989
        %v2991 = vrot.slane %v2975, %v2990
        %v2993 = vunpack.c.l.s4 1966171168
        %v2994 = vunpack.c.0.s8 %v2993
        %v2995 = vlaneseq
        %v2996 = vshrl.u32 %v2995, 7
        %v2997 = vsub.s32 %v2994, %v2996
        %v2998 = vrot.slane %v2976, %v2997
        %v3000 = vunpack.c.l.s4 1966171168
        %v3001 = vunpack.c.0.s8 %v3000
        %v3002 = vlaneseq
        %v3003 = vshrl.u32 %v3002, 7
        %v3004 = vsub.s32 %v3001, %v3003
        %v3005 = vrot.slane %v2977, %v3004
        %v3006 = vcombine.high %v2984, %v2984
        %v3007 = vcombine.high %v2991, %v2991
        %v3008 = vcombine.high %v2998, %v2998
        %v3009 = vcombine.high %v3005, %v3005
        %v3010 = vcombine.high %v2252, %v2252
        %v3012 = vunpack.c.l.s4 1966171168
        %v3013 = vunpack.c.0.s8 %v3012
        %v3014 = vlaneseq
        %v3015 = vshrl.u32 %v3014, 7
        %v3016 = vsub.s32 %v3013, %v3015
        %v3017 = vrot.slane %v2252, %v3016
        %v3019 = vunpack.c.l.s4 1966171168
        %v3020 = vunpack.c.0.s8 %v3019
        %v3021 = vlaneseq
        %v3022 = vshrl.u32 %v3021, 7
        %v3023 = vsub.s32 %v3020, %v3022
        %v3024 = vrot.slane %v3010, %v3023
        %v3025 = vcombine.high %v3017, %v3017
        %v3026 = vcombine.high %v3024, %v3024
        %v3028 = vunpack.c.l.s4 1966171168
        %v3029 = vunpack.c.0.s8 %v3028
        %v3030 = vlaneseq
        %v3031 = vshrl.u32 %v3030, 7
        %v3032 = vsub.s32 %v3029, %v3031
        %v3033 = vrot.slane %v3017, %v3032
        %v3035 = vunpack.c.l.s4 1966171168
        %v3036 = vunpack.c.0.s8 %v3035
        %v3037 = vlaneseq
        %v3038 = vshrl.u32 %v3037, 7
        %v3039 = vsub.s32 %v3036, %v3038
        %v3040 = vrot.slane %v3024, %v3039
        %v3042 = vunpack.c.l.s4 1966171168
        %v3043 = vunpack.c.0.s8 %v3042
        %v3044 = vlaneseq
        %v3045 = vshrl.u32 %v3044, 7
        %v3046 = vsub.s32 %v3043, %v3045
        %v3047 = vrot.slane %v3025, %v3046
        %v3049 = vunpack.c.l.s4 1966171168
        %v3050 = vunpack.c.0.s8 %v3049
        %v3051 = vlaneseq
        %v3052 = vshrl.u32 %v3051, 7
        %v3053 = vsub.s32 %v3050, %v3052
        %v3054 = vrot.slane %v3026, %v3053
        %v3055 = vcombine.high %v3033, %v3033
        %v3056 = vcombine.high %v3040, %v3040
        %v3057 = vcombine.high %v3047, %v3047
        %v3058 = vcombine.high %v3054, %v3054
        %v3059 = vcombine.high %v2253, %v2253
        %v3061 = vunpack.c.l.s4 1966171168
        %v3062 = vunpack.c.0.s8 %v3061
        %v3063 = vlaneseq
        %v3064 = vshrl.u32 %v3063, 7
        %v3065 = vsub.s32 %v3062, %v3064
        %v3066 = vrot.slane %v2253, %v3065
        %v3068 = vunpack.c.l.s4 1966171168
        %v3069 = vunpack.c.0.s8 %v3068
        %v3070 = vlaneseq
        %v3071 = vshrl.u32 %v3070, 7
        %v3072 = vsub.s32 %v3069, %v3071
        %v3073 = vrot.slane %v3059, %v3072
        %v3074 = vcombine.high %v3066, %v3066
        %v3075 = vcombine.high %v3073, %v3073
        %v3077 = vunpack.c.l.s4 1966171168
        %v3078 = vunpack.c.0.s8 %v3077
        %v3079 = vlaneseq
        %v3080 = vshrl.u32 %v3079, 7
        %v3081 = vsub.s32 %v3078, %v3080
        %v3082 = vrot.slane %v3066, %v3081
        %v3084 = vunpack.c.l.s4 1966171168
        %v3085 = vunpack.c.0.s8 %v3084
        %v3086 = vlaneseq
        %v3087 = vshrl.u32 %v3086, 7
        %v3088 = vsub.s32 %v3085, %v3087
        %v3089 = vrot.slane %v3073, %v3088
        %v3091 = vunpack.c.l.s4 1966171168
        %v3092 = vunpack.c.0.s8 %v3091
        %v3093 = vlaneseq
        %v3094 = vshrl.u32 %v3093, 7
        %v3095 = vsub.s32 %v3092, %v3094
        %v3096 = vrot.slane %v3074, %v3095
        %v3098 = vunpack.c.l.s4 1966171168
        %v3099 = vunpack.c.0.s8 %v3098
        %v3100 = vlaneseq
        %v3101 = vshrl.u32 %v3100, 7
        %v3102 = vsub.s32 %v3099, %v3101
        %v3103 = vrot.slane %v3075, %v3102
        %v3104 = vcombine.high %v3082, %v3082
        %v3105 = vcombine.high %v3089, %v3089
        %v3106 = vcombine.high %v3096, %v3096
        %v3107 = vcombine.high %v3103, %v3103
        %v3108 = vcombine.high %v2254, %v2254
        %v3110 = vunpack.c.l.s4 1966171168
        %v3111 = vunpack.c.0.s8 %v3110
        %v3112 = vlaneseq
        %v3113 = vshrl.u32 %v3112, 7
        %v3114 = vsub.s32 %v3111, %v3113
        %v3115 = vrot.slane %v2254, %v3114
        %v3117 = vunpack.c.l.s4 1966171168
        %v3118 = vunpack.c.0.s8 %v3117
        %v3119 = vlaneseq
        %v3120 = vshrl.u32 %v3119, 7
        %v3121 = vsub.s32 %v3118, %v3120
        %v3122 = vrot.slane %v3108, %v3121
        %v3123 = vcombine.high %v3115, %v3115
        %v3124 = vcombine.high %v3122, %v3122
        %v3126 = vunpack.c.l.s4 1966171168
        %v3127 = vunpack.c.0.s8 %v3126
        %v3128 = vlaneseq
        %v3129 = vshrl.u32 %v3128, 7
        %v3130 = vsub.s32 %v3127, %v3129
        %v3131 = vrot.slane %v3115, %v3130
        %v3133 = vunpack.c.l.s4 1966171168
        %v3134 = vunpack.c.0.s8 %v3133
        %v3135 = vlaneseq
        %v3136 = vshrl.u32 %v3135, 7
        %v3137 = vsub.s32 %v3134, %v3136
        %v3138 = vrot.slane %v3122, %v3137
        %v3140 = vunpack.c.l.s4 1966171168
        %v3141 = vunpack.c.0.s8 %v3140
        %v3142 = vlaneseq
        %v3143 = vshrl.u32 %v3142, 7
        %v3144 = vsub.s32 %v3141, %v3143
        %v3145 = vrot.slane %v3123, %v3144
        %v3147 = vunpack.c.l.s4 1966171168
        %v3148 = vunpack.c.0.s8 %v3147
        %v3149 = vlaneseq
        %v3150 = vshrl.u32 %v3149, 7
        %v3151 = vsub.s32 %v3148, %v3150
        %v3152 = vrot.slane %v3124, %v3151
        %v3153 = vcombine.high %v3131, %v3131
        %v3154 = vcombine.high %v3138, %v3138
        %v3155 = vcombine.high %v3145, %v3145
        %v3156 = vcombine.high %v3152, %v3152
        %v3157 = vcombine.high %v2255, %v2255
        %v3159 = vunpack.c.l.s4 1966171168
        %v3160 = vunpack.c.0.s8 %v3159
        %v3161 = vlaneseq
        %v3162 = vshrl.u32 %v3161, 7
        %v3163 = vsub.s32 %v3160, %v3162
        %v3164 = vrot.slane %v2255, %v3163
        %v3166 = vunpack.c.l.s4 1966171168
        %v3167 = vunpack.c.0.s8 %v3166
        %v3168 = vlaneseq
        %v3169 = vshrl.u32 %v3168, 7
        %v3170 = vsub.s32 %v3167, %v3169
        %v3171 = vrot.slane %v3157, %v3170
        %v3172 = vcombine.high %v3164, %v3164
        %v3173 = vcombine.high %v3171, %v3171
        %v3175 = vunpack.c.l.s4 1966171168
        %v3176 = vunpack.c.0.s8 %v3175
        %v3177 = vlaneseq
        %v3178 = vshrl.u32 %v3177, 7
        %v3179 = vsub.s32 %v3176, %v3178
        %v3180 = vrot.slane %v3164, %v3179
        %v3182 = vunpack.c.l.s4 1966171168
        %v3183 = vunpack.c.0.s8 %v3182
        %v3184 = vlaneseq
        %v3185 = vshrl.u32 %v3184, 7
        %v3186 = vsub.s32 %v3183, %v3185
        %v3187 = vrot.slane %v3171, %v3186
        %v3189 = vunpack.c.l.s4 1966171168
        %v3190 = vunpack.c.0.s8 %v3189
        %v3191 = vlaneseq
        %v3192 = vshrl.u32 %v3191, 7
        %v3193 = vsub.s32 %v3190, %v3192
        %v3194 = vrot.slane %v3172, %v3193
        %v3196 = vunpack.c.l.s4 1966171168
        %v3197 = vunpack.c.0.s8 %v3196
        %v3198 = vlaneseq
        %v3199 = vshrl.u32 %v3198, 7
        %v3200 = vsub.s32 %v3197, %v3199
        %v3201 = vrot.slane %v3173, %v3200
        %v3202 = vcombine.high %v3180, %v3180
        %v3203 = vcombine.high %v3194, %v3194
        %v3204 = vcombine.low %v2298, %v2312
        %v3205 = vcombine.low %v2320, %v2322
        %v3206 = vcombine.low %v2305, %v2319
        %v3207 = vcombine.low %v2321, %v2323
        %v3209 = vunpack.c.l.s4 1966171168
        %v3210 = vunpack.c.0.s8 %v3209
        %v3211 = vlaneseq
        %v3212 = vshrl.u32 %v3211, 7
        %v3213 = vsub.s32 %v3210, %v3212
        %v3214 = vrot.slane %v3204, %v3213
        %v3216 = vunpack.c.l.s4 1966171168
        %v3217 = vunpack.c.0.s8 %v3216
        %v3218 = vlaneseq
        %v3219 = vshrl.u32 %v3218, 7
        %v3220 = vsub.s32 %v3217, %v3219
        %v3221 = vrot.slane %v3205, %v3220
        %v3223 = vunpack.c.l.s4 1966171168
        %v3224 = vunpack.c.0.s8 %v3223
        %v3225 = vlaneseq
        %v3226 = vshrl.u32 %v3225, 7
        %v3227 = vsub.s32 %v3224, %v3226
        %v3228 = vrot.slane %v3206, %v3227
        %v3230 = vunpack.c.l.s4 1966171168
        %v3231 = vunpack.c.0.s8 %v3230
        %v3232 = vlaneseq
        %v3233 = vshrl.u32 %v3232, 7
        %v3234 = vsub.s32 %v3231, %v3233
        %v3235 = vrot.slane %v3207, %v3234
        %v3236 = vcombine.low %v3214, %v3221
        %v3237 = vcombine.low %v3228, %v3235
        %v3239 = vunpack.c.l.s4 1966171168
        %v3240 = vunpack.c.0.s8 %v3239
        %v3241 = vlaneseq
        %v3242 = vshrl.u32 %v3241, 7
        %v3243 = vsub.s32 %v3240, %v3242
        %v3244 = vrot.slane %v3236, %v3243
        %v3246 = vunpack.c.l.s4 1966171168
        %v3247 = vunpack.c.0.s8 %v3246
        %v3248 = vlaneseq
        %v3249 = vshrl.u32 %v3248, 7
        %v3250 = vsub.s32 %v3247, %v3249
        %v3251 = vrot.slane %v3237, %v3250
        %v3252 = vcombine.low %v3244, %v3251
        %v3253 = vcombine.low %v2347, %v2361
        %v3254 = vcombine.low %v2369, %v2371
        %v3255 = vcombine.low %v2354, %v2368
        %v3257 = vunpack.c.l.s4 1966171168
        %v3258 = vunpack.c.0.s8 %v3257
        %v3259 = vlaneseq
        %v3260 = vshrl.u32 %v3259, 7
        %v3261 = vsub.s32 %v3258, %v3260
        %v3262 = vrot.slane %v3253, %v3261
        %v3264 = vunpack.c.l.s4 1966171168
        %v3265 = vunpack.c.0.s8 %v3264
        %v3266 = vlaneseq
        %v3267 = vshrl.u32 %v3266, 7
        %v3268 = vsub.s32 %v3265, %v3267
        %v3269 = vrot.slane %v3254, %v3268
        %v3271 = vunpack.c.l.s4 1966171168
        %v3272 = vunpack.c.0.s8 %v3271
        %v3273 = vlaneseq
        %v3274 = vshrl.u32 %v3273, 7
        %v3275 = vsub.s32 %v3272, %v3274
        %v3276 = vrot.slane %v3255, %v3275
        %v3278 = vunpack.c.l.s4 1966171168
        %v3279 = vunpack.c.0.s8 %v3278
        %v3280 = vlaneseq
        %v3281 = vshrl.u32 %v3280, 7
        %v3282 = vsub.s32 %v3279, %v3281
        %v3283 = vrot.slane %v2370, %v3282
        %v3284 = vcombine.low %v3262, %v3269
        %v3285 = vcombine.low %v3276, %v3283
        %v3287 = vunpack.c.l.s4 1966171168
        %v3288 = vunpack.c.0.s8 %v3287
        %v3289 = vlaneseq
        %v3290 = vshrl.u32 %v3289, 7
        %v3291 = vsub.s32 %v3288, %v3290
        %v3292 = vrot.slane %v3284, %v3291
        %v3294 = vunpack.c.l.s4 1966171168
        %v3295 = vunpack.c.0.s8 %v3294
        %v3296 = vlaneseq
        %v3297 = vshrl.u32 %v3296, 7
        %v3298 = vsub.s32 %v3295, %v3297
        %v3299 = vrot.slane %v3285, %v3298
        %v3300 = vcombine.low %v3292, %v3299
        %v3301 = vcombine.low %v2372, %v2396
        %v3302 = vcombine.low %v2410, %v2418
        %v3303 = vcombine.low %v2420, %v2403
        %v3304 = vcombine.low %v2417, %v2419
        %v3306 = vunpack.c.l.s4 1966171168
        %v3307 = vunpack.c.0.s8 %v3306
        %v3308 = vlaneseq
        %v3309 = vshrl.u32 %v3308, 7
        %v3310 = vsub.s32 %v3307, %v3309
        %v3311 = vrot.slane %v3301, %v3310
        %v3313 = vunpack.c.l.s4 1966171168
        %v3314 = vunpack.c.0.s8 %v3313
        %v3315 = vlaneseq
        %v3316 = vshrl.u32 %v3315, 7
        %v3317 = vsub.s32 %v3314, %v3316
        %v3318 = vrot.slane %v3302, %v3317
        %v3320 = vunpack.c.l.s4 1966171168
        %v3321 = vunpack.c.0.s8 %v3320
        %v3322 = vlaneseq
        %v3323 = vshrl.u32 %v3322, 7
        %v3324 = vsub.s32 %v3321, %v3323
        %v3325 = vrot.slane %v3303, %v3324
        %v3327 = vunpack.c.l.s4 1966171168
        %v3328 = vunpack.c.0.s8 %v3327
        %v3329 = vlaneseq
        %v3330 = vshrl.u32 %v3329, 7
        %v3331 = vsub.s32 %v3328, %v3330
        %v3332 = vrot.slane %v3304, %v3331
        %v3333 = vcombine.low %v3311, %v3318
        %v3334 = vcombine.low %v3325, %v3332
        %v3336 = vunpack.c.l.s4 1966171168
        %v3337 = vunpack.c.0.s8 %v3336
        %v3338 = vlaneseq
        %v3339 = vshrl.u32 %v3338, 7
        %v3340 = vsub.s32 %v3337, %v3339
        %v3341 = vrot.slane %v3333, %v3340
        %v3343 = vunpack.c.l.s4 1966171168
        %v3344 = vunpack.c.0.s8 %v3343
        %v3345 = vlaneseq
        %v3346 = vshrl.u32 %v3345, 7
        %v3347 = vsub.s32 %v3344, %v3346
        %v3348 = vrot.slane %v3334, %v3347
        %v3349 = vcombine.low %v3341, %v3348
        %v3350 = vcombine.low %v2421, %v2445
        %v3351 = vcombine.low %v2459, %v2467
        %v3352 = vcombine.low %v2469, %v2452
        %v3354 = vunpack.c.l.s4 1966171168
        %v3355 = vunpack.c.0.s8 %v3354
        %v3356 = vlaneseq
        %v3357 = vshrl.u32 %v3356, 7
        %v3358 = vsub.s32 %v3355, %v3357
        %v3359 = vrot.slane %v3350, %v3358
        %v3361 = vunpack.c.l.s4 1966171168
        %v3362 = vunpack.c.0.s8 %v3361
        %v3363 = vlaneseq
        %v3364 = vshrl.u32 %v3363, 7
        %v3365 = vsub.s32 %v3362, %v3364
        %v3366 = vrot.slane %v3351, %v3365
        %v3368 = vunpack.c.l.s4 1966171168
        %v3369 = vunpack.c.0.s8 %v3368
        %v3370 = vlaneseq
        %v3371 = vshrl.u32 %v3370, 7
        %v3372 = vsub.s32 %v3369, %v3371
        %v3373 = vrot.slane %v3352, %v3372
        %v3375 = vunpack.c.l.s4 1966171168
        %v3376 = vunpack.c.0.s8 %v3375
        %v3377 = vlaneseq
        %v3378 = vshrl.u32 %v3377, 7
        %v3379 = vsub.s32 %v3376, %v3378
        %v3380 = vrot.slane %v2466, %v3379
        %v3381 = vcombine.low %v3359, %v3366
        %v3382 = vcombine.low %v3373, %v3380
        %v3384 = vunpack.c.l.s4 1966171168
        %v3385 = vunpack.c.0.s8 %v3384
        %v3386 = vlaneseq
        %v3387 = vshrl.u32 %v3386, 7
        %v3388 = vsub.s32 %v3385, %v3387
        %v3389 = vrot.slane %v3381, %v3388
        %v3391 = vunpack.c.l.s4 1966171168
        %v3392 = vunpack.c.0.s8 %v3391
        %v3393 = vlaneseq
        %v3394 = vshrl.u32 %v3393, 7
        %v3395 = vsub.s32 %v3392, %v3394
        %v3396 = vrot.slane %v3382, %v3395
        %v3397 = vcombine.low %v3389, %v3396
        %v3398 = vcombine.low %v2468, %v2470
        %v3399 = vcombine.low %v2494, %v2508
        %v3400 = vcombine.low %v2516, %v2518
        %v3401 = vcombine.low %v2501, %v2515
        %v3403 = vunpack.c.l.s4 1966171168
        %v3404 = vunpack.c.0.s8 %v3403
        %v3405 = vlaneseq
        %v3406 = vshrl.u32 %v3405, 7
        %v3407 = vsub.s32 %v3404, %v3406
        %v3408 = vrot.slane %v3398, %v3407
        %v3410 = vunpack.c.l.s4 1966171168
        %v3411 = vunpack.c.0.s8 %v3410
        %v3412 = vlaneseq
        %v3413 = vshrl.u32 %v3412, 7
        %v3414 = vsub.s32 %v3411, %v3413
        %v3415 = vrot.slane %v3399, %v3414
        %v3417 = vunpack.c.l.s4 1966171168
        %v3418 = vunpack.c.0.s8 %v3417
        %v3419 = vlaneseq
        %v3420 = vshrl.u32 %v3419, 7
        %v3421 = vsub.s32 %v3418, %v3420
        %v3422 = vrot.slane %v3400, %v3421
        %v3424 = vunpack.c.l.s4 1966171168
        %v3425 = vunpack.c.0.s8 %v3424
        %v3426 = vlaneseq
        %v3427 = vshrl.u32 %v3426, 7
        %v3428 = vsub.s32 %v3425, %v3427
        %v3429 = vrot.slane %v3401, %v3428
        %v3430 = vcombine.low %v3408, %v3415
        %v3431 = vcombine.low %v3422, %v3429
        %v3433 = vunpack.c.l.s4 1966171168
        %v3434 = vunpack.c.0.s8 %v3433
        %v3435 = vlaneseq
        %v3436 = vshrl.u32 %v3435, 7
        %v3437 = vsub.s32 %v3434, %v3436
        %v3438 = vrot.slane %v3430, %v3437
        %v3440 = vunpack.c.l.s4 1966171168
        %v3441 = vunpack.c.0.s8 %v3440
        %v3442 = vlaneseq
        %v3443 = vshrl.u32 %v3442, 7
        %v3444 = vsub.s32 %v3441, %v3443
        %v3445 = vrot.slane %v3431, %v3444
        %v3446 = vcombine.low %v3438, %v3445
        %v3447 = vcombine.low %v2517, %v2519
        %v3448 = vcombine.low %v2543, %v2557
        %v3449 = vcombine.low %v2565, %v2567
        %v3451 = vunpack.c.l.s4 1966171168
        %v3452 = vunpack.c.0.s8 %v3451
        %v3453 = vlaneseq
        %v3454 = vshrl.u32 %v3453, 7
        %v3455 = vsub.s32 %v3452, %v3454
        %v3456 = vrot.slane %v3447, %v3455
        %v3458 = vunpack.c.l.s4 1966171168
        %v3459 = vunpack.c.0.s8 %v3458
        %v3460 = vlaneseq
        %v3461 = vshrl.u32 %v3460, 7
        %v3462 = vsub.s32 %v3459, %v3461
        %v3463 = vrot.slane %v3448, %v3462
        %v3465 = vunpack.c.l.s4 1966171168
        %v3466 = vunpack.c.0.s8 %v3465
        %v3467 = vlaneseq
        %v3468 = vshrl.u32 %v3467, 7
        %v3469 = vsub.s32 %v3466, %v3468
        %v3470 = vrot.slane %v3449, %v3469
        %v3472 = vunpack.c.l.s4 1966171168
        %v3473 = vunpack.c.0.s8 %v3472
        %v3474 = vlaneseq
        %v3475 = vshrl.u32 %v3474, 7
        %v3476 = vsub.s32 %v3473, %v3475
        %v3477 = vrot.slane %v2550, %v3476
        %v3478 = vcombine.low %v3456, %v3463
        %v3479 = vcombine.low %v3470, %v3477
        %v3481 = vunpack.c.l.s4 1966171168
        %v3482 = vunpack.c.0.s8 %v3481
        %v3483 = vlaneseq
        %v3484 = vshrl.u32 %v3483, 7
        %v3485 = vsub.s32 %v3482, %v3484
        %v3486 = vrot.slane %v3478, %v3485
        %v3488 = vunpack.c.l.s4 1966171168
        %v3489 = vunpack.c.0.s8 %v3488
        %v3490 = vlaneseq
        %v3491 = vshrl.u32 %v3490, 7
        %v3492 = vsub.s32 %v3489, %v3491
        %v3493 = vrot.slane %v3479, %v3492
        %v3494 = vcombine.low %v3486, %v3493
        %v3495 = vcombine.low %v2564, %v2566
        %v3496 = vcombine.low %v2568, %v2592
        %v3497 = vcombine.low %v2606, %v2614
        %v3498 = vcombine.low %v2616, %v2599
        %v3500 = vunpack.c.l.s4 1966171168
        %v3501 = vunpack.c.0.s8 %v3500
        %v3502 = vlaneseq
        %v3503 = vshrl.u32 %v3502, 7
        %v3504 = vsub.s32 %v3501, %v3503
        %v3505 = vrot.slane %v3495, %v3504
        %v3507 = vunpack.c.l.s4 1966171168
        %v3508 = vunpack.c.0.s8 %v3507
        %v3509 = vlaneseq
        %v3510 = vshrl.u32 %v3509, 7
        %v3511 = vsub.s32 %v3508, %v3510
        %v3512 = vrot.slane %v3496, %v3511
        %v3514 = vunpack.c.l.s4 1966171168
        %v3515 = vunpack.c.0.s8 %v3514
        %v3516 = vlaneseq
        %v3517 = vshrl.u32 %v3516, 7
        %v3518 = vsub.s32 %v3515, %v3517
        %v3519 = vrot.slane %v3497, %v3518
        %v3521 = vunpack.c.l.s4 1966171168
        %v3522 = vunpack.c.0.s8 %v3521
        %v3523 = vlaneseq
        %v3524 = vshrl.u32 %v3523, 7
        %v3525 = vsub.s32 %v3522, %v3524
        %v3526 = vrot.slane %v3498, %v3525
        %v3527 = vcombine.low %v3505, %v3512
        %v3528 = vcombine.low %v3519, %v3526
        %v3530 = vunpack.c.l.s4 1966171168
        %v3531 = vunpack.c.0.s8 %v3530
        %v3532 = vlaneseq
        %v3533 = vshrl.u32 %v3532, 7
        %v3534 = vsub.s32 %v3531, %v3533
        %v3535 = vrot.slane %v3527, %v3534
        %v3537 = vunpack.c.l.s4 1966171168
        %v3538 = vunpack.c.0.s8 %v3537
        %v3539 = vlaneseq
        %v3540 = vshrl.u32 %v3539, 7
        %v3541 = vsub.s32 %v3538, %v3540
        %v3542 = vrot.slane %v3528, %v3541
        %v3543 = vcombine.low %v3535, %v3542
        %v3544 = vcombine.low %v2613, %v2615
        %v3545 = vcombine.low %v2617, %v2641
        %v3546 = vcombine.low %v2655, %v2663
        %v3548 = vunpack.c.l.s4 1966171168
        %v3549 = vunpack.c.0.s8 %v3548
        %v3550 = vlaneseq
        %v3551 = vshrl.u32 %v3550, 7
        %v3552 = vsub.s32 %v3549, %v3551
        %v3553 = vrot.slane %v3544, %v3552
        %v3555 = vunpack.c.l.s4 1966171168
        %v3556 = vunpack.c.0.s8 %v3555
        %v3557 = vlaneseq
        %v3558 = vshrl.u32 %v3557, 7
        %v3559 = vsub.s32 %v3556, %v3558
        %v3560 = vrot.slane %v3545, %v3559
        %v3562 = vunpack.c.l.s4 1966171168
        %v3563 = vunpack.c.0.s8 %v3562
        %v3564 = vlaneseq
        %v3565 = vshrl.u32 %v3564, 7
        %v3566 = vsub.s32 %v3563, %v3565
        %v3567 = vrot.slane %v3546, %v3566
        %v3569 = vunpack.c.l.s4 1966171168
        %v3570 = vunpack.c.0.s8 %v3569
        %v3571 = vlaneseq
        %v3572 = vshrl.u32 %v3571, 7
        %v3573 = vsub.s32 %v3570, %v3572
        %v3574 = vrot.slane %v2665, %v3573
        %v3575 = vcombine.low %v3553, %v3560
        %v3576 = vcombine.low %v3567, %v3574
        %v3578 = vunpack.c.l.s4 1966171168
        %v3579 = vunpack.c.0.s8 %v3578
        %v3580 = vlaneseq
        %v3581 = vshrl.u32 %v3580, 7
        %v3582 = vsub.s32 %v3579, %v3581
        %v3583 = vrot.slane %v3575, %v3582
        %v3585 = vunpack.c.l.s4 1966171168
        %v3586 = vunpack.c.0.s8 %v3585
        %v3587 = vlaneseq
        %v3588 = vshrl.u32 %v3587, 7
        %v3589 = vsub.s32 %v3586, %v3588
        %v3590 = vrot.slane %v3576, %v3589
        %v3591 = vcombine.low %v3583, %v3590
        %v3592 = vcombine.low %v2648, %v2662
        %v3593 = vcombine.low %v2664, %v2666
        %v3594 = vcombine.low %v2690, %v2704
        %v3595 = vcombine.low %v2712, %v2714
        %v3597 = vunpack.c.l.s4 1966171168
        %v3598 = vunpack.c.0.s8 %v3597
        %v3599 = vlaneseq
        %v3600 = vshrl.u32 %v3599, 7
        %v3601 = vsub.s32 %v3598, %v3600
        %v3602 = vrot.slane %v3592, %v3601
        %v3604 = vunpack.c.l.s4 1966171168
        %v3605 = vunpack.c.0.s8 %v3604
        %v3606 = vlaneseq
        %v3607 = vshrl.u32 %v3606, 7
        %v3608 = vsub.s32 %v3605, %v3607
        %v3609 = vrot.slane %v3593, %v3608
        %v3611 = vunpack.c.l.s4 1966171168
        %v3612 = vunpack.c.0.s8 %v3611
        %v3613 = vlaneseq
        %v3614 = vshrl.u32 %v3613, 7
        %v3615 = vsub.s32 %v3612, %v3614
        %v3616 = vrot.slane %v3594, %v3615
        %v3618 = vunpack.c.l.s4 1966171168
        %v3619 = vunpack.c.0.s8 %v3618
        %v3620 = vlaneseq
        %v3621 = vshrl.u32 %v3620, 7
        %v3622 = vsub.s32 %v3619, %v3621
        %v3623 = vrot.slane %v3595, %v3622
        %v3624 = vcombine.low %v3602, %v3609
        %v3625 = vcombine.low %v3616, %v3623
        %v3627 = vunpack.c.l.s4 1966171168
        %v3628 = vunpack.c.0.s8 %v3627
        %v3629 = vlaneseq
        %v3630 = vshrl.u32 %v3629, 7
        %v3631 = vsub.s32 %v3628, %v3630
        %v3632 = vrot.slane %v3624, %v3631
        %v3634 = vunpack.c.l.s4 1966171168
        %v3635 = vunpack.c.0.s8 %v3634
        %v3636 = vlaneseq
        %v3637 = vshrl.u32 %v3636, 7
        %v3638 = vsub.s32 %v3635, %v3637
        %v3639 = vrot.slane %v3625, %v3638
        %v3640 = vcombine.low %v3632, %v3639
        %v3641 = vcombine.low %v2697, %v2711
        %v3642 = vcombine.low %v2713, %v2715
        %v3643 = vcombine.low %v2739, %v2753
        %v3645 = vunpack.c.l.s4 1966171168
        %v3646 = vunpack.c.0.s8 %v3645
        %v3647 = vlaneseq
        %v3648 = vshrl.u32 %v3647, 7
        %v3649 = vsub.s32 %v3646, %v3648
        %v3650 = vrot.slane %v3641, %v3649
        %v3652 = vunpack.c.l.s4 1966171168
        %v3653 = vunpack.c.0.s8 %v3652
        %v3654 = vlaneseq
        %v3655 = vshrl.u32 %v3654, 7
        %v3656 = vsub.s32 %v3653, %v3655
        %v3657 = vrot.slane %v3642, %v3656
        %v3659 = vunpack.c.l.s4 1966171168
        %v3660 = vunpack.c.0.s8 %v3659
        %v3661 = vlaneseq
        %v3662 = vshrl.u32 %v3661, 7
        %v3663 = vsub.s32 %v3660, %v3662
        %v3664 = vrot.slane %v3643, %v3663
        %v3666 = vunpack.c.l.s4 1966171168
        %v3667 = vunpack.c.0.s8 %v3666
        %v3668 = vlaneseq
        %v3669 = vshrl.u32 %v3668, 7
        %v3670 = vsub.s32 %v3667, %v3669
        %v3671 = vrot.slane %v2761, %v3670
        %v3672 = vcombine.low %v3650, %v3657
        %v3673 = vcombine.low %v3664, %v3671
        %v3675 = vunpack.c.l.s4 1966171168
        %v3676 = vunpack.c.0.s8 %v3675
        %v3677 = vlaneseq
        %v3678 = vshrl.u32 %v3677, 7
        %v3679 = vsub.s32 %v3676, %v3678
        %v3680 = vrot.slane %v3672, %v3679
        %v3682 = vunpack.c.l.s4 1966171168
        %v3683 = vunpack.c.0.s8 %v3682
        %v3684 = vlaneseq
        %v3685 = vshrl.u32 %v3684, 7
        %v3686 = vsub.s32 %v3683, %v3685
        %v3687 = vrot.slane %v3673, %v3686
        %v3688 = vcombine.low %v3680, %v3687
        %v3689 = vcombine.low %v2763, %v2746
        %v3690 = vcombine.low %v2760, %v2762
        %v3691 = vcombine.low %v2764, %v2788
        %v3692 = vcombine.low %v2802, %v2810
        %v3694 = vunpack.c.l.s4 1966171168
        %v3695 = vunpack.c.0.s8 %v3694
        %v3696 = vlaneseq
        %v3697 = vshrl.u32 %v3696, 7
        %v3698 = vsub.s32 %v3695, %v3697
        %v3699 = vrot.slane %v3689, %v3698
        %v3701 = vunpack.c.l.s4 1966171168
        %v3702 = vunpack.c.0.s8 %v3701
        %v3703 = vlaneseq
        %v3704 = vshrl.u32 %v3703, 7
        %v3705 = vsub.s32 %v3702, %v3704
        %v3706 = vrot.slane %v3690, %v3705
        %v3708 = vunpack.c.l.s4 1966171168
        %v3709 = vunpack.c.0.s8 %v3708
        %v3710 = vlaneseq
        %v3711 = vshrl.u32 %v3710, 7
        %v3712 = vsub.s32 %v3709, %v3711
        %v3713 = vrot.slane %v3691, %v3712
        %v3715 = vunpack.c.l.s4 1966171168
        %v3716 = vunpack.c.0.s8 %v3715
        %v3717 = vlaneseq
        %v3718 = vshrl.u32 %v3717, 7
        %v3719 = vsub.s32 %v3716, %v3718
        %v3720 = vrot.slane %v3692, %v3719
        %v3721 = vcombine.low %v3699, %v3706
        %v3722 = vcombine.low %v3713, %v3720
        %v3724 = vunpack.c.l.s4 1966171168
        %v3725 = vunpack.c.0.s8 %v3724
        %v3726 = vlaneseq
        %v3727 = vshrl.u32 %v3726, 7
        %v3728 = vsub.s32 %v3725, %v3727
        %v3729 = vrot.slane %v3721, %v3728
        %v3731 = vunpack.c.l.s4 1966171168
        %v3732 = vunpack.c.0.s8 %v3731
        %v3733 = vlaneseq
        %v3734 = vshrl.u32 %v3733, 7
        %v3735 = vsub.s32 %v3732, %v3734
        %v3736 = vrot.slane %v3722, %v3735
        %v3737 = vcombine.low %v3729, %v3736
        %v3738 = vcombine.low %v2812, %v2795
        %v3739 = vcombine.low %v2809, %v2811
        %v3740 = vcombine.low %v2813, %v2837
        %v3742 = vunpack.c.l.s4 1966171168
        %v3743 = vunpack.c.0.s8 %v3742
        %v3744 = vlaneseq
        %v3745 = vshrl.u32 %v3744, 7
        %v3746 = vsub.s32 %v3743, %v3745
        %v3747 = vrot.slane %v3738, %v3746
        %v3749 = vunpack.c.l.s4 1966171168
        %v3750 = vunpack.c.0.s8 %v3749
        %v3751 = vlaneseq
        %v3752 = vshrl.u32 %v3751, 7
        %v3753 = vsub.s32 %v3750, %v3752
        %v3754 = vrot.slane %v3739, %v3753
        %v3756 = vunpack.c.l.s4 1966171168
        %v3757 = vunpack.c.0.s8 %v3756
        %v3758 = vlaneseq
        %v3759 = vshrl.u32 %v3758, 7
        %v3760 = vsub.s32 %v3757, %v3759
        %v3761 = vrot.slane %v3740, %v3760
        %v3763 = vunpack.c.l.s4 1966171168
        %v3764 = vunpack.c.0.s8 %v3763
        %v3765 = vlaneseq
        %v3766 = vshrl.u32 %v3765, 7
        %v3767 = vsub.s32 %v3764, %v3766
        %v3768 = vrot.slane %v2851, %v3767
        %v3769 = vcombine.low %v3747, %v3754
        %v3770 = vcombine.low %v3761, %v3768
        %v3772 = vunpack.c.l.s4 1966171168
        %v3773 = vunpack.c.0.s8 %v3772
        %v3774 = vlaneseq
        %v3775 = vshrl.u32 %v3774, 7
        %v3776 = vsub.s32 %v3773, %v3775
        %v3777 = vrot.slane %v3769, %v3776
        %v3779 = vunpack.c.l.s4 1966171168
        %v3780 = vunpack.c.0.s8 %v3779
        %v3781 = vlaneseq
        %v3782 = vshrl.u32 %v3781, 7
        %v3783 = vsub.s32 %v3780, %v3782
        %v3784 = vrot.slane %v3770, %v3783
        %v3785 = vcombine.low %v3777, %v3784
        %v3786 = vcombine.low %v2859, %v2861
        %v3787 = vcombine.low %v2844, %v2858
        %v3788 = vcombine.low %v2860, %v2862
        %v3789 = vcombine.low %v2886, %v2900
        %v3791 = vunpack.c.l.s4 1966171168
        %v3792 = vunpack.c.0.s8 %v3791
        %v3793 = vlaneseq
        %v3794 = vshrl.u32 %v3793, 7
        %v3795 = vsub.s32 %v3792, %v3794
        %v3796 = vrot.slane %v3786, %v3795
        %v3798 = vunpack.c.l.s4 1966171168
        %v3799 = vunpack.c.0.s8 %v3798
        %v3800 = vlaneseq
        %v3801 = vshrl.u32 %v3800, 7
        %v3802 = vsub.s32 %v3799, %v3801
        %v3803 = vrot.slane %v3787, %v3802
        %v3805 = vunpack.c.l.s4 1966171168
        %v3806 = vunpack.c.0.s8 %v3805
        %v3807 = vlaneseq
        %v3808 = vshrl.u32 %v3807, 7
        %v3809 = vsub.s32 %v3806, %v3808
        %v3810 = vrot.slane %v3788, %v3809
        %v3812 = vunpack.c.l.s4 1966171168
        %v3813 = vunpack.c.0.s8 %v3812
        %v3814 = vlaneseq
        %v3815 = vshrl.u32 %v3814, 7
        %v3816 = vsub.s32 %v3813, %v3815
        %v3817 = vrot.slane %v3789, %v3816
        %v3818 = vcombine.low %v3796, %v3803
        %v3819 = vcombine.low %v3810, %v3817
        %v3821 = vunpack.c.l.s4 1966171168
        %v3822 = vunpack.c.0.s8 %v3821
        %v3823 = vlaneseq
        %v3824 = vshrl.u32 %v3823, 7
        %v3825 = vsub.s32 %v3822, %v3824
        %v3826 = vrot.slane %v3818, %v3825
        %v3828 = vunpack.c.l.s4 1966171168
        %v3829 = vunpack.c.0.s8 %v3828
        %v3830 = vlaneseq
        %v3831 = vshrl.u32 %v3830, 7
        %v3832 = vsub.s32 %v3829, %v3831
        %v3833 = vrot.slane %v3819, %v3832
        %v3834 = vcombine.low %v3826, %v3833
        %v3835 = vcombine.low %v2908, %v2910
        %v3836 = vcombine.low %v2893, %v2907
        %v3837 = vcombine.low %v2909, %v2911
        %v3839 = vunpack.c.l.s4 1966171168
        %v3840 = vunpack.c.0.s8 %v3839
        %v3841 = vlaneseq
        %v3842 = vshrl.u32 %v3841, 7
        %v3843 = vsub.s32 %v3840, %v3842
        %v3844 = vrot.slane %v3835, %v3843
        %v3846 = vunpack.c.l.s4 1966171168
        %v3847 = vunpack.c.0.s8 %v3846
        %v3848 = vlaneseq
        %v3849 = vshrl.u32 %v3848, 7
        %v3850 = vsub.s32 %v3847, %v3849
        %v3851 = vrot.slane %v3836, %v3850
        %v3853 = vunpack.c.l.s4 1966171168
        %v3854 = vunpack.c.0.s8 %v3853
        %v3855 = vlaneseq
        %v3856 = vshrl.u32 %v3855, 7
        %v3857 = vsub.s32 %v3854, %v3856
        %v3858 = vrot.slane %v3837, %v3857
        %v3860 = vunpack.c.l.s4 1966171168
        %v3861 = vunpack.c.0.s8 %v3860
        %v3862 = vlaneseq
        %v3863 = vshrl.u32 %v3862, 7
        %v3864 = vsub.s32 %v3861, %v3863
        %v3865 = vrot.slane %v2935, %v3864
        %v3866 = vcombine.low %v3844, %v3851
        %v3867 = vcombine.low %v3858, %v3865
        %v3869 = vunpack.c.l.s4 1966171168
        %v3870 = vunpack.c.0.s8 %v3869
        %v3871 = vlaneseq
        %v3872 = vshrl.u32 %v3871, 7
        %v3873 = vsub.s32 %v3870, %v3872
        %v3874 = vrot.slane %v3866, %v3873
        %v3876 = vunpack.c.l.s4 1966171168
        %v3877 = vunpack.c.0.s8 %v3876
        %v3878 = vlaneseq
        %v3879 = vshrl.u32 %v3878, 7
        %v3880 = vsub.s32 %v3877, %v3879
        %v3881 = vrot.slane %v3867, %v3880
        %v3882 = vcombine.low %v3874, %v3881
        %v3883 = vcombine.low %v2949, %v2957
        %v3884 = vcombine.low %v2959, %v2942
        %v3885 = vcombine.low %v2956, %v2958
        %v3886 = vcombine.low %v2960, %v2984
        %v3888 = vunpack.c.l.s4 1966171168
        %v3889 = vunpack.c.0.s8 %v3888
        %v3890 = vlaneseq
        %v3891 = vshrl.u32 %v3890, 7
        %v3892 = vsub.s32 %v3889, %v3891
        %v3893 = vrot.slane %v3883, %v3892
        %v3895 = vunpack.c.l.s4 1966171168
        %v3896 = vunpack.c.0.s8 %v3895
        %v3897 = vlaneseq
        %v3898 = vshrl.u32 %v3897, 7
        %v3899 = vsub.s32 %v3896, %v3898
        %v3900 = vrot.slane %v3884, %v3899
        %v3902 = vunpack.c.l.s4 1966171168
        %v3903 = vunpack.c.0.s8 %v3902
        %v3904 = vlaneseq
        %v3905 = vshrl.u32 %v3904, 7
        %v3906 = vsub.s32 %v3903, %v3905
        %v3907 = vrot.slane %v3885, %v3906
        %v3909 = vunpack.c.l.s4 1966171168
        %v3910 = vunpack.c.0.s8 %v3909
        %v3911 = vlaneseq
        %v3912 = vshrl.u32 %v3911, 7
        %v3913 = vsub.s32 %v3910, %v3912
        %v3914 = vrot.slane %v3886, %v3913
        %v3915 = vcombine.low %v3893, %v3900
        %v3916 = vcombine.low %v3907, %v3914
        %v3918 = vunpack.c.l.s4 1966171168
        %v3919 = vunpack.c.0.s8 %v3918
        %v3920 = vlaneseq
        %v3921 = vshrl.u32 %v3920, 7
        %v3922 = vsub.s32 %v3919, %v3921
        %v3923 = vrot.slane %v3915, %v3922
        %v3925 = vunpack.c.l.s4 1966171168
        %v3926 = vunpack.c.0.s8 %v3925
        %v3927 = vlaneseq
        %v3928 = vshrl.u32 %v3927, 7
        %v3929 = vsub.s32 %v3926, %v3928
        %v3930 = vrot.slane %v3916, %v3929
        %v3931 = vcombine.low %v3923, %v3930
        %v3932 = vcombine.low %v2998, %v3006
        %v3933 = vcombine.low %v3008, %v2991
        %v3934 = vcombine.low %v3005, %v3007
        %v3936 = vunpack.c.l.s4 1966171168
        %v3937 = vunpack.c.0.s8 %v3936
        %v3938 = vlaneseq
        %v3939 = vshrl.u32 %v3938, 7
        %v3940 = vsub.s32 %v3937, %v3939
        %v3941 = vrot.slane %v3932, %v3940
        %v3943 = vunpack.c.l.s4 1966171168
        %v3944 = vunpack.c.0.s8 %v3943
        %v3945 = vlaneseq
        %v3946 = vshrl.u32 %v3945, 7
        %v3947 = vsub.s32 %v3944, %v3946
        %v3948 = vrot.slane %v3933, %v3947
        %v3950 = vunpack.c.l.s4 1966171168
        %v3951 = vunpack.c.0.s8 %v3950
        %v3952 = vlaneseq
        %v3953 = vshrl.u32 %v3952, 7
        %v3954 = vsub.s32 %v3951, %v3953
        %v3955 = vrot.slane %v3934, %v3954
        %v3957 = vunpack.c.l.s4 1966171168
        %v3958 = vunpack.c.0.s8 %v3957
        %v3959 = vlaneseq
        %v3960 = vshrl.u32 %v3959, 7
        %v3961 = vsub.s32 %v3958, %v3960
        %v3962 = vrot.slane %v3009, %v3961
        %v3963 = vcombine.low %v3941, %v3948
        %v3964 = vcombine.low %v3955, %v3962
        %v3966 = vunpack.c.l.s4 1966171168
        %v3967 = vunpack.c.0.s8 %v3966
        %v3968 = vlaneseq
        %v3969 = vshrl.u32 %v3968, 7
        %v3970 = vsub.s32 %v3967, %v3969
        %v3971 = vrot.slane %v3963, %v3970
        %v3973 = vunpack.c.l.s4 1966171168
        %v3974 = vunpack.c.0.s8 %v3973
        %v3975 = vlaneseq
        %v3976 = vshrl.u32 %v3975, 7
        %v3977 = vsub.s32 %v3974, %v3976
        %v3978 = vrot.slane %v3964, %v3977
        %v3979 = vcombine.low %v3971, %v3978
        %v3980 = vcombine.low %v3033, %v3047
        %v3981 = vcombine.low %v3055, %v3057
        %v3982 = vcombine.low %v3040, %v3054
        %v3983 = vcombine.low %v3056, %v3058
        %v3985 = vunpack.c.l.s4 1966171168
        %v3986 = vunpack.c.0.s8 %v3985
        %v3987 = vlaneseq
        %v3988 = vshrl.u32 %v3987, 7
        %v3989 = vsub.s32 %v3986, %v3988
        %v3990 = vrot.slane %v3980, %v3989
        %v3992 = vunpack.c.l.s4 1966171168
        %v3993 = vunpack.c.0.s8 %v3992
        %v3994 = vlaneseq
        %v3995 = vshrl.u32 %v3994, 7
        %v3996 = vsub.s32 %v3993, %v3995
        %v3997 = vrot.slane %v3981, %v3996
        %v3999 = vunpack.c.l.s4 1966171168
        %v4000 = vunpack.c.0.s8 %v3999
        %v4001 = vlaneseq
        %v4002 = vshrl.u32 %v4001, 7
        %v4003 = vsub.s32 %v4000, %v4002
        %v4004 = vrot.slane %v3982, %v4003
        %v4006 = vunpack.c.l.s4 1966171168
        %v4007 = vunpack.c.0.s8 %v4006
        %v4008 = vlaneseq
        %v4009 = vshrl.u32 %v4008, 7
        %v4010 = vsub.s32 %v4007, %v4009
        %v4011 = vrot.slane %v3983, %v4010
        %v4012 = vcombine.low %v3990, %v3997
        %v4013 = vcombine.low %v4004, %v4011
        %v4015 = vunpack.c.l.s4 1966171168
        %v4016 = vunpack.c.0.s8 %v4015
        %v4017 = vlaneseq
        %v4018 = vshrl.u32 %v4017, 7
        %v4019 = vsub.s32 %v4016, %v4018
        %v4020 = vrot.slane %v4012, %v4019
        %v4022 = vunpack.c.l.s4 1966171168
        %v4023 = vunpack.c.0.s8 %v4022
        %v4024 = vlaneseq
        %v4025 = vshrl.u32 %v4024, 7
        %v4026 = vsub.s32 %v4023, %v4025
        %v4027 = vrot.slane %v4013, %v4026
        %v4028 = vcombine.low %v4020, %v4027
        %v4029 = vcombine.low %v3082, %v3096
        %v4030 = vcombine.low %v3104, %v3106
        %v4031 = vcombine.low %v3089, %v3103
        %v4033 = vunpack.c.l.s4 1966171168
        %v4034 = vunpack.c.0.s8 %v4033
        %v4035 = vlaneseq
        %v4036 = vshrl.u32 %v4035, 7
        %v4037 = vsub.s32 %v4034, %v4036
        %v4038 = vrot.slane %v4029, %v4037
        %v4040 = vunpack.c.l.s4 1966171168
        %v4041 = vunpack.c.0.s8 %v4040
        %v4042 = vlaneseq
        %v4043 = vshrl.u32 %v4042, 7
        %v4044 = vsub.s32 %v4041, %v4043
        %v4045 = vrot.slane %v4030, %v4044
        %v4047 = vunpack.c.l.s4 1966171168
        %v4048 = vunpack.c.0.s8 %v4047
        %v4049 = vlaneseq
        %v4050 = vshrl.u32 %v4049, 7
        %v4051 = vsub.s32 %v4048, %v4050
        %v4052 = vrot.slane %v4031, %v4051
        %v4054 = vunpack.c.l.s4 1966171168
        %v4055 = vunpack.c.0.s8 %v4054
        %v4056 = vlaneseq
        %v4057 = vshrl.u32 %v4056, 7
        %v4058 = vsub.s32 %v4055, %v4057
        %v4059 = vrot.slane %v3105, %v4058
        %v4060 = vcombine.low %v4038, %v4045
        %v4061 = vcombine.low %v4052, %v4059
        %v4063 = vunpack.c.l.s4 1966171168
        %v4064 = vunpack.c.0.s8 %v4063
        %v4065 = vlaneseq
        %v4066 = vshrl.u32 %v4065, 7
        %v4067 = vsub.s32 %v4064, %v4066
        %v4068 = vrot.slane %v4060, %v4067
        %v4070 = vunpack.c.l.s4 1966171168
        %v4071 = vunpack.c.0.s8 %v4070
        %v4072 = vlaneseq
        %v4073 = vshrl.u32 %v4072, 7
        %v4074 = vsub.s32 %v4071, %v4073
        %v4075 = vrot.slane %v4061, %v4074
        %v4076 = vcombine.low %v4068, %v4075
        %v4077 = vcombine.low %v3107, %v3131
        %v4078 = vcombine.low %v3145, %v3153
        %v4079 = vcombine.low %v3155, %v3138
        %v4080 = vcombine.low %v3152, %v3154
        %v4082 = vunpack.c.l.s4 1966171168
        %v4083 = vunpack.c.0.s8 %v4082
        %v4084 = vlaneseq
        %v4085 = vshrl.u32 %v4084, 7
        %v4086 = vsub.s32 %v4083, %v4085
        %v4087 = vrot.slane %v4077, %v4086
        %v4089 = vunpack.c.l.s4 1966171168
        %v4090 = vunpack.c.0.s8 %v4089
        %v4091 = vlaneseq
        %v4092 = vshrl.u32 %v4091, 7
        %v4093 = vsub.s32 %v4090, %v4092
        %v4094 = vrot.slane %v4078, %v4093
        %v4096 = vunpack.c.l.s4 1966171168
        %v4097 = vunpack.c.0.s8 %v4096
        %v4098 = vlaneseq
        %v4099 = vshrl.u32 %v4098, 7
        %v4100 = vsub.s32 %v4097, %v4099
        %v4101 = vrot.slane %v4079, %v4100
        %v4103 = vunpack.c.l.s4 1966171168
        %v4104 = vunpack.c.0.s8 %v4103
        %v4105 = vlaneseq
        %v4106 = vshrl.u32 %v4105, 7
        %v4107 = vsub.s32 %v4104, %v4106
        %v4108 = vrot.slane %v4080, %v4107
        %v4109 = vcombine.low %v4087, %v4094
        %v4110 = vcombine.low %v4101, %v4108
        %v4112 = vunpack.c.l.s4 1966171168
        %v4113 = vunpack.c.0.s8 %v4112
        %v4114 = vlaneseq
        %v4115 = vshrl.u32 %v4114, 7
        %v4116 = vsub.s32 %v4113, %v4115
        %v4117 = vrot.slane %v4109, %v4116
        %v4119 = vunpack.c.l.s4 1966171168
        %v4120 = vunpack.c.0.s8 %v4119
        %v4121 = vlaneseq
        %v4122 = vshrl.u32 %v4121, 7
        %v4123 = vsub.s32 %v4120, %v4122
        %v4124 = vrot.slane %v4110, %v4123
        %v4125 = vcombine.low %v4117, %v4124
        %v4126 = vcombine.low %v3156, %v3180
        %v4127 = vcombine.low %v3194, %v3202
        %v4128 = vcombine.low %v3203, %v3187
        %v4130 = vunpack.c.l.s4 1966171168
        %v4131 = vunpack.c.0.s8 %v4130
        %v4132 = vlaneseq
        %v4133 = vshrl.u32 %v4132, 7
        %v4134 = vsub.s32 %v4131, %v4133
        %v4135 = vrot.slane %v4126, %v4134
        %v4137 = vunpack.c.l.s4 1966171168
        %v4138 = vunpack.c.0.s8 %v4137
        %v4139 = vlaneseq
        %v4140 = vshrl.u32 %v4139, 7
        %v4141 = vsub.s32 %v4138, %v4140
        %v4142 = vrot.slane %v4127, %v4141
        %v4144 = vunpack.c.l.s4 1966171168
        %v4145 = vunpack.c.0.s8 %v4144
        %v4146 = vlaneseq
        %v4147 = vshrl.u32 %v4146, 7
        %v4148 = vsub.s32 %v4145, %v4147
        %v4149 = vrot.slane %v4128, %v4148
        %v4151 = vunpack.c.l.s4 1966171168
        %v4152 = vunpack.c.0.s8 %v4151
        %v4153 = vlaneseq
        %v4154 = vshrl.u32 %v4153, 7
        %v4155 = vsub.s32 %v4152, %v4154
        %v4156 = vrot.slane %v3201, %v4155
        %v4157 = vcombine.low %v4135, %v4142
        %v4158 = vcombine.low %v4149, %v4156
        %v4160 = vunpack.c.l.s4 1966171168
        %v4161 = vunpack.c.0.s8 %v4160
        %v4162 = vlaneseq
        %v4163 = vshrl.u32 %v4162, 7
        %v4164 = vsub.s32 %v4161, %v4163
        %v4165 = vrot.slane %v4157, %v4164
        %v4167 = vunpack.c.l.s4 1966171168
        %v4168 = vunpack.c.0.s8 %v4167
        %v4169 = vlaneseq
        %v4170 = vshrl.u32 %v4169, 7
        %v4171 = vsub.s32 %v4168, %v4170
        %v4172 = vrot.slane %v4158, %v4171
        %v4173 = vcombine.low %v4165, %v4172
        %v4194 = vpack.c.bf16 %v3300, %v3252
        %v4195 = vpack.c.bf16 %v3397, %v3349
        %v4196 = vpack.c.bf16 %v3494, %v3446
        %v4197 = vpack.c.bf16 %v3591, %v3543
        %v4198 = vpack.c.bf16 %v3688, %v3640
        %v4199 = vpack.c.bf16 %v3785, %v3737
        %v4200 = vpack.c.bf16 %v3882, %v3834
        %v4201 = vpack.c.bf16 %v3979, %v3931
        %v4202 = vpack.c.bf16 %v4076, %v4028
        %v4203 = vpack.c.bf16 %v4173, %v4125
        %v4205 = vshrl.u32 %v4194, 16
        %v4207 = vshll.u32 %v4194, 16
        %v4209 = vrot.slane %v4207, 1
        %v4210 = vor.u32 %v4205, %v4209
        %v4212 = vshrl.u32 %v4195, 16
        %v4214 = vshll.u32 %v4195, 16
        %v4216 = vrot.slane %v4214, 1
        %v4217 = vor.u32 %v4212, %v4216
        %v4219 = vshrl.u32 %v4196, 16
        %v4221 = vshll.u32 %v4196, 16
        %v4223 = vrot.slane %v4221, 1
        %v4224 = vor.u32 %v4219, %v4223
        %v4226 = vshrl.u32 %v4197, 16
        %v4228 = vshll.u32 %v4197, 16
        %v4230 = vrot.slane %v4228, 1
        %v4231 = vor.u32 %v4226, %v4230
        %v4233 = vshrl.u32 %v4198, 16
        %v4235 = vshll.u32 %v4198, 16
        %v4237 = vrot.slane %v4235, 1
        %v4238 = vor.u32 %v4233, %v4237
        %v4240 = vshrl.u32 %v4199, 16
        %v4242 = vshll.u32 %v4199, 16
        %v4244 = vrot.slane %v4242, 1
        %v4245 = vor.u32 %v4240, %v4244
        %v4247 = vshrl.u32 %v4200, 16
        %v4249 = vshll.u32 %v4200, 16
        %v4251 = vrot.slane %v4249, 1
        %v4252 = vor.u32 %v4247, %v4251
        %v4254 = vshrl.u32 %v4201, 16
        %v4256 = vshll.u32 %v4201, 16
        %v4258 = vrot.slane %v4256, 1
        %v4259 = vor.u32 %v4254, %v4258
        %4260 = vrot.lane.b32.xlu0 %v4210, 16
        %v4261 = vpop.permute.xlu0 %4260
        %4262 = vrot.lane.b32.xlu0 %v4217, 16
        %v4263 = vpop.permute.xlu0 %4262
        %4264 = vrot.lane.b32.xlu0 %v4224, 16
        %v4265 = vpop.permute.xlu0 %4264
        %4266 = vrot.lane.b32.xlu0 %v4231, 16
        %v4267 = vpop.permute.xlu0 %4266
        %4268 = vrot.lane.b32.xlu0 %v4238, 16
        %v4269 = vpop.permute.xlu0 %4268
        %4270 = vrot.lane.b32.xlu0 %v4245, 16
        %v4271 = vpop.permute.xlu0 %4270
        %4272 = vrot.lane.b32.xlu0 %v4252, 16
        %v4273 = vpop.permute.xlu0 %4272
        %4274 = vrot.lane.b32.xlu0 %v4259, 16
        %v4275 = vpop.permute.xlu0 %4274
        %v4284 = vrot.slane %v4194, 1
        %v4285 = vrot.slane %v4195, 1
        %v4286 = vrot.slane %v4196, 1
        %v4287 = vrot.slane %v4197, 1
        %v4288 = vrot.slane %v4198, 1
        %v4289 = vrot.slane %v4199, 1
        %v4290 = vrot.slane %v4200, 1
        %v4291 = vrot.slane %v4201, 1
        %4292 = vrot.lane.b32.xlu0 %v4284, 32
        %v4293 = vpop.permute.xlu0 %4292
        %4294 = vrot.lane.b32.xlu0 %v4285, 32
        %v4295 = vpop.permute.xlu0 %4294
        %4296 = vrot.lane.b32.xlu0 %v4286, 32
        %v4297 = vpop.permute.xlu0 %4296
        %4298 = vrot.lane.b32.xlu0 %v4287, 32
        %v4299 = vpop.permute.xlu0 %4298
        %4300 = vrot.lane.b32.xlu0 %v4288, 32
        %v4301 = vpop.permute.xlu0 %4300
        %4302 = vrot.lane.b32.xlu0 %v4289, 32
        %v4303 = vpop.permute.xlu0 %4302
        %4304 = vrot.lane.b32.xlu0 %v4290, 32
        %v4305 = vpop.permute.xlu0 %4304
        %4306 = vrot.lane.b32.xlu0 %v4291, 32
        %v4307 = vpop.permute.xlu0 %4306
        %4309 = vrot.lane.b32.xlu0 %v4195, 48
        %v4310 = vpop.permute.xlu0 %4309
        %4311 = vrot.lane.b32.xlu0 %v4196, 48
        %v4312 = vpop.permute.xlu0 %4311
        %4313 = vrot.lane.b32.xlu0 %v4197, 48
        %v4314 = vpop.permute.xlu0 %4313
        %4315 = vrot.lane.b32.xlu0 %v4198, 48
        %v4316 = vpop.permute.xlu0 %4315
        %4317 = vrot.lane.b32.xlu0 %v4199, 48
        %v4318 = vpop.permute.xlu0 %4317
        %4319 = vrot.lane.b32.xlu0 %v4200, 48
        %v4320 = vpop.permute.xlu0 %4319
        %4321 = vrot.lane.b32.xlu0 %v4201, 48
        %v4322 = vpop.permute.xlu0 %4321
        %4323 = vrot.lane.b32.xlu0 %v4202, 48
        %v4324 = vpop.permute.xlu0 %4323
        %v4326 = vshrl.u32 %v4202, 16
        %v4328 = vshll.u32 %v4202, 16
        %v4330 = vrot.slane %v4328, 1
        %v4331 = vor.u32 %v4326, %v4330
        %4332 = vrot.lane.b32.xlu0 %v4217, 64
        %v4333 = vpop.permute.xlu0 %4332
        %4334 = vrot.lane.b32.xlu0 %v4224, 64
        %v4335 = vpop.permute.xlu0 %4334
        %4336 = vrot.lane.b32.xlu0 %v4231, 64
        %v4337 = vpop.permute.xlu0 %4336
        %4338 = vrot.lane.b32.xlu0 %v4238, 64
        %v4339 = vpop.permute.xlu0 %4338
        %4340 = vrot.lane.b32.xlu0 %v4245, 64
        %v4341 = vpop.permute.xlu0 %4340
        %4342 = vrot.lane.b32.xlu0 %v4252, 64
        %v4343 = vpop.permute.xlu0 %4342
        %4344 = vrot.lane.b32.xlu0 %v4259, 64
        %v4345 = vpop.permute.xlu0 %4344
        %4346 = vrot.lane.b32.xlu0 %v4331, 64
        %v4347 = vpop.permute.xlu0 %4346
        %v4348 = vrot.slane %v4202, 1
        %4349 = vrot.lane.b32.xlu0 %v4285, 80
        %v4350 = vpop.permute.xlu0 %4349
        %4351 = vrot.lane.b32.xlu0 %v4286, 80
        %v4352 = vpop.permute.xlu0 %4351
        %4353 = vrot.lane.b32.xlu0 %v4287, 80
        %v4354 = vpop.permute.xlu0 %4353
        %4355 = vrot.lane.b32.xlu0 %v4288, 80
        %v4356 = vpop.permute.xlu0 %4355
        %4357 = vrot.lane.b32.xlu0 %v4289, 80
        %v4358 = vpop.permute.xlu0 %4357
        %4359 = vrot.lane.b32.xlu0 %v4290, 80
        %v4360 = vpop.permute.xlu0 %4359
        %4361 = vrot.lane.b32.xlu0 %v4291, 80
        %v4362 = vpop.permute.xlu0 %4361
        %4363 = vrot.lane.b32.xlu0 %v4348, 80
        %v4364 = vpop.permute.xlu0 %4363
        %4366 = vrot.lane.b32.xlu0 %v4196, 96
        %v4367 = vpop.permute.xlu0 %4366
        %4368 = vrot.lane.b32.xlu0 %v4197, 96
        %v4369 = vpop.permute.xlu0 %4368
        %4370 = vrot.lane.b32.xlu0 %v4198, 96
        %v4371 = vpop.permute.xlu0 %4370
        %4372 = vrot.lane.b32.xlu0 %v4199, 96
        %v4373 = vpop.permute.xlu0 %4372
        %4374 = vrot.lane.b32.xlu0 %v4200, 96
        %v4375 = vpop.permute.xlu0 %4374
        %4376 = vrot.lane.b32.xlu0 %v4201, 96
        %v4377 = vpop.permute.xlu0 %4376
        %4378 = vrot.lane.b32.xlu0 %v4202, 96
        %v4379 = vpop.permute.xlu0 %4378
        %4380 = vrot.lane.b32.xlu0 %v4203, 96
        %v4381 = vpop.permute.xlu0 %4380
        %v4383 = vshrl.u32 %v4203, 16
        %v4385 = vshll.u32 %v4203, 16
        %v4387 = vrot.slane %v4385, 1
        %v4388 = vor.u32 %v4383, %v4387
        %4389 = vrot.lane.b32.xlu0 %v4224, 112
        %v4390 = vpop.permute.xlu0 %4389
        %4391 = vrot.lane.b32.xlu0 %v4231, 112
        %v4392 = vpop.permute.xlu0 %4391
        %4393 = vrot.lane.b32.xlu0 %v4238, 112
        %v4394 = vpop.permute.xlu0 %4393
        %4395 = vrot.lane.b32.xlu0 %v4245, 112
        %v4396 = vpop.permute.xlu0 %4395
        %4397 = vrot.lane.b32.xlu0 %v4252, 112
        %v4398 = vpop.permute.xlu0 %4397
        %4399 = vrot.lane.b32.xlu0 %v4259, 112
        %v4400 = vpop.permute.xlu0 %4399
        %4401 = vrot.lane.b32.xlu0 %v4331, 112
        %v4402 = vpop.permute.xlu0 %4401
        %4403 = vrot.lane.b32.xlu0 %v4388, 112
        %v4404 = vpop.permute.xlu0 %4403
        %v4405 = vrot.slane %v4203, 1
        %v4407 = vsel %vm724, %v4194, %v4261
        %v4409 = vsel %vm724, %v4195, %v4263
        %v4411 = vsel %vm724, %v4196, %v4265
        %v4413 = vsel %vm724, %v4197, %v4267
        %v4415 = vsel %vm724, %v4198, %v4269
        %v4417 = vsel %vm724, %v4199, %v4271
        %v4419 = vsel %vm724, %v4200, %v4273
        %v4421 = vsel %vm724, %v4201, %v4275
        %v4423 = vsel %vm808, %v4407, %v4293
        %v4425 = vsel %vm808, %v4409, %v4295
        %v4427 = vsel %vm808, %v4411, %v4297
        %v4429 = vsel %vm808, %v4413, %v4299
        %v4431 = vsel %vm808, %v4415, %v4301
        %v4433 = vsel %vm808, %v4417, %v4303
        %v4435 = vsel %vm808, %v4419, %v4305
        %v4437 = vsel %vm808, %v4421, %v4307
        %vm4438 = vcmask 392192
        %v4440 = vsel %vm4438, %v4423, %v4310
        %v4442 = vsel %vm4438, %v4425, %v4312
        %v4444 = vsel %vm4438, %v4427, %v4314
        %v4446 = vsel %vm4438, %v4429, %v4316
        %v4448 = vsel %vm4438, %v4431, %v4318
        %v4450 = vsel %vm4438, %v4433, %v4320
        %v4452 = vsel %vm4438, %v4435, %v4322
        %v4454 = vsel %vm4438, %v4437, %v4324
        %vm4455 = vcmask 523264
        %v4457 = vsel %vm4455, %v4440, %v4333
        %v4459 = vsel %vm4455, %v4442, %v4335
        %v4461 = vsel %vm4455, %v4444, %v4337
        %v4463 = vsel %vm4455, %v4446, %v4339
        %v4465 = vsel %vm4455, %v4448, %v4341
        %v4467 = vsel %vm4455, %v4450, %v4343
        %v4469 = vsel %vm4455, %v4452, %v4345
        %v4471 = vsel %vm4455, %v4454, %v4347
        %vm4472 = vcmask 654336
        %v4474 = vsel %vm4472, %v4457, %v4350
        %v4476 = vsel %vm4472, %v4459, %v4352
        %v4478 = vsel %vm4472, %v4461, %v4354
        %v4480 = vsel %vm4472, %v4463, %v4356
        %v4482 = vsel %vm4472, %v4465, %v4358
        %v4484 = vsel %vm4472, %v4467, %v4360
        %v4486 = vsel %vm4472, %v4469, %v4362
        %v4488 = vsel %vm4472, %v4471, %v4364
        %vm4489 = vcmask 785408
        %v4491 = vsel %vm4489, %v4474, %v4367
        %v4493 = vsel %vm4489, %v4476, %v4369
        %v4495 = vsel %vm4489, %v4478, %v4371
        %v4497 = vsel %vm4489, %v4480, %v4373
        %v4499 = vsel %vm4489, %v4482, %v4375
        %v4501 = vsel %vm4489, %v4484, %v4377
        %v4503 = vsel %vm4489, %v4486, %v4379
        %v4505 = vsel %vm4489, %v4488, %v4381
        %vm4506 = vcmask 916480
        %v4508 = vsel %vm4506, %v4491, %v4390
        %v4510 = vsel %vm4506, %v4493, %v4392
        %v4512 = vsel %vm4506, %v4495, %v4394
        %v4514 = vsel %vm4506, %v4497, %v4396
        %v4516 = vsel %vm4506, %v4499, %v4398
        %v4518 = vsel %vm4506, %v4501, %v4400
        %v4520 = vsel %vm4506, %v4503, %v4402
        %v4522 = vsel %vm4506, %v4505, %v4404
        %v4531 = vcombine.low %v4508, %v4286
        %v4532 = vcombine.high %v4508, %v4286
        %v4534 = vunpack.c.l.s4 1966171168
        %v4535 = vunpack.c.0.s8 %v4534
        %v4536 = vlaneseq
        %v4537 = vshrl.u32 %v4536, 7
        %v4538 = vsub.s32 %v4535, %v4537
        %v4539 = vrot.slane %v4531, %v4538
        %v4541 = vunpack.c.l.s4 1966171168
        %v4542 = vunpack.c.0.s8 %v4541
        %v4543 = vlaneseq
        %v4544 = vshrl.u32 %v4543, 7
        %v4545 = vsub.s32 %v4542, %v4544
        %v4546 = vrot.slane %v4532, %v4545
        %v4547 = vcombine.high %v4539, %v4539
        %v4548 = vcombine.high %v4546, %v4546
        %v4550 = vunpack.c.l.s4 1966171168
        %v4551 = vunpack.c.0.s8 %v4550
        %v4552 = vlaneseq
        %v4553 = vshrl.u32 %v4552, 7
        %v4554 = vsub.s32 %v4551, %v4553
        %v4555 = vrot.slane %v4539, %v4554
        %v4557 = vunpack.c.l.s4 1966171168
        %v4558 = vunpack.c.0.s8 %v4557
        %v4559 = vlaneseq
        %v4560 = vshrl.u32 %v4559, 7
        %v4561 = vsub.s32 %v4558, %v4560
        %v4562 = vrot.slane %v4546, %v4561
        %v4564 = vunpack.c.l.s4 1966171168
        %v4565 = vunpack.c.0.s8 %v4564
        %v4566 = vlaneseq
        %v4567 = vshrl.u32 %v4566, 7
        %v4568 = vsub.s32 %v4565, %v4567
        %v4569 = vrot.slane %v4547, %v4568
        %v4571 = vunpack.c.l.s4 1966171168
        %v4572 = vunpack.c.0.s8 %v4571
        %v4573 = vlaneseq
        %v4574 = vshrl.u32 %v4573, 7
        %v4575 = vsub.s32 %v4572, %v4574
        %v4576 = vrot.slane %v4548, %v4575
        %v4577 = vcombine.high %v4555, %v4555
        %v4578 = vcombine.high %v4562, %v4562
        %v4579 = vcombine.high %v4569, %v4569
        %v4580 = vcombine.low %v4510, %v4287
        %v4581 = vcombine.high %v4510, %v4287
        %v4583 = vunpack.c.l.s4 1966171168
        %v4584 = vunpack.c.0.s8 %v4583
        %v4585 = vlaneseq
        %v4586 = vshrl.u32 %v4585, 7
        %v4587 = vsub.s32 %v4584, %v4586
        %v4588 = vrot.slane %v4580, %v4587
        %v4590 = vunpack.c.l.s4 1966171168
        %v4591 = vunpack.c.0.s8 %v4590
        %v4592 = vlaneseq
        %v4593 = vshrl.u32 %v4592, 7
        %v4594 = vsub.s32 %v4591, %v4593
        %v4595 = vrot.slane %v4581, %v4594
        %v4596 = vcombine.high %v4588, %v4588
        %v4597 = vcombine.high %v4595, %v4595
        %v4599 = vunpack.c.l.s4 1966171168
        %v4600 = vunpack.c.0.s8 %v4599
        %v4601 = vlaneseq
        %v4602 = vshrl.u32 %v4601, 7
        %v4603 = vsub.s32 %v4600, %v4602
        %v4604 = vrot.slane %v4588, %v4603
        %v4606 = vunpack.c.l.s4 1966171168
        %v4607 = vunpack.c.0.s8 %v4606
        %v4608 = vlaneseq
        %v4609 = vshrl.u32 %v4608, 7
        %v4610 = vsub.s32 %v4607, %v4609
        %v4611 = vrot.slane %v4595, %v4610
        %v4613 = vunpack.c.l.s4 1966171168
        %v4614 = vunpack.c.0.s8 %v4613
        %v4615 = vlaneseq
        %v4616 = vshrl.u32 %v4615, 7
        %v4617 = vsub.s32 %v4614, %v4616
        %v4618 = vrot.slane %v4596, %v4617
        %v4620 = vunpack.c.l.s4 1966171168
        %v4621 = vunpack.c.0.s8 %v4620
        %v4622 = vlaneseq
        %v4623 = vshrl.u32 %v4622, 7
        %v4624 = vsub.s32 %v4621, %v4623
        %v4625 = vrot.slane %v4597, %v4624
        %v4626 = vcombine.high %v4604, %v4604
        %v4627 = vcombine.high %v4611, %v4611
        %v4628 = vcombine.high %v4618, %v4618
        %v4629 = vcombine.low %v4512, %v4288
        %v4630 = vcombine.high %v4512, %v4288
        %v4632 = vunpack.c.l.s4 1966171168
        %v4633 = vunpack.c.0.s8 %v4632
        %v4634 = vlaneseq
        %v4635 = vshrl.u32 %v4634, 7
        %v4636 = vsub.s32 %v4633, %v4635
        %v4637 = vrot.slane %v4629, %v4636
        %v4639 = vunpack.c.l.s4 1966171168
        %v4640 = vunpack.c.0.s8 %v4639
        %v4641 = vlaneseq
        %v4642 = vshrl.u32 %v4641, 7
        %v4643 = vsub.s32 %v4640, %v4642
        %v4644 = vrot.slane %v4630, %v4643
        %v4645 = vcombine.high %v4637, %v4637
        %v4646 = vcombine.high %v4644, %v4644
        %v4648 = vunpack.c.l.s4 1966171168
        %v4649 = vunpack.c.0.s8 %v4648
        %v4650 = vlaneseq
        %v4651 = vshrl.u32 %v4650, 7
        %v4652 = vsub.s32 %v4649, %v4651
        %v4653 = vrot.slane %v4637, %v4652
        %v4655 = vunpack.c.l.s4 1966171168
        %v4656 = vunpack.c.0.s8 %v4655
        %v4657 = vlaneseq
        %v4658 = vshrl.u32 %v4657, 7
        %v4659 = vsub.s32 %v4656, %v4658
        %v4660 = vrot.slane %v4644, %v4659
        %v4662 = vunpack.c.l.s4 1966171168
        %v4663 = vunpack.c.0.s8 %v4662
        %v4664 = vlaneseq
        %v4665 = vshrl.u32 %v4664, 7
        %v4666 = vsub.s32 %v4663, %v4665
        %v4667 = vrot.slane %v4645, %v4666
        %v4669 = vunpack.c.l.s4 1966171168
        %v4670 = vunpack.c.0.s8 %v4669
        %v4671 = vlaneseq
        %v4672 = vshrl.u32 %v4671, 7
        %v4673 = vsub.s32 %v4670, %v4672
        %v4674 = vrot.slane %v4646, %v4673
        %v4675 = vcombine.high %v4653, %v4653
        %v4676 = vcombine.high %v4660, %v4660
        %v4677 = vcombine.high %v4667, %v4667
        %v4678 = vcombine.low %v4514, %v4289
        %v4679 = vcombine.high %v4514, %v4289
        %v4681 = vunpack.c.l.s4 1966171168
        %v4682 = vunpack.c.0.s8 %v4681
        %v4683 = vlaneseq
        %v4684 = vshrl.u32 %v4683, 7
        %v4685 = vsub.s32 %v4682, %v4684
        %v4686 = vrot.slane %v4678, %v4685
        %v4688 = vunpack.c.l.s4 1966171168
        %v4689 = vunpack.c.0.s8 %v4688
        %v4690 = vlaneseq
        %v4691 = vshrl.u32 %v4690, 7
        %v4692 = vsub.s32 %v4689, %v4691
        %v4693 = vrot.slane %v4679, %v4692
        %v4694 = vcombine.high %v4686, %v4686
        %v4695 = vcombine.high %v4693, %v4693
        %v4697 = vunpack.c.l.s4 1966171168
        %v4698 = vunpack.c.0.s8 %v4697
        %v4699 = vlaneseq
        %v4700 = vshrl.u32 %v4699, 7
        %v4701 = vsub.s32 %v4698, %v4700
        %v4702 = vrot.slane %v4686, %v4701
        %v4704 = vunpack.c.l.s4 1966171168
        %v4705 = vunpack.c.0.s8 %v4704
        %v4706 = vlaneseq
        %v4707 = vshrl.u32 %v4706, 7
        %v4708 = vsub.s32 %v4705, %v4707
        %v4709 = vrot.slane %v4693, %v4708
        %v4711 = vunpack.c.l.s4 1966171168
        %v4712 = vunpack.c.0.s8 %v4711
        %v4713 = vlaneseq
        %v4714 = vshrl.u32 %v4713, 7
        %v4715 = vsub.s32 %v4712, %v4714
        %v4716 = vrot.slane %v4694, %v4715
        %v4718 = vunpack.c.l.s4 1966171168
        %v4719 = vunpack.c.0.s8 %v4718
        %v4720 = vlaneseq
        %v4721 = vshrl.u32 %v4720, 7
        %v4722 = vsub.s32 %v4719, %v4721
        %v4723 = vrot.slane %v4695, %v4722
        %v4724 = vcombine.high %v4702, %v4702
        %v4725 = vcombine.high %v4709, %v4709
        %v4726 = vcombine.high %v4716, %v4716
        %v4727 = vcombine.low %v4516, %v4290
        %v4728 = vcombine.high %v4516, %v4290
        %v4730 = vunpack.c.l.s4 1966171168
        %v4731 = vunpack.c.0.s8 %v4730
        %v4732 = vlaneseq
        %v4733 = vshrl.u32 %v4732, 7
        %v4734 = vsub.s32 %v4731, %v4733
        %v4735 = vrot.slane %v4727, %v4734
        %v4737 = vunpack.c.l.s4 1966171168
        %v4738 = vunpack.c.0.s8 %v4737
        %v4739 = vlaneseq
        %v4740 = vshrl.u32 %v4739, 7
        %v4741 = vsub.s32 %v4738, %v4740
        %v4742 = vrot.slane %v4728, %v4741
        %v4743 = vcombine.high %v4735, %v4735
        %v4744 = vcombine.high %v4742, %v4742
        %v4746 = vunpack.c.l.s4 1966171168
        %v4747 = vunpack.c.0.s8 %v4746
        %v4748 = vlaneseq
        %v4749 = vshrl.u32 %v4748, 7
        %v4750 = vsub.s32 %v4747, %v4749
        %v4751 = vrot.slane %v4735, %v4750
        %v4753 = vunpack.c.l.s4 1966171168
        %v4754 = vunpack.c.0.s8 %v4753
        %v4755 = vlaneseq
        %v4756 = vshrl.u32 %v4755, 7
        %v4757 = vsub.s32 %v4754, %v4756
        %v4758 = vrot.slane %v4742, %v4757
        %v4760 = vunpack.c.l.s4 1966171168
        %v4761 = vunpack.c.0.s8 %v4760
        %v4762 = vlaneseq
        %v4763 = vshrl.u32 %v4762, 7
        %v4764 = vsub.s32 %v4761, %v4763
        %v4765 = vrot.slane %v4743, %v4764
        %v4767 = vunpack.c.l.s4 1966171168
        %v4768 = vunpack.c.0.s8 %v4767
        %v4769 = vlaneseq
        %v4770 = vshrl.u32 %v4769, 7
        %v4771 = vsub.s32 %v4768, %v4770
        %v4772 = vrot.slane %v4744, %v4771
        %v4773 = vcombine.high %v4751, %v4751
        %v4774 = vcombine.high %v4758, %v4758
        %v4775 = vcombine.high %v4765, %v4765
        %v4776 = vcombine.low %v4518, %v4291
        %v4777 = vcombine.high %v4518, %v4291
        %v4779 = vunpack.c.l.s4 1966171168
        %v4780 = vunpack.c.0.s8 %v4779
        %v4781 = vlaneseq
        %v4782 = vshrl.u32 %v4781, 7
        %v4783 = vsub.s32 %v4780, %v4782
        %v4784 = vrot.slane %v4776, %v4783
        %v4786 = vunpack.c.l.s4 1966171168
        %v4787 = vunpack.c.0.s8 %v4786
        %v4788 = vlaneseq
        %v4789 = vshrl.u32 %v4788, 7
        %v4790 = vsub.s32 %v4787, %v4789
        %v4791 = vrot.slane %v4777, %v4790
        %v4792 = vcombine.high %v4784, %v4784
        %v4793 = vcombine.high %v4791, %v4791
        %v4795 = vunpack.c.l.s4 1966171168
        %v4796 = vunpack.c.0.s8 %v4795
        %v4797 = vlaneseq
        %v4798 = vshrl.u32 %v4797, 7
        %v4799 = vsub.s32 %v4796, %v4798
        %v4800 = vrot.slane %v4784, %v4799
        %v4802 = vunpack.c.l.s4 1966171168
        %v4803 = vunpack.c.0.s8 %v4802
        %v4804 = vlaneseq
        %v4805 = vshrl.u32 %v4804, 7
        %v4806 = vsub.s32 %v4803, %v4805
        %v4807 = vrot.slane %v4791, %v4806
        %v4809 = vunpack.c.l.s4 1966171168
        %v4810 = vunpack.c.0.s8 %v4809
        %v4811 = vlaneseq
        %v4812 = vshrl.u32 %v4811, 7
        %v4813 = vsub.s32 %v4810, %v4812
        %v4814 = vrot.slane %v4792, %v4813
        %v4816 = vunpack.c.l.s4 1966171168
        %v4817 = vunpack.c.0.s8 %v4816
        %v4818 = vlaneseq
        %v4819 = vshrl.u32 %v4818, 7
        %v4820 = vsub.s32 %v4817, %v4819
        %v4821 = vrot.slane %v4793, %v4820
        %v4822 = vcombine.high %v4800, %v4800
        %v4823 = vcombine.high %v4807, %v4807
        %v4824 = vcombine.high %v4814, %v4814
        %v4825 = vcombine.low %v4520, %v4348
        %v4826 = vcombine.high %v4520, %v4348
        %v4828 = vunpack.c.l.s4 1966171168
        %v4829 = vunpack.c.0.s8 %v4828
        %v4830 = vlaneseq
        %v4831 = vshrl.u32 %v4830, 7
        %v4832 = vsub.s32 %v4829, %v4831
        %v4833 = vrot.slane %v4825, %v4832
        %v4835 = vunpack.c.l.s4 1966171168
        %v4836 = vunpack.c.0.s8 %v4835
        %v4837 = vlaneseq
        %v4838 = vshrl.u32 %v4837, 7
        %v4839 = vsub.s32 %v4836, %v4838
        %v4840 = vrot.slane %v4826, %v4839
        %v4841 = vcombine.high %v4833, %v4833
        %v4842 = vcombine.high %v4840, %v4840
        %v4844 = vunpack.c.l.s4 1966171168
        %v4845 = vunpack.c.0.s8 %v4844
        %v4846 = vlaneseq
        %v4847 = vshrl.u32 %v4846, 7
        %v4848 = vsub.s32 %v4845, %v4847
        %v4849 = vrot.slane %v4833, %v4848
        %v4851 = vunpack.c.l.s4 1966171168
        %v4852 = vunpack.c.0.s8 %v4851
        %v4853 = vlaneseq
        %v4854 = vshrl.u32 %v4853, 7
        %v4855 = vsub.s32 %v4852, %v4854
        %v4856 = vrot.slane %v4840, %v4855
        %v4858 = vunpack.c.l.s4 1966171168
        %v4859 = vunpack.c.0.s8 %v4858
        %v4860 = vlaneseq
        %v4861 = vshrl.u32 %v4860, 7
        %v4862 = vsub.s32 %v4859, %v4861
        %v4863 = vrot.slane %v4841, %v4862
        %v4865 = vunpack.c.l.s4 1966171168
        %v4866 = vunpack.c.0.s8 %v4865
        %v4867 = vlaneseq
        %v4868 = vshrl.u32 %v4867, 7
        %v4869 = vsub.s32 %v4866, %v4868
        %v4870 = vrot.slane %v4842, %v4869
        %v4871 = vcombine.high %v4849, %v4849
        %v4872 = vcombine.high %v4856, %v4856
        %v4873 = vcombine.high %v4863, %v4863
        %v4874 = vcombine.low %v4522, %v4405
        %v4875 = vcombine.high %v4522, %v4405
        %v4877 = vunpack.c.l.s4 1966171168
        %v4878 = vunpack.c.0.s8 %v4877
        %v4879 = vlaneseq
        %v4880 = vshrl.u32 %v4879, 7
        %v4881 = vsub.s32 %v4878, %v4880
        %v4882 = vrot.slane %v4874, %v4881
        %v4884 = vunpack.c.l.s4 1966171168
        %v4885 = vunpack.c.0.s8 %v4884
        %v4886 = vlaneseq
        %v4887 = vshrl.u32 %v4886, 7
        %v4888 = vsub.s32 %v4885, %v4887
        %v4889 = vrot.slane %v4875, %v4888
        %v4890 = vcombine.high %v4882, %v4882
        %v4891 = vcombine.high %v4889, %v4889
        %v4893 = vunpack.c.l.s4 1966171168
        %v4894 = vunpack.c.0.s8 %v4893
        %v4895 = vlaneseq
        %v4896 = vshrl.u32 %v4895, 7
        %v4897 = vsub.s32 %v4894, %v4896
        %v4898 = vrot.slane %v4882, %v4897
        %v4900 = vunpack.c.l.s4 1966171168
        %v4901 = vunpack.c.0.s8 %v4900
        %v4902 = vlaneseq
        %v4903 = vshrl.u32 %v4902, 7
        %v4904 = vsub.s32 %v4901, %v4903
        %v4905 = vrot.slane %v4889, %v4904
        %v4907 = vunpack.c.l.s4 1966171168
        %v4908 = vunpack.c.0.s8 %v4907
        %v4909 = vlaneseq
        %v4910 = vshrl.u32 %v4909, 7
        %v4911 = vsub.s32 %v4908, %v4910
        %v4912 = vrot.slane %v4890, %v4911
        %v4914 = vunpack.c.l.s4 1966171168
        %v4915 = vunpack.c.0.s8 %v4914
        %v4916 = vlaneseq
        %v4917 = vshrl.u32 %v4916, 7
        %v4918 = vsub.s32 %v4915, %v4917
        %v4919 = vrot.slane %v4891, %v4918
        %v4920 = vcombine.high %v4898, %v4898
        %v4921 = vcombine.high %v4905, %v4905
        %v4922 = vcombine.high %v4912, %v4912
        %v4923 = vunpack.i.l.s16 %v4555
        %v4924 = vunpack.i.h.s16 %v4555
        %v4925 = vunpack.i.l.s16 %v4569
        %v4926 = vunpack.i.h.s16 %v4569
        %v4927 = vunpack.i.l.s16 %v4577
        %v4928 = vunpack.i.h.s16 %v4577
        %v4929 = vunpack.i.l.s16 %v4579
        %v4930 = vunpack.i.h.s16 %v4579
        %v4931 = vunpack.i.l.s16 %v4562
        %v4932 = vunpack.i.h.s16 %v4562
        %v4933 = vunpack.i.l.s16 %v4576
        %v4934 = vunpack.i.h.s16 %v4576
        %v4935 = vunpack.i.l.s16 %v4578
        %v4936 = vunpack.i.l.s16 %v4604
        %v4937 = vunpack.i.h.s16 %v4604
        %v4938 = vunpack.i.l.s16 %v4618
        %v4939 = vunpack.i.h.s16 %v4618
        %v4940 = vunpack.i.l.s16 %v4626
        %v4941 = vunpack.i.h.s16 %v4626
        %v4942 = vunpack.i.l.s16 %v4628
        %v4943 = vunpack.i.h.s16 %v4628
        %v4944 = vunpack.i.l.s16 %v4611
        %v4945 = vunpack.i.h.s16 %v4611
        %v4946 = vunpack.i.l.s16 %v4625
        %v4947 = vunpack.i.h.s16 %v4625
        %v4948 = vunpack.i.l.s16 %v4627
        %v4949 = vunpack.i.l.s16 %v4653
        %v4950 = vunpack.i.h.s16 %v4653
        %v4951 = vunpack.i.l.s16 %v4667
        %v4952 = vunpack.i.h.s16 %v4667
        %v4953 = vunpack.i.l.s16 %v4675
        %v4954 = vunpack.i.h.s16 %v4675
        %v4955 = vunpack.i.l.s16 %v4677
        %v4956 = vunpack.i.h.s16 %v4677
        %v4957 = vunpack.i.l.s16 %v4660
        %v4958 = vunpack.i.h.s16 %v4660
        %v4959 = vunpack.i.l.s16 %v4674
        %v4960 = vunpack.i.h.s16 %v4674
        %v4961 = vunpack.i.l.s16 %v4676
        %v4962 = vunpack.i.l.s16 %v4702
        %v4963 = vunpack.i.h.s16 %v4702
        %v4964 = vunpack.i.l.s16 %v4716
        %v4965 = vunpack.i.h.s16 %v4716
        %v4966 = vunpack.i.l.s16 %v4724
        %v4967 = vunpack.i.h.s16 %v4724
        %v4968 = vunpack.i.l.s16 %v4726
        %v4969 = vunpack.i.h.s16 %v4726
        %v4970 = vunpack.i.l.s16 %v4709
        %v4971 = vunpack.i.h.s16 %v4709
        %v4972 = vunpack.i.l.s16 %v4723
        %v4973 = vunpack.i.h.s16 %v4723
        %v4974 = vunpack.i.l.s16 %v4725
        %v4975 = vunpack.i.l.s16 %v4751
        %v4976 = vunpack.i.h.s16 %v4751
        %v4977 = vunpack.i.l.s16 %v4765
        %v4978 = vunpack.i.h.s16 %v4765
        %v4979 = vunpack.i.l.s16 %v4773
        %v4980 = vunpack.i.h.s16 %v4773
        %v4981 = vunpack.i.l.s16 %v4775
        %v4982 = vunpack.i.h.s16 %v4775
        %v4983 = vunpack.i.l.s16 %v4758
        %v4984 = vunpack.i.h.s16 %v4758
        %v4985 = vunpack.i.l.s16 %v4772
        %v4986 = vunpack.i.h.s16 %v4772
        %v4987 = vunpack.i.l.s16 %v4774
        %v4988 = vunpack.i.l.s16 %v4800
        %v4989 = vunpack.i.h.s16 %v4800
        %v4990 = vunpack.i.l.s16 %v4814
        %v4991 = vunpack.i.h.s16 %v4814
        %v4992 = vunpack.i.l.s16 %v4822
        %v4993 = vunpack.i.h.s16 %v4822
        %v4994 = vunpack.i.l.s16 %v4824
        %v4995 = vunpack.i.h.s16 %v4824
        %v4996 = vunpack.i.l.s16 %v4807
        %v4997 = vunpack.i.h.s16 %v4807
        %v4998 = vunpack.i.l.s16 %v4821
        %v4999 = vunpack.i.h.s16 %v4821
        %v5000 = vunpack.i.l.s16 %v4823
        %v5001 = vunpack.i.l.s16 %v4849
        %v5002 = vunpack.i.h.s16 %v4849
        %v5003 = vunpack.i.l.s16 %v4863
        %v5004 = vunpack.i.h.s16 %v4863
        %v5005 = vunpack.i.l.s16 %v4871
        %v5006 = vunpack.i.h.s16 %v4871
        %v5007 = vunpack.i.l.s16 %v4873
        %v5008 = vunpack.i.h.s16 %v4873
        %v5009 = vunpack.i.l.s16 %v4856
        %v5010 = vunpack.i.h.s16 %v4856
        %v5011 = vunpack.i.l.s16 %v4870
        %v5012 = vunpack.i.h.s16 %v4870
        %v5013 = vunpack.i.l.s16 %v4872
        %v5014 = vunpack.i.l.s16 %v4898
        %v5015 = vunpack.i.h.s16 %v4898
        %v5016 = vunpack.i.l.s16 %v4912
        %v5017 = vunpack.i.h.s16 %v4912
        %v5018 = vunpack.i.l.s16 %v4920
        %v5019 = vunpack.i.h.s16 %v4920
        %v5020 = vunpack.i.l.s16 %v4922
        %v5021 = vunpack.i.h.s16 %v4922
        %v5022 = vunpack.i.l.s16 %v4905
        %v5023 = vunpack.i.h.s16 %v4905
        %v5024 = vunpack.i.l.s16 %v4919
        %v5025 = vunpack.i.h.s16 %v4919
        %v5026 = vunpack.i.l.s16 %v4921
        %v5027 = vld [vmem:[%s4] sm:$0xf]
        %v5028 = vld [vmem:[%s4 + $0x4] sm:$0xf]
        %v5029 = vld [vmem:[%s4 + $0x8] sm:$0xf]
        %v5030 = vld [vmem:[%s4 + $0xc] sm:$0xf]
        %v5031 = vld [vmem:[%s4 + $0x10] sm:$0xf]
        %v5032 = vld [vmem:[%s4 + $0x14] sm:$0xf]
        %v5033 = vld [vmem:[%s4 + $0x18] sm:$0xf]
        %v5034 = vld [vmem:[%s4 + $0x1c] sm:$0xf]
        %v5035 = vld [vmem:[%s4 + $0x20] sm:$0xf]
        %v5036 = vld [vmem:[%s4 + $0x24] sm:$0xf]
        %v5037 = vld [vmem:[%s4 + $0x28] sm:$0xf]
        %v5038 = vld [vmem:[%s4 + $0x2c] sm:$0xf]
        %v5039 = vld [vmem:[%s4 + $0x30] sm:$0xf]
        %v5040 = vld [vmem:[%s4 + $0x34] sm:$0xf]
        %v5041 = vld [vmem:[%s4 + $0x38] sm:$0xf]
        %v5042 = vld [vmem:[%s4 + $0x3c] sm:$0xf]
        %v5043 = vld [vmem:[%s4 + $0x40] sm:$0xf]
        %v5044 = vld [vmem:[%s4 + $0x44] sm:$0xf]
        %v5045 = vpack.i.b16 %v4924, %v4923
        %v5046 = vpack.i.b16 %v4926, %v4925
        %v5047 = vpack.i.b16 %v4928, %v4927
        %v5048 = vpack.i.b16 %v4930, %v4929
        %v5049 = vpack.i.b16 %v4932, %v4931
        %v5050 = vpack.i.b16 %v4934, %v4933
        %v5051 = vpack.i.b16 %v4936, %v4935
        %v5052 = vpack.i.b16 %v4938, %v4937
        %v5053 = vpack.i.b16 %v4940, %v4939
        %v5054 = vpack.i.b16 %v4942, %v4941
        %v5055 = vpack.i.b16 %v4944, %v4943
        %v5056 = vpack.i.b16 %v4946, %v4945
        %v5057 = vpack.i.b16 %v4948, %v4947
        %v5058 = vpack.i.b16 %v4950, %v4949
        %v5059 = vpack.i.b16 %v4952, %v4951
        %v5060 = vpack.i.b16 %v4954, %v4953
        %v5061 = vpack.i.b16 %v4956, %v4955
        %v5062 = vpack.i.b16 %v4958, %v4957
        %v5063 = vpack.i.b16 %v4960, %v4959
        %v5064 = vpack.i.b16 %v4962, %v4961
        %v5065 = vpack.i.b16 %v4964, %v4963
        %v5066 = vpack.i.b16 %v4966, %v4965
        %v5067 = vpack.i.b16 %v4968, %v4967
        %v5068 = vpack.i.b16 %v4970, %v4969
        %v5069 = vpack.i.b16 %v4972, %v4971
        %v5070 = vpack.i.b16 %v4974, %v4973
        %v5071 = vpack.i.b16 %v4976, %v4975
        %v5072 = vpack.i.b16 %v4978, %v4977
        %v5073 = vpack.i.b16 %v4980, %v4979
        %v5074 = vpack.i.b16 %v4982, %v4981
        %v5075 = vpack.i.b16 %v4984, %v4983
        %v5076 = vpack.i.b16 %v4986, %v4985
        %v5077 = vpack.i.b16 %v4988, %v4987
        %v5078 = vpack.i.b16 %v4990, %v4989
        %v5079 = vpack.i.b16 %v4992, %v4991
        %v5080 = vpack.i.b16 %v4994, %v4993
        %v5081 = vpack.i.b16 %v4996, %v4995
        %v5082 = vpack.i.b16 %v4998, %v4997
        %v5083 = vpack.i.b16 %v5000, %v4999
        %v5084 = vpack.i.b16 %v5002, %v5001
        %v5085 = vpack.i.b16 %v5004, %v5003
        %v5086 = vpack.i.b16 %v5006, %v5005
        %v5087 = vpack.i.b16 %v5008, %v5007
        %v5088 = vpack.i.b16 %v5010, %v5009
        %v5089 = vpack.i.b16 %v5012, %v5011
        %v5090 = vpack.i.b16 %v5014, %v5013
        %v5091 = vpack.i.b16 %v5016, %v5015
        %v5092 = vpack.i.b16 %v5018, %v5017
        %v5093 = vpack.i.b16 %v5020, %v5019
        %v5094 = vpack.i.b16 %v5022, %v5021
        %v5095 = vpack.i.b16 %v5024, %v5023
        %v5096 = vpack.i.b16 %v5026, %v5025
        %v5097 = vcombine.low %v5045, %v5046
        %v5098 = vcombine.low %v5047, %v5048
        %v5099 = vcombine.low %v5049, %v5050
        %v5100 = vcombine.low %v5051, %v5052
        %v5102 = vunpack.c.l.s4 1966171168
        %v5103 = vunpack.c.0.s8 %v5102
        %v5104 = vlaneseq
        %v5105 = vshrl.u32 %v5104, 7
        %v5106 = vsub.s32 %v5103, %v5105
        %v5107 = vrot.slane %v5097, %v5106
        %v5109 = vunpack.c.l.s4 1966171168
        %v5110 = vunpack.c.0.s8 %v5109
        %v5111 = vlaneseq
        %v5112 = vshrl.u32 %v5111, 7
        %v5113 = vsub.s32 %v5110, %v5112
        %v5114 = vrot.slane %v5098, %v5113
        %v5116 = vunpack.c.l.s4 1966171168
        %v5117 = vunpack.c.0.s8 %v5116
        %v5118 = vlaneseq
        %v5119 = vshrl.u32 %v5118, 7
        %v5120 = vsub.s32 %v5117, %v5119
        %v5121 = vrot.slane %v5099, %v5120
        %v5123 = vunpack.c.l.s4 1966171168
        %v5124 = vunpack.c.0.s8 %v5123
        %v5125 = vlaneseq
        %v5126 = vshrl.u32 %v5125, 7
        %v5127 = vsub.s32 %v5124, %v5126
        %v5128 = vrot.slane %v5100, %v5127
        %v5129 = vcombine.low %v5107, %v5114
        %v5130 = vcombine.high %v5107, %v5114
        %v5131 = vcombine.low %v5121, %v5128
        %v5132 = vcombine.high %v5121, %v5128
        %v5134 = vunpack.c.l.s4 1966171168
        %v5135 = vunpack.c.0.s8 %v5134
        %v5136 = vlaneseq
        %v5137 = vshrl.u32 %v5136, 7
        %v5138 = vsub.s32 %v5135, %v5137
        %v5139 = vrot.slane %v5129, %v5138
        %v5141 = vunpack.c.l.s4 1966171168
        %v5142 = vunpack.c.0.s8 %v5141
        %v5143 = vlaneseq
        %v5144 = vshrl.u32 %v5143, 7
        %v5145 = vsub.s32 %v5142, %v5144
        %v5146 = vrot.slane %v5130, %v5145
        %v5148 = vunpack.c.l.s4 1966171168
        %v5149 = vunpack.c.0.s8 %v5148
        %v5150 = vlaneseq
        %v5151 = vshrl.u32 %v5150, 7
        %v5152 = vsub.s32 %v5149, %v5151
        %v5153 = vrot.slane %v5131, %v5152
        %v5155 = vunpack.c.l.s4 1966171168
        %v5156 = vunpack.c.0.s8 %v5155
        %v5157 = vlaneseq
        %v5158 = vshrl.u32 %v5157, 7
        %v5159 = vsub.s32 %v5156, %v5158
        %v5160 = vrot.slane %v5132, %v5159
        %v5161 = vcombine.low %v5139, %v5153
        %v5162 = vcombine.low %v5146, %v5160
        %v5163 = vcombine.low %v5053, %v5054
        %v5164 = vcombine.low %v5055, %v5056
        %v5165 = vcombine.low %v5057, %v5058
        %v5166 = vcombine.low %v5059, %v5060
        %v5168 = vunpack.c.l.s4 1966171168
        %v5169 = vunpack.c.0.s8 %v5168
        %v5170 = vlaneseq
        %v5171 = vshrl.u32 %v5170, 7
        %v5172 = vsub.s32 %v5169, %v5171
        %v5173 = vrot.slane %v5163, %v5172
        %v5175 = vunpack.c.l.s4 1966171168
        %v5176 = vunpack.c.0.s8 %v5175
        %v5177 = vlaneseq
        %v5178 = vshrl.u32 %v5177, 7
        %v5179 = vsub.s32 %v5176, %v5178
        %v5180 = vrot.slane %v5164, %v5179
        %v5182 = vunpack.c.l.s4 1966171168
        %v5183 = vunpack.c.0.s8 %v5182
        %v5184 = vlaneseq
        %v5185 = vshrl.u32 %v5184, 7
        %v5186 = vsub.s32 %v5183, %v5185
        %v5187 = vrot.slane %v5165, %v5186
        %v5189 = vunpack.c.l.s4 1966171168
        %v5190 = vunpack.c.0.s8 %v5189
        %v5191 = vlaneseq
        %v5192 = vshrl.u32 %v5191, 7
        %v5193 = vsub.s32 %v5190, %v5192
        %v5194 = vrot.slane %v5166, %v5193
        %v5195 = vcombine.low %v5173, %v5180
        %v5196 = vcombine.high %v5173, %v5180
        %v5197 = vcombine.low %v5187, %v5194
        %v5198 = vcombine.high %v5187, %v5194
        %v5200 = vunpack.c.l.s4 1966171168
        %v5201 = vunpack.c.0.s8 %v5200
        %v5202 = vlaneseq
        %v5203 = vshrl.u32 %v5202, 7
        %v5204 = vsub.s32 %v5201, %v5203
        %v5205 = vrot.slane %v5195, %v5204
        %v5207 = vunpack.c.l.s4 1966171168
        %v5208 = vunpack.c.0.s8 %v5207
        %v5209 = vlaneseq
        %v5210 = vshrl.u32 %v5209, 7
        %v5211 = vsub.s32 %v5208, %v5210
        %v5212 = vrot.slane %v5196, %v5211
        %v5214 = vunpack.c.l.s4 1966171168
        %v5215 = vunpack.c.0.s8 %v5214
        %v5216 = vlaneseq
        %v5217 = vshrl.u32 %v5216, 7
        %v5218 = vsub.s32 %v5215, %v5217
        %v5219 = vrot.slane %v5197, %v5218
        %v5221 = vunpack.c.l.s4 1966171168
        %v5222 = vunpack.c.0.s8 %v5221
        %v5223 = vlaneseq
        %v5224 = vshrl.u32 %v5223, 7
        %v5225 = vsub.s32 %v5222, %v5224
        %v5226 = vrot.slane %v5198, %v5225
        %v5227 = vcombine.low %v5205, %v5219
        %v5228 = vcombine.low %v5212, %v5226
        %v5229 = vcombine.low %v5061, %v5062
        %v5230 = vcombine.low %v5063, %v5064
        %v5231 = vcombine.low %v5065, %v5066
        %v5232 = vcombine.low %v5067, %v5068
        %v5234 = vunpack.c.l.s4 1966171168
        %v5235 = vunpack.c.0.s8 %v5234
        %v5236 = vlaneseq
        %v5237 = vshrl.u32 %v5236, 7
        %v5238 = vsub.s32 %v5235, %v5237
        %v5239 = vrot.slane %v5229, %v5238
        %v5241 = vunpack.c.l.s4 1966171168
        %v5242 = vunpack.c.0.s8 %v5241
        %v5243 = vlaneseq
        %v5244 = vshrl.u32 %v5243, 7
        %v5245 = vsub.s32 %v5242, %v5244
        %v5246 = vrot.slane %v5230, %v5245
        %v5248 = vunpack.c.l.s4 1966171168
        %v5249 = vunpack.c.0.s8 %v5248
        %v5250 = vlaneseq
        %v5251 = vshrl.u32 %v5250, 7
        %v5252 = vsub.s32 %v5249, %v5251
        %v5253 = vrot.slane %v5231, %v5252
        %v5255 = vunpack.c.l.s4 1966171168
        %v5256 = vunpack.c.0.s8 %v5255
        %v5257 = vlaneseq
        %v5258 = vshrl.u32 %v5257, 7
        %v5259 = vsub.s32 %v5256, %v5258
        %v5260 = vrot.slane %v5232, %v5259
        %v5261 = vcombine.low %v5239, %v5246
        %v5262 = vcombine.high %v5239, %v5246
        %v5263 = vcombine.low %v5253, %v5260
        %v5264 = vcombine.high %v5253, %v5260
        %v5266 = vunpack.c.l.s4 1966171168
        %v5267 = vunpack.c.0.s8 %v5266
        %v5268 = vlaneseq
        %v5269 = vshrl.u32 %v5268, 7
        %v5270 = vsub.s32 %v5267, %v5269
        %v5271 = vrot.slane %v5261, %v5270
        %v5273 = vunpack.c.l.s4 1966171168
        %v5274 = vunpack.c.0.s8 %v5273
        %v5275 = vlaneseq
        %v5276 = vshrl.u32 %v5275, 7
        %v5277 = vsub.s32 %v5274, %v5276
        %v5278 = vrot.slane %v5262, %v5277
        %v5280 = vunpack.c.l.s4 1966171168
        %v5281 = vunpack.c.0.s8 %v5280
        %v5282 = vlaneseq
        %v5283 = vshrl.u32 %v5282, 7
        %v5284 = vsub.s32 %v5281, %v5283
        %v5285 = vrot.slane %v5263, %v5284
        %v5287 = vunpack.c.l.s4 1966171168
        %v5288 = vunpack.c.0.s8 %v5287
        %v5289 = vlaneseq
        %v5290 = vshrl.u32 %v5289, 7
        %v5291 = vsub.s32 %v5288, %v5290
        %v5292 = vrot.slane %v5264, %v5291
        %v5293 = vcombine.low %v5271, %v5285
        %v5294 = vcombine.low %v5278, %v5292
        %v5295 = vcombine.low %v5069, %v5070
        %v5296 = vcombine.low %v5071, %v5072
        %v5297 = vcombine.low %v5073, %v5074
        %v5298 = vcombine.low %v5075, %v5076
        %v5300 = vunpack.c.l.s4 1966171168
        %v5301 = vunpack.c.0.s8 %v5300
        %v5302 = vlaneseq
        %v5303 = vshrl.u32 %v5302, 7
        %v5304 = vsub.s32 %v5301, %v5303
        %v5305 = vrot.slane %v5295, %v5304
        %v5307 = vunpack.c.l.s4 1966171168
        %v5308 = vunpack.c.0.s8 %v5307
        %v5309 = vlaneseq
        %v5310 = vshrl.u32 %v5309, 7
        %v5311 = vsub.s32 %v5308, %v5310
        %v5312 = vrot.slane %v5296, %v5311
        %v5314 = vunpack.c.l.s4 1966171168
        %v5315 = vunpack.c.0.s8 %v5314
        %v5316 = vlaneseq
        %v5317 = vshrl.u32 %v5316, 7
        %v5318 = vsub.s32 %v5315, %v5317
        %v5319 = vrot.slane %v5297, %v5318
        %v5321 = vunpack.c.l.s4 1966171168
        %v5322 = vunpack.c.0.s8 %v5321
        %v5323 = vlaneseq
        %v5324 = vshrl.u32 %v5323, 7
        %v5325 = vsub.s32 %v5322, %v5324
        %v5326 = vrot.slane %v5298, %v5325
        %v5327 = vcombine.low %v5305, %v5312
        %v5328 = vcombine.high %v5305, %v5312
        %v5329 = vcombine.low %v5319, %v5326
        %v5330 = vcombine.high %v5319, %v5326
        %v5332 = vunpack.c.l.s4 1966171168
        %v5333 = vunpack.c.0.s8 %v5332
        %v5334 = vlaneseq
        %v5335 = vshrl.u32 %v5334, 7
        %v5336 = vsub.s32 %v5333, %v5335
        %v5337 = vrot.slane %v5327, %v5336
        %v5339 = vunpack.c.l.s4 1966171168
        %v5340 = vunpack.c.0.s8 %v5339
        %v5341 = vlaneseq
        %v5342 = vshrl.u32 %v5341, 7
        %v5343 = vsub.s32 %v5340, %v5342
        %v5344 = vrot.slane %v5328, %v5343
        %v5346 = vunpack.c.l.s4 1966171168
        %v5347 = vunpack.c.0.s8 %v5346
        %v5348 = vlaneseq
        %v5349 = vshrl.u32 %v5348, 7
        %v5350 = vsub.s32 %v5347, %v5349
        %v5351 = vrot.slane %v5329, %v5350
        %v5353 = vunpack.c.l.s4 1966171168
        %v5354 = vunpack.c.0.s8 %v5353
        %v5355 = vlaneseq
        %v5356 = vshrl.u32 %v5355, 7
        %v5357 = vsub.s32 %v5354, %v5356
        %v5358 = vrot.slane %v5330, %v5357
        %v5359 = vcombine.low %v5337, %v5351
        %v5360 = vcombine.low %v5344, %v5358
        %v5361 = vcombine.low %v5077, %v5078
        %v5362 = vcombine.low %v5079, %v5080
        %v5363 = vcombine.low %v5081, %v5082
        %v5364 = vcombine.low %v5083, %v5084
        %v5366 = vunpack.c.l.s4 1966171168
        %v5367 = vunpack.c.0.s8 %v5366
        %v5368 = vlaneseq
        %v5369 = vshrl.u32 %v5368, 7
        %v5370 = vsub.s32 %v5367, %v5369
        %v5371 = vrot.slane %v5361, %v5370
        %v5373 = vunpack.c.l.s4 1966171168
        %v5374 = vunpack.c.0.s8 %v5373
        %v5375 = vlaneseq
        %v5376 = vshrl.u32 %v5375, 7
        %v5377 = vsub.s32 %v5374, %v5376
        %v5378 = vrot.slane %v5362, %v5377
        %v5380 = vunpack.c.l.s4 1966171168
        %v5381 = vunpack.c.0.s8 %v5380
        %v5382 = vlaneseq
        %v5383 = vshrl.u32 %v5382, 7
        %v5384 = vsub.s32 %v5381, %v5383
        %v5385 = vrot.slane %v5363, %v5384
        %v5387 = vunpack.c.l.s4 1966171168
        %v5388 = vunpack.c.0.s8 %v5387
        %v5389 = vlaneseq
        %v5390 = vshrl.u32 %v5389, 7
        %v5391 = vsub.s32 %v5388, %v5390
        %v5392 = vrot.slane %v5364, %v5391
        %v5393 = vcombine.low %v5371, %v5378
        %v5394 = vcombine.high %v5371, %v5378
        %v5395 = vcombine.low %v5385, %v5392
        %v5396 = vcombine.high %v5385, %v5392
        %v5398 = vunpack.c.l.s4 1966171168
        %v5399 = vunpack.c.0.s8 %v5398
        %v5400 = vlaneseq
        %v5401 = vshrl.u32 %v5400, 7
        %v5402 = vsub.s32 %v5399, %v5401
        %v5403 = vrot.slane %v5393, %v5402
        %v5405 = vunpack.c.l.s4 1966171168
        %v5406 = vunpack.c.0.s8 %v5405
        %v5407 = vlaneseq
        %v5408 = vshrl.u32 %v5407, 7
        %v5409 = vsub.s32 %v5406, %v5408
        %v5410 = vrot.slane %v5394, %v5409
        %v5412 = vunpack.c.l.s4 1966171168
        %v5413 = vunpack.c.0.s8 %v5412
        %v5414 = vlaneseq
        %v5415 = vshrl.u32 %v5414, 7
        %v5416 = vsub.s32 %v5413, %v5415
        %v5417 = vrot.slane %v5395, %v5416
        %v5419 = vunpack.c.l.s4 1966171168
        %v5420 = vunpack.c.0.s8 %v5419
        %v5421 = vlaneseq
        %v5422 = vshrl.u32 %v5421, 7
        %v5423 = vsub.s32 %v5420, %v5422
        %v5424 = vrot.slane %v5396, %v5423
        %v5425 = vcombine.low %v5403, %v5417
        %v5426 = vcombine.low %v5410, %v5424
        %v5427 = vcombine.low %v5085, %v5086
        %v5428 = vcombine.low %v5087, %v5088
        %v5429 = vcombine.low %v5089, %v5090
        %v5430 = vcombine.low %v5091, %v5092
        %v5432 = vunpack.c.l.s4 1966171168
        %v5433 = vunpack.c.0.s8 %v5432
        %v5434 = vlaneseq
        %v5435 = vshrl.u32 %v5434, 7
        %v5436 = vsub.s32 %v5433, %v5435
        %v5437 = vrot.slane %v5427, %v5436
        %v5439 = vunpack.c.l.s4 1966171168
        %v5440 = vunpack.c.0.s8 %v5439
        %v5441 = vlaneseq
        %v5442 = vshrl.u32 %v5441, 7
        %v5443 = vsub.s32 %v5440, %v5442
        %v5444 = vrot.slane %v5428, %v5443
        %v5446 = vunpack.c.l.s4 1966171168
        %v5447 = vunpack.c.0.s8 %v5446
        %v5448 = vlaneseq
        %v5449 = vshrl.u32 %v5448, 7
        %v5450 = vsub.s32 %v5447, %v5449
        %v5451 = vrot.slane %v5429, %v5450
        %v5453 = vunpack.c.l.s4 1966171168
        %v5454 = vunpack.c.0.s8 %v5453
        %v5455 = vlaneseq
        %v5456 = vshrl.u32 %v5455, 7
        %v5457 = vsub.s32 %v5454, %v5456
        %v5458 = vrot.slane %v5430, %v5457
        %v5459 = vcombine.low %v5437, %v5444
        %v5460 = vcombine.high %v5437, %v5444
        %v5461 = vcombine.low %v5451, %v5458
        %v5462 = vcombine.high %v5451, %v5458
        %v5464 = vunpack.c.l.s4 1966171168
        %v5465 = vunpack.c.0.s8 %v5464
        %v5466 = vlaneseq
        %v5467 = vshrl.u32 %v5466, 7
        %v5468 = vsub.s32 %v5465, %v5467
        %v5469 = vrot.slane %v5459, %v5468
        %v5471 = vunpack.c.l.s4 1966171168
        %v5472 = vunpack.c.0.s8 %v5471
        %v5473 = vlaneseq
        %v5474 = vshrl.u32 %v5473, 7
        %v5475 = vsub.s32 %v5472, %v5474
        %v5476 = vrot.slane %v5460, %v5475
        %v5478 = vunpack.c.l.s4 1966171168
        %v5479 = vunpack.c.0.s8 %v5478
        %v5480 = vlaneseq
        %v5481 = vshrl.u32 %v5480, 7
        %v5482 = vsub.s32 %v5479, %v5481
        %v5483 = vrot.slane %v5461, %v5482
        %v5485 = vunpack.c.l.s4 1966171168
        %v5486 = vunpack.c.0.s8 %v5485
        %v5487 = vlaneseq
        %v5488 = vshrl.u32 %v5487, 7
        %v5489 = vsub.s32 %v5486, %v5488
        %v5490 = vrot.slane %v5462, %v5489
        %v5491 = vcombine.low %v5469, %v5483
        %v5492 = vcombine.low %v5476, %v5490
        %v5493 = vcombine.low %v5093, %v5094
        %v5494 = vcombine.low %v5095, %v5096
        %v5496 = vunpack.c.l.s4 1966171168
        %v5497 = vunpack.c.0.s8 %v5496
        %v5498 = vlaneseq
        %v5499 = vshrl.u32 %v5498, 7
        %v5500 = vsub.s32 %v5497, %v5499
        %v5501 = vrot.slane %v5493, %v5500
        %v5503 = vunpack.c.l.s4 1966171168
        %v5504 = vunpack.c.0.s8 %v5503
        %v5505 = vlaneseq
        %v5506 = vshrl.u32 %v5505, 7
        %v5507 = vsub.s32 %v5504, %v5506
        %v5508 = vrot.slane %v5494, %v5507
        %v5509 = vcombine.low %v5501, %v5508
        %v5510 = vcombine.high %v5501, %v5508
        %v5512 = vunpack.c.l.s4 1966171168
        %v5513 = vunpack.c.0.s8 %v5512
        %v5514 = vlaneseq
        %v5515 = vshrl.u32 %v5514, 7
        %v5516 = vsub.s32 %v5513, %v5515
        %v5517 = vrot.slane %v5509, %v5516
        %v5519 = vunpack.c.l.s4 1966171168
        %v5520 = vunpack.c.0.s8 %v5519
        %v5521 = vlaneseq
        %v5522 = vshrl.u32 %v5521, 7
        %v5523 = vsub.s32 %v5520, %v5522
        %v5524 = vrot.slane %v5510, %v5523
        %v5550 = vunpack.c.l.b16 %v5027
        %v5551 = vunpack.c.l.b16 %v5028
        %v5552 = vunpack.c.l.b16 %v5029
        %v5553 = vunpack.c.l.b16 %v5030
        %v5554 = vunpack.c.l.b16 %v5031
        %v5555 = vunpack.c.l.b16 %v5032
        %v5556 = vunpack.c.l.b16 %v5033
        %v5557 = vunpack.c.l.b16 %v5034
        %v5558 = vunpack.c.l.b16 %v5035
        %v5559 = vunpack.c.l.b16 %v5036
        %v5560 = vunpack.c.l.b16 %v5037
        %v5561 = vunpack.c.l.b16 %v5038
        %v5562 = vunpack.c.l.b16 %v5039
        %v5563 = vunpack.c.l.b16 %v5040
        %v5564 = vunpack.c.l.b16 %v5041
        %v5565 = vunpack.c.l.b16 %v5042
        %v5566 = vunpack.c.l.b16 %v5043
        %v5567 = vunpack.c.l.b16 %v5044
        %v5568 = vpack.c.b16 %v5551, %v5550
        %v5569 = vpack.c.b16 %v5553, %v5552
        %v5570 = vpack.c.b16 %v5555, %v5554
        %v5571 = vpack.c.b16 %v5557, %v5556
        %v5572 = vpack.c.b16 %v5559, %v5558
        %v5573 = vpack.c.b16 %v5561, %v5560
        %v5574 = vpack.c.b16 %v5563, %v5562
        %v5575 = vpack.c.b16 %v5565, %v5564
        %v5576 = vpack.c.b16 %v5567, %v5566
        %v5587 = vsel %vm724, %v5162, 0
        %v5590 = vsel %vm724, %v5228, 0
        %v5593 = vsel %vm724, %v5294, 0
        %v5596 = vsel %vm724, %v5360, 0
        %v5599 = vsel %vm724, %v5426, 0
        %v5602 = vsel %vm724, %v5492, 0
        %v5605 = vsel %vm724, %v5524, 0
        %5607 = vmatprep.subr.bf16.mxu0 0
        %5608 = vmatpush1.bf16.msra.mxu0 %v5568
        %5609 = vmatprep.subr.bf16.mxu0 0
        %5610 = vmatpush1.bf16.msra.mxu0 %v5569
        %5611 = vmatprep.subr.bf16.mxu0 0
        %5612 = vmatpush1.bf16.msra.mxu0 %v5570
        %5613 = vmatprep.subr.bf16.mxu0 0
        %5614 = vmatpush1.bf16.msra.mxu0 %v5571
        %5615 = vmatprep.subr.bf16.mxu0 0
        %5616 = vmatpush1.bf16.msra.mxu0 %v5572
        %5617 = vmatprep.subr.bf16.mxu0 0
        %5618 = vmatpush1.bf16.msra.mxu0 %v5573
        %5619 = vmatprep.subr.bf16.mxu0 0
        %5620 = vmatpush1.bf16.msra.mxu0 %v5574
        %5621 = vmatprep.subr.bf16.mxu0 0
        %5622 = vmatpush1.bf16.msra.mxu0 %v5575
        %5623 = vmatprep.subr.bf16.mxu0 0
        %5624 = vmatpush1.bf16.msra.mxu0 %v5576
        %5625 = vmatprep.subr.bf16.mxu0 0
        %5626 = vmatpush1.bf16.msra.mxu0 0
        %5627 = vmatprep.subr.bf16.mxu0 0
        %5628 = vmatpush1.bf16.msra.mxu0 0
        %5629 = vmatprep.subr.bf16.mxu0 0
        %5630 = vmatpush1.bf16.msra.mxu0 0
        %5631 = vmatprep.subr.bf16.mxu0 0
        %5632 = vmatpush1.bf16.msra.mxu0 0
        %5633 = vmatprep.subr.bf16.mxu0 0
        %5634 = vmatpush1.bf16.msra.mxu0 0
        %5635 = vmatprep.subr.bf16.mxu0 0
        %5636 = vmatpush1.bf16.msra.mxu0 0
        %5637 = vmatprep.subr.bf16.mxu0 0
        %5638 = vmatpush1.bf16.msra.mxu0 0
        %5639 = vmatprep.mubr.bf16.mxu0 %v5587
        %5640 = vmatmul.mubr.bf16.gmra.mrb[0].mxu0 %v5161
        %v5641 = vpop.f32.mrb[0].mxu0
        %v5642 = vadd.f32 0.0, %v5641
        %v5643 = vpop.f32.mrb[0].mxu0
        %v5644 = vpop.f32.mrb[0].mxu0
        %v5645 = vadd.f32 0.0, %v5644
        %v5646 = vpop.f32.mrb[0].mxu0
        %5647 = vmatprep.mubr.bf16.mxu0 %v5590
        %5648 = vmatmul.mubr.bf16.gmra.mrb[0].mxu0 %v5227
        %v5649 = vpop.f32.mrb[0].mxu0
        %v5650 = vadd.f32 0.0, %v5649
        %v5651 = vpop.f32.mrb[0].mxu0
        %v5652 = vpop.f32.mrb[0].mxu0
        %v5653 = vadd.f32 0.0, %v5652
        %v5654 = vpop.f32.mrb[0].mxu0
        %5655 = vmatprep.mubr.bf16.mxu0 %v5593
        %5656 = vmatmul.mubr.bf16.gmra.mrb[0].mxu0 %v5293
        %v5657 = vpop.f32.mrb[0].mxu0
        %v5658 = vadd.f32 0.0, %v5657
        %v5659 = vpop.f32.mrb[0].mxu0
        %v5660 = vpop.f32.mrb[0].mxu0
        %v5661 = vadd.f32 0.0, %v5660
        %v5662 = vpop.f32.mrb[0].mxu0
        %5663 = vmatprep.mubr.bf16.mxu0 %v5596
        %5664 = vmatmul.mubr.bf16.gmra.mrb[0].mxu0 %v5359
        %v5665 = vpop.f32.mrb[0].mxu0
        %v5666 = vadd.f32 0.0, %v5665
        %v5667 = vpop.f32.mrb[0].mxu0
        %v5668 = vpop.f32.mrb[0].mxu0
        %v5669 = vadd.f32 0.0, %v5668
        %v5670 = vpop.f32.mrb[0].mxu0
        %5671 = vmatprep.mubr.bf16.mxu0 %v5599
        %5672 = vmatmul.mubr.bf16.gmra.mrb[0].mxu0 %v5425
        %v5673 = vpop.f32.mrb[0].mxu0
        %v5674 = vadd.f32 0.0, %v5673
        %v5675 = vpop.f32.mrb[0].mxu0
        %v5676 = vpop.f32.mrb[0].mxu0
        %v5677 = vadd.f32 0.0, %v5676
        %v5678 = vpop.f32.mrb[0].mxu0
        %5679 = vmatprep.mubr.bf16.mxu0 %v5602
        %5680 = vmatmul.mubr.bf16.gmra.mrb[0].mxu0 %v5491
        %v5681 = vpop.f32.mrb[0].mxu0
        %v5682 = vadd.f32 0.0, %v5681
        %v5683 = vpop.f32.mrb[0].mxu0
        %v5684 = vpop.f32.mrb[0].mxu0
        %v5685 = vadd.f32 0.0, %v5684
        %v5686 = vpop.f32.mrb[0].mxu0
        %5687 = vmatprep.mubr.bf16.mxu0 %v5605
        %5688 = vmatmul.mubr.bf16.gmra.mrb[0].mxu0 %v5517
        %v5689 = vpop.f32.mrb[0].mxu0
        %v5690 = vadd.f32 0.0, %v5689
        %v5691 = vpop.f32.mrb[0].mxu0
        %v5692 = vpop.f32.mrb[0].mxu0
        %v5693 = vpop.f32.mrb[0].mxu0
        %5694 = vdwg.mxu0
        %v5695 = vld [vmem:[%s5] sm:$0x1]
        %v5697 = vlaneseq
        %v5698 = vshrl.u32 %v5697, 7
        %v5699 = vsub.s32 0, %v5698
        %v5700 = vrot.slane %v5695, %v5699
        %v5702 = vmul.f32 %v5642, %v5700
        %v5703 = vmul.f32 %v5645, %v5700
        %v5704 = vmul.f32 %v5650, %v5700
        %v5705 = vmul.f32 %v5653, %v5700
        %v5706 = vmul.f32 %v5658, %v5700
        %v5707 = vmul.f32 %v5661, %v5700
        %v5708 = vmul.f32 %v5666, %v5700
        %v5709 = vmul.f32 %v5669, %v5700
        %v5710 = vmul.f32 %v5674, %v5700
        %v5711 = vmul.f32 %v5677, %v5700
        %v5712 = vmul.f32 %v5682, %v5700
        %v5713 = vmul.f32 %v5685, %v5700
        %v5714 = vmul.f32 %v5690, %v5700
        %v5715 = vld [vmem:[%s6] sm:$0x1]
        %v5717 = vlaneseq
        %v5718 = vshrl.u32 %v5717, 7
        %v5719 = vsub.s32 0, %v5718
        %v5720 = vrot.slane %v5715, %v5719
        %v5722 = vadd.f32 %v5702, %v5720
        %v5723 = vadd.f32 %v5703, %v5720
        %v5724 = vadd.f32 %v5704, %v5720
        %v5725 = vadd.f32 %v5705, %v5720
        %v5726 = vadd.f32 %v5706, %v5720
        %v5727 = vadd.f32 %v5707, %v5720
        %v5728 = vadd.f32 %v5708, %v5720
        %v5729 = vadd.f32 %v5709, %v5720
        %v5730 = vadd.f32 %v5710, %v5720
        %v5731 = vadd.f32 %v5711, %v5720
        %v5732 = vadd.f32 %v5712, %v5720
        %v5733 = vadd.f32 %v5713, %v5720
        %v5734 = vadd.f32 %v5714, %v5720
        %v5735 = vmax.f32 %v5722, 0.0
        %v5736 = vmax.f32 %v5723, 0.0
        %v5737 = vmax.f32 %v5724, 0.0
        %v5738 = vmax.f32 %v5725, 0.0
        %v5739 = vmax.f32 %v5726, 0.0
        %v5740 = vmax.f32 %v5727, 0.0
        %v5741 = vmax.f32 %v5728, 0.0
        %v5742 = vmax.f32 %v5729, 0.0
        %v5743 = vmax.f32 %v5730, 0.0
        %v5744 = vmax.f32 %v5731, 0.0
        %v5745 = vmax.f32 %v5732, 0.0
        %v5746 = vmax.f32 %v5733, 0.0
        %v5747 = vmax.f32 %v5734, 0.0
        %5748 = vst [vmem:[%s285] sm:$0xff] %v5735
        %5749 = vst [vmem:[%s285 + $0x8] sm:$0xff] %v5736
        %5750 = vst [vmem:[%s285 + $0x10] sm:$0xff] %v5737
        %5751 = vst [vmem:[%s285 + $0x18] sm:$0xff] %v5738
        %5752 = vst [vmem:[%s285 + $0x20] sm:$0xff] %v5739
        %5753 = vst [vmem:[%s285 + $0x28] sm:$0xff] %v5740
        %5754 = vst [vmem:[%s285 + $0x30] sm:$0xff] %v5741
        %5755 = vst [vmem:[%s285 + $0x38] sm:$0xff] %v5742
        %5756 = vst [vmem:[%s285 + $0x40] sm:$0xff] %v5743
        %5757 = vst [vmem:[%s285 + $0x48] sm:$0xff] %v5744
        %5758 = vst [vmem:[%s285 + $0x50] sm:$0xff] %v5745
        %5759 = vst [vmem:[%s285 + $0x58] sm:$0xff] %v5746
        %5760 = vst [vmem:[%s285 + $0x60] sm:$0xff] %v5747
        %s5761 = sand.u32 %s195, 1
        %s5762 = scalar_lea.sflag [#allocation3], %s5761
        %s5763 = sand.u32 %s195, 1
        %s5764 = smul.addr %s5763, 104
        %s5765 = scalar_lea.vmem [#allocation2], %s5764
        // Predicated region
        $region49: #{tpu_custom_call.1} parent=47 // pred_check
          %p5766 = pneg %p205
        $region50: #{tpu_custom_call.1} parent=47 // pred_check_branch
          %5768 = sbr.rel (%p5766) target = $region52
        $region51: #{tpu_custom_call.1} parent=47 // pred_region
          %s5769 = smul.u32 13, %s26
          %s5771 = ssub.s32 1664, 1664
          %5772 = vsyncadd %s5762, %s5771
          %s5773 = smul.addr %s25, 26
          %s5774 = sadd.s32 %s5769, %s5773
          %s5775 = smul.addr %s5774, 128
          %s5776 = scalar_lea.hbm %s7, %s5775
          %s5777 = sshll.u32 %s5765, 4
          %s5778 = int_to_ptr.vmem [resolvable:$true] %s5777
          %5783 = dma.vmem_to_hbm [thread:$0]  %s5778, 1664, %s5776, %s5762, 128, 128, 8
        $region52: #{tpu_custom_call.1} parent=47 // pred_fallthru
          _
      $region48: #{tpu_custom_call.1} parent=5 // pred_fallthru
        _
      %p5784 = scmp.le.s32.totalorder 2, %s16
      // Predicated region
      $region53: #{tpu_custom_call.1} parent=5 // pred_check
        %p5785 = pneg %p5784
      $region54: #{tpu_custom_call.1} parent=5 // pred_check_branch
        %5787 = sbr.rel (%p5785) target = $region56
      $region55: #{tpu_custom_call.1} parent=5 // pred_region
        %s5788 = ssub.s32 %s16, 2
        // Predicated region
        $region57: #{tpu_custom_call.1} parent=55 // pred_check
          %p5789 = pneg %p211
        $region58: #{tpu_custom_call.1} parent=55 // pred_check_branch
          %5791 = sbr.rel (%p5789) target = $region60
        $region59: #{tpu_custom_call.1} parent=55 // pred_region
          %s5792 = sand.u32 %s196, 1
          %s5793 = scalar_lea.sflag [#allocation3], %s5792
          %s5794 = sand.u32 %s196, 1
          %s5795 = smul.addr %s5794, 104
          %s5796 = scalar_lea.vmem [#allocation2], %s5795
          %5797 = dma.done %s5793, 1664
        $region60: #{tpu_custom_call.1} parent=55 // pred_fallthru
          _
      $region56: #{tpu_custom_call.1} parent=5 // pred_fallthru
        _
    $region6: #{tpu_custom_call.1} parent=1 // loop_footer
      %s20 = sadd.s32 1, %s16
    $region7: #{tpu_custom_call.1} parent=1 // loop_footer_branch
      %15 = sbr.rel target = $region3
    $region8: #{tpu_custom_call.1} parent=1 // loop_exit
      _
    %5798 = vsyncpa [#allocation3], 1
    %s5799 = scalar_lea.sflag [#allocation3], 1
    %5800 = vsyncpa %s5799, 1

</llo_original>
